<compile_context>
chip_gen: v7x
topology: tpu7x:2x2x1
jax: 0.10.0
libtpu: 0.0.40
codegen_flags: <defaults>
</compile_context>

<pallas_src>
import math
from functools import partial

import numpy as np
import jax
import jax.numpy as jnp
from jax.experimental import pallas as pl
from jax.experimental.pallas import tpu as pltpu


def _round_up(v, m):
    return -(-v // m) * m


def _phase_geometry(K, s, p, out_size, in_size):
    """Sub-pixel decomposition along one spatial dimension.

    For output index o = m*s + phi (0 <= phi < s) of a transposed conv, the
    contributing kernel taps are k = r + j*s with r = (phi + p) % s, and the
    contributing input index is i = m + d - j with d = (phi + p) // s.
    Returns (n_out, phases, pad_lo, pad_hi) where n_out = ceil(out_size/s),
    phases[phi] = (d, [(j, k), ...]) and pad_lo/pad_hi are the zero paddings
    needed so every read m + d - j (0 <= m < n_out) is in bounds.
    """
    n_out = -(-out_size // s)
    phases = []
    for phi in range(s):
        r = (phi + p) % s
        d = (phi + p) // s
        taps = [(j, r + j * s) for j in range((K - 1 - r) // s + 1)] if r < K else []
        phases.append((d, taps))
    reads = [d - j for d, taps in phases for j, _ in taps]
    reads_lo = min(reads) if reads else 0
    reads_hi = (n_out - 1) + (max(reads) if reads else 0)
    pad_lo = max(0, -reads_lo)
    pad_hi = max(0, reads_hi - (in_size - 1))
    return n_out, phases, pad_lo, pad_hi


@partial(jax.jit,
         static_argnames=("stride", "padding", "output_padding", "compute_dtype"))
def conv_transpose2d(x, weight, bias, stride, padding, output_padding,
                     compute_dtype=jnp.float32):
    """Forward pass matching torch.nn.ConvTranspose2d.

    x:      (N, Cin, H, W)       float32 (NCHW, PyTorch layout)
    weight: (Cin, Cout, KH, KW)  float32
    bias:   (Cout,) float32 or None
    returns (N, Cout, Hout, Wout) with
      Hout = (H-1)*sh - 2*ph + KH + oph, Wout analogous.
    """
    sh, sw = stride
    ph, pw = padding
    oph, opw = output_padding
    N, Cin, H, W = x.shape
    Cin_w, Cout, KH, KW = weight.shape
    assert Cin == Cin_w
    Hout = (H - 1) * sh - 2 * ph + KH + oph
    Wout = (W - 1) * sw - 2 * pw + KW + opw

    Nh, hphases, plh, prh = _phase_geometry(KH, sh, ph, Hout, H)
    Nw, wphases, plw, prw = _phase_geometry(KW, sw, pw, Wout, W)

    # Lane geometry: Wp is the padded input row pitch AND the per-phase slab
    # width.  A multiple of 128 -> unmasked stores and 128-aligned row shifts.
    Wp = _round_up(W + plw + prw, 128)
    Hp = H + plh + prh + 1        # +1 safety row: flat-window spill only lands
                                  # in columns >= Nw, which are cropped.
    L = Nh * Wp                   # per-phase flattened spatial extent (lanes)
    P = sh * sw                   # number of output phases
    M = P * Wp                    # lane extent of one output row-group
    NhM = Nh * M                  # kernel-output lane extent per (n, cout)

    # Static schedule: per phase, the flat lane offset of each tap's window
    # plus its (kh, kw).  Exactly KH*KW real taps in total, no dummies.
    phase_taps = []
    for phi_h in range(sh):
        d_h, taps_h = hphases[phi_h]
        for phi_w in range(sw):
            d_w, taps_w = wphases[phi_w]
            taps = []
            for j_h, kh in taps_h:
                for j_w, kw in taps_w:
                    off = (plh + d_h - j_h) * Wp + (plw + d_w - j_w)
                    taps.append((off, kh, kw))
            phase_taps.append(taps)
    assert sum(len(t) for t in phase_taps) == KH * KW

    # Static safety checks (review correctness concern): every flat window read
    # stays inside the padded image, kept rows never touch the safety row, and
    # any row-wrap spill lands only in cropped (>= Nw) columns.
    max_dh = max([d - j for d, taps in hphases for j, _ in taps], default=0)
    max_dw = max([d - j for d, taps in wphases for j, _ in taps], default=0)
    assert max_dh + Nh - 1 <= H - 1 + prh
    assert plw + max_dw + Nw <= Wp
    for taps in phase_taps:
        for off, _, _ in taps:
            assert 0 <= off and off + L <= Hp * Wp

    cdt = compute_dtype

    # ---- cheap XLA-side prep (~1x input bytes + weight/bias sized) ----
    xpad = jnp.pad(x, ((0, 0), (0, 0), (plh, prh + 1), (plw, Wp - W - plw)))
    xflat = xpad.reshape(N, Cin, Hp * Wp).astype(cdt)

    wt = jnp.transpose(weight, (2, 3, 1, 0)).astype(cdt)      # (KH, KW, Cout, Cin)
    b = bias if bias is not None else jnp.zeros((Cout,), x.dtype)
    bcol = b.astype(cdt).reshape(Cout, 1)
    Tmax = max(len(t) for t in phase_taps)
    Kmax = 1 + Tmax * Cin
    wcols = []
    for taps in phase_taps:
        cols = [bcol] + [wt[kh, kw] for (_, kh, kw) in taps]   # bias col 0 + taps
        wmat = jnp.concatenate(cols, axis=1)                   # (Cout, 1 + T_p*Cin)
        pad = Kmax - wmat.shape[1]
        if pad:
            wmat = jnp.pad(wmat, ((0, 0), (0, pad)))
        wcols.append(wmat)
    waug = jnp.stack(wcols, axis=0)                            # (P, Cout, Kmax)

    def kernel(x_ref, w_ref, o_ref, stk_ref):
        # x_ref:   (Cin, Hp*Wp)    flattened padded input (row pitch Wp)
        # w_ref:   (P, Cout, Kmax) per-phase flattened weight, bias in col 0
        # o_ref:   (Cout, Nh*M)    element order (Cout, Nh, sh, sw, Wp)
        # stk_ref: (Kmax, L)       stacked contraction operand (row 0 = ones)
        stk_ref[0:1, :] = jnp.ones((1, L), cdt)                # fused-bias row
        for p, taps in enumerate(phase_taps):                  # static: P phases
            kp = 1 + len(taps) * Cin
            # Stack shifted windows along the contraction axis: one
            # sublane-offset copy per real tap (KH*KW copies per batch step).
            for t, (off, _, _) in enumerate(taps):
                stk_ref[1 + t * Cin:1 + (t + 1) * Cin, :] = x_ref[:, off:off + L]
            if taps:
                # Single MXU matmul per phase; bias rides along via ones row.
                res = jnp.dot(w_ref[p, :, :kp], stk_ref[:kp, :],
                              preferred_element_type=jnp.float32)
            else:
                # stride > kernel: bias-only phase (no taps).
                res = jnp.broadcast_to(
                    w_ref[p, :, 0:1].astype(jnp.float32), (Cout, L))
            res = res.astype(o_ref.dtype)
            # Lane-dense, 128-aligned stores laying the result out as
            # (Cout, Nh, sh, sw, Wp) so the h-interleave is a pure reshape.
            for nh in range(Nh):
                o_ref[:, nh * M + p * Wp: nh * M + (p + 1) * Wp] = \
                    res[:, nh * Wp:(nh + 1) * Wp]

    out = pl.pallas_call(
        kernel,
        out_shape=jax.ShapeDtypeStruct((N, Cout, NhM), jnp.float32),
        grid_spec=pltpu.PrefetchScalarGridSpec(
            num_scalar_prefetch=0,
            grid=(N,),
            in_specs=[
                pl.BlockSpec((None, Cin, Hp * Wp), lambda n: (n, 0, 0)),
                pl.BlockSpec((P, Cout, Kmax), lambda n: (0, 0, 0)),   # resident
            ],
            out_specs=pl.BlockSpec((None, Cout, NhM), lambda n: (n, 0, 0)),
            scratch_shapes=[pltpu.VMEM((Kmax, L), cdt)],
        ),
        compiler_params=pltpu.CompilerParams(
            dimension_semantics=("parallel",),
            vmem_limit_bytes=32 * 1024 * 1024,
        ),
    )(xflat, waug)

    # Shrunk epilogue: h-interleave is a free reshape (Nh, sh adjacent and in
    # order); only the sw lane-interleave + crops remain output-sized.
    out = out.reshape(N, Cout, Nh, sh, sw, Wp)[..., :Nw]
    out = jnp.swapaxes(out, 4, 5)                       # (N, Cout, Nh, sh, Nw, sw)
    out = out.reshape(N, Cout, Nh * sh, Nw * sw)
    return out[:, :, :Hout, :Wout].astype(x.dtype)


def _ref_conv_transpose2d(x, w, b, stride, padding, output_padding):
    """Direct (scatter) reference of torch ConvTranspose2d semantics in numpy."""
    sh, sw = stride
    ph, pw = padding
    oph, opw = output_padding
    N, Cin, H, W = x.shape
    _, Cout, KH, KW = w.shape
    Hout = (H - 1) * sh - 2 * ph + KH + oph
    Wout = (W - 1) * sw - 2 * pw + KW + opw
    out = np.zeros((N, Cout, Hout, Wout), dtype=np.float64)
    if b is not None:
        out += b.reshape(1, Cout, 1, 1)
    for n in range(N):
        for ic in range(Cin):
            for ih in range(H):
                for iw in range(W):
                    v = x[n, ic, ih, iw]
                    for kh in range(KH):
                        oh = ih * sh - ph + kh
                        if not (0 <= oh < Hout):
                            continue
                        for kw in range(KW):
                            ow = iw * sw - pw + kw
                            if not (0 <= ow < Wout):
                                continue
                            out[n, :, oh, ow] += v * w[ic, :, kh, kw]
    return out


if __name__ == "__main__":
    def run_case(name, N, Cin, Cout, H, W, KH, KW, stride, padding,
                 output_padding, compute_dtype, rtol, atol, key):
        kx, kw_, kb = jax.random.split(key, 3)
        # deterministic parameter init mirroring reset_parameters():
        # uniform(-stdv, stdv), stdv = 1/sqrt(kh*kw*in_channels)
        stdv = 1.0 / math.sqrt(KH * KW * Cin)
        x = jax.random.normal(kx, (N, Cin, H, W), jnp.float32)
        weight = jax.random.uniform(kw_, (Cin, Cout, KH, KW), jnp.float32,
                                    -stdv, stdv)
        bias = jax.random.uniform(kb, (Cout,), jnp.float32, -stdv, stdv)

        out = conv_transpose2d(x, weight, bias, stride=stride, padding=padding,
                               output_padding=output_padding,
                               compute_dtype=compute_dtype)
        out = jax.block_until_ready(out)

        ref = _ref_conv_transpose2d(np.asarray(x), np.asarray(weight),
                                    np.asarray(bias), stride, padding,
                                    output_padding)
        assert out.shape == ref.shape, (name, out.shape, ref.shape)
        np.testing.assert_allclose(np.asarray(out, np.float64), ref,
                                   rtol=rtol, atol=atol, err_msg=name)

    key = jax.random.PRNGKey(0)
    k1, k2, k3 = jax.random.split(key, 3)

    # Module config: ConvTranspose2d(4, 8, 3, stride=2, padding=1,
    #                                output_padding=1, bias=True), f32 operands.
    # Tolerance acknowledges default TPU MXU precision for f32 operands.
    run_case("f32", 2, 4, 8, 16, 16, 3, 3, (2, 2), (1, 1), (1, 1),
             jnp.float32, 2e-4, 2e-4, k1)

    # Same config with bf16 operands (v6e/v7x MXU-friendly path); f32
    # accumulation and output.  Tolerance reflects bf16's 8-bit mantissa.
    run_case("bf16", 2, 4, 8, 16, 16, 3, 3, (2, 2), (1, 1), (1, 1),
             jnp.bfloat16, 2e-2, 2e-2, k2)

    # stride > kernel along H (bias-only phases), asymmetric kernel/stride/
    # padding, Cout not a multiple of 8 — exercises the review's edge cases.
    run_case("stride_gt_kernel", 1, 3, 5, 8, 8, 2, 3, (3, 2), (0, 1), (1, 1),
             jnp.float32, 2e-4, 2e-4, k3)

    print("KERNEL_OK")
</pallas_src>

<mosaic_0001>
module attributes {stable_mosaic.version = 11 : i64} {
  func.func @kernel(%arg0: i32, %arg1: memref<1x4x2304xf32, #tpu.memory_space<vmem>>, %arg2: memref<4x8x17xf32, #tpu.memory_space<vmem>>, %arg3: memref<1x8x8192xf32, #tpu.memory_space<vmem>>, %arg4: memref<17x2048xf32, #tpu.memory_space<vmem>>) attributes {dimension_semantics = [#tpu.dimension_semantics<parallel>], iteration_bounds = array<i64: 2>, scalar_prefetch = 0 : i64, scratch_operands = 1 : i64, tpu.core_type = #tpu.core_type<tc>, window_params = [{transform_indices = @transform_0, window_bounds = array<i64: 1, 4, 2304>}, {pipeline_mode = #tpu.pipeline_mode<synchronous>, transform_indices = @transform_1, window_bounds = array<i64: 4, 8, 17>}, {transform_indices = @transform_2, window_bounds = array<i64: 1, 8, 8192>}]} {
    %cst = arith.constant 1.000000e+00 : f32
    %0 = vector.broadcast %cst : f32 to vector<1x2048xf32>
    %c0 = arith.constant 0 : index
    %c0_0 = arith.constant 0 : index
    %1 = vector.load %arg4[%c0, %c0_0] : memref<17x2048xf32, #tpu.memory_space<vmem>>, vector<1x2048xf32>
    tpu.vector_store %arg4[%c0, %c0_0], %0 {strides = array<i32>} : memref<17x2048xf32, #tpu.memory_space<vmem>>, vector<1x2048xf32>,
    %c0_1 = arith.constant 0 : index
    %c0_2 = arith.constant 0 : index
    %c0_3 = arith.constant 0 : index
    %2 = vector.load %arg1[%c0_1, %c0_2, %c0_3] : memref<1x4x2304xf32, #tpu.memory_space<vmem>>, vector<1x4x2048xf32>
    %3 = vector.shape_cast %2 : vector<1x4x2048xf32> to vector<4x2048xf32>
    %c1 = arith.constant 1 : index
    %c0_4 = arith.constant 0 : index
    %4 = vector.load %arg4[%c1, %c0_4] : memref<17x2048xf32, #tpu.memory_space<vmem>>, vector<4x2048xf32>
    tpu.vector_store %arg4[%c1, %c0_4], %3 {strides = array<i32>} : memref<17x2048xf32, #tpu.memory_space<vmem>>, vector<4x2048xf32>,
    %c0_5 = arith.constant 0 : index
    %c0_6 = arith.constant 0 : index
    %c0_7 = arith.constant 0 : index
    %5 = vector.load %arg2[%c0_5, %c0_6, %c0_7] : memref<4x8x17xf32, #tpu.memory_space<vmem>>, vector<1x8x5xf32>
    %6 = vector.shape_cast %5 : vector<1x8x5xf32> to vector<8x5xf32>
    %c0_8 = arith.constant 0 : index
    %c0_9 = arith.constant 0 : index
    %7 = vector.load %arg4[%c0_8, %c0_9] : memref<17x2048xf32, #tpu.memory_space<vmem>>, vector<5x2048xf32>
    %cst_10 = arith.constant dense<0.000000e+00> : vector<8x2048xf32>
    %8 = tpu.matmul %6, %7, %cst_10 {dimension_numbers = #tpu.dot_dimension_numbers<[1], [0], [0], [1], [0, 0, 1, 1], [], []>} : vector<8x5xf32>, vector<5x2048xf32>, vector<8x2048xf32> -> vector<8x2048xf32>
    %9 = vector.extract_strided_slice %8 {offsets = [0, 0], sizes = [8, 128], strides = [1, 1]} : vector<8x2048xf32> to vector<8x128xf32>
    %c0_11 = arith.constant 0 : index
    %c0_12 = arith.constant 0 : index
    %c0_13 = arith.constant 0 : index
    %10 = vector.load %arg3[%c0_11, %c0_12, %c0_13] : memref<1x8x8192xf32, #tpu.memory_space<vmem>>, vector<1x8x128xf32>
    %11 = vector.shape_cast %10 : vector<1x8x128xf32> to vector<8x128xf32>
    %12 = vector.shape_cast %9 : vector<8x128xf32> to vector<1x8x128xf32>
    tpu.vector_store %arg3[%c0_11, %c0_12, %c0_13], %12 {strides = array<i32>} : memref<1x8x8192xf32, #tpu.memory_space<vmem>>, vector<1x8x128xf32>,
    %13 = vector.extract_strided_slice %8 {offsets = [0, 128], sizes = [8, 128], strides = [1, 1]} : vector<8x2048xf32> to vector<8x128xf32>
    %c0_14 = arith.constant 0 : index
    %c0_15 = arith.constant 0 : index
    %c512 = arith.constant 512 : index
    %14 = vector.load %arg3[%c0_14, %c0_15, %c512] : memref<1x8x8192xf32, #tpu.memory_space<vmem>>, vector<1x8x128xf32>
    %15 = vector.shape_cast %14 : vector<1x8x128xf32> to vector<8x128xf32>
    %16 = vector.shape_cast %13 : vector<8x128xf32> to vector<1x8x128xf32>
    tpu.vector_store %arg3[%c0_14, %c0_15, %c512], %16 {strides = array<i32>} : memref<1x8x8192xf32, #tpu.memory_space<vmem>>, vector<1x8x128xf32>,
    %17 = vector.extract_strided_slice %8 {offsets = [0, 256], sizes = [8, 128], strides = [1, 1]} : vector<8x2048xf32> to vector<8x128xf32>
    %c0_16 = arith.constant 0 : index
    %c0_17 = arith.constant 0 : index
    %c1024 = arith.constant 1024 : index
    %18 = vector.load %arg3[%c0_16, %c0_17, %c1024] : memref<1x8x8192xf32, #tpu.memory_space<vmem>>, vector<1x8x128xf32>
    %19 = vector.shape_cast %18 : vector<1x8x128xf32> to vector<8x128xf32>
    %20 = vector.shape_cast %17 : vector<8x128xf32> to vector<1x8x128xf32>
    tpu.vector_store %arg3[%c0_16, %c0_17, %c1024], %20 {strides = array<i32>} : memref<1x8x8192xf32, #tpu.memory_space<vmem>>, vector<1x8x128xf32>,
    %21 = vector.extract_strided_slice %8 {offsets = [0, 384], sizes = [8, 128], strides = [1, 1]} : vector<8x2048xf32> to vector<8x128xf32>
    %c0_18 = arith.constant 0 : index
    %c0_19 = arith.constant 0 : index
    %c1536 = arith.constant 1536 : index
    %22 = vector.load %arg3[%c0_18, %c0_19, %c1536] : memref<1x8x8192xf32, #tpu.memory_space<vmem>>, vector<1x8x128xf32>
    %23 = vector.shape_cast %22 : vector<1x8x128xf32> to vector<8x128xf32>
    %24 = vector.shape_cast %21 : vector<8x128xf32> to vector<1x8x128xf32>
    tpu.vector_store %arg3[%c0_18, %c0_19, %c1536], %24 {strides = array<i32>} : memref<1x8x8192xf32, #tpu.memory_space<vmem>>, vector<1x8x128xf32>,
    %25 = vector.extract_strided_slice %8 {offsets = [0, 512], sizes = [8, 128], strides = [1, 1]} : vector<8x2048xf32> to vector<8x128xf32>
    %c0_20 = arith.constant 0 : index
    %c0_21 = arith.constant 0 : index
    %c2048 = arith.constant 2048 : index
    %26 = vector.load %arg3[%c0_20, %c0_21, %c2048] : memref<1x8x8192xf32, #tpu.memory_space<vmem>>, vector<1x8x128xf32>
    %27 = vector.shape_cast %26 : vector<1x8x128xf32> to vector<8x128xf32>
    %28 = vector.shape_cast %25 : vector<8x128xf32> to vector<1x8x128xf32>
    tpu.vector_store %arg3[%c0_20, %c0_21, %c2048], %28 {strides = array<i32>} : memref<1x8x8192xf32, #tpu.memory_space<vmem>>, vector<1x8x128xf32>,
    %29 = vector.extract_strided_slice %8 {offsets = [0, 640], sizes = [8, 128], strides = [1, 1]} : vector<8x2048xf32> to vector<8x128xf32>
    %c0_22 = arith.constant 0 : index
    %c0_23 = arith.constant 0 : index
    %c2560 = arith.constant 2560 : index
    %30 = vector.load %arg3[%c0_22, %c0_23, %c2560] : memref<1x8x8192xf32, #tpu.memory_space<vmem>>, vector<1x8x128xf32>
    %31 = vector.shape_cast %30 : vector<1x8x128xf32> to vector<8x128xf32>
    %32 = vector.shape_cast %29 : vector<8x128xf32> to vector<1x8x128xf32>
    tpu.vector_store %arg3[%c0_22, %c0_23, %c2560], %32 {strides = array<i32>} : memref<1x8x8192xf32, #tpu.memory_space<vmem>>, vector<1x8x128xf32>,
    %33 = vector.extract_strided_slice %8 {offsets = [0, 768], sizes = [8, 128], strides = [1, 1]} : vector<8x2048xf32> to vector<8x128xf32>
    %c0_24 = arith.constant 0 : index
    %c0_25 = arith.constant 0 : index
    %c3072 = arith.constant 3072 : index
    %34 = vector.load %arg3[%c0_24, %c0_25, %c3072] : memref<1x8x8192xf32, #tpu.memory_space<vmem>>, vector<1x8x128xf32>
    %35 = vector.shape_cast %34 : vector<1x8x128xf32> to vector<8x128xf32>
    %36 = vector.shape_cast %33 : vector<8x128xf32> to vector<1x8x128xf32>
    tpu.vector_store %arg3[%c0_24, %c0_25, %c3072], %36 {strides = array<i32>} : memref<1x8x8192xf32, #tpu.memory_space<vmem>>, vector<1x8x128xf32>,
    %37 = vector.extract_strided_slice %8 {offsets = [0, 896], sizes = [8, 128], strides = [1, 1]} : vector<8x2048xf32> to vector<8x128xf32>
    %c0_26 = arith.constant 0 : index
    %c0_27 = arith.constant 0 : index
    %c3584 = arith.constant 3584 : index
    %38 = vector.load %arg3[%c0_26, %c0_27, %c3584] : memref<1x8x8192xf32, #tpu.memory_space<vmem>>, vector<1x8x128xf32>
    %39 = vector.shape_cast %38 : vector<1x8x128xf32> to vector<8x128xf32>
    %40 = vector.shape_cast %37 : vector<8x128xf32> to vector<1x8x128xf32>
    tpu.vector_store %arg3[%c0_26, %c0_27, %c3584], %40 {strides = array<i32>} : memref<1x8x8192xf32, #tpu.memory_space<vmem>>, vector<1x8x128xf32>,
    %41 = vector.extract_strided_slice %8 {offsets = [0, 1024], sizes = [8, 128], strides = [1, 1]} : vector<8x2048xf32> to vector<8x128xf32>
    %c0_28 = arith.constant 0 : index
    %c0_29 = arith.constant 0 : index
    %c4096 = arith.constant 4096 : index
    %42 = vector.load %arg3[%c0_28, %c0_29, %c4096] : memref<1x8x8192xf32, #tpu.memory_space<vmem>>, vector<1x8x128xf32>
    %43 = vector.shape_cast %42 : vector<1x8x128xf32> to vector<8x128xf32>
    %44 = vector.shape_cast %41 : vector<8x128xf32> to vector<1x8x128xf32>
    tpu.vector_store %arg3[%c0_28, %c0_29, %c4096], %44 {strides = array<i32>} : memref<1x8x8192xf32, #tpu.memory_space<vmem>>, vector<1x8x128xf32>,
    %45 = vector.extract_strided_slice %8 {offsets = [0, 1152], sizes = [8, 128], strides = [1, 1]} : vector<8x2048xf32> to vector<8x128xf32>
    %c0_30 = arith.constant 0 : index
    %c0_31 = arith.constant 0 : index
    %c4608 = arith.constant 4608 : index
    %46 = vector.load %arg3[%c0_30, %c0_31, %c4608] : memref<1x8x8192xf32, #tpu.memory_space<vmem>>, vector<1x8x128xf32>
    %47 = vector.shape_cast %46 : vector<1x8x128xf32> to vector<8x128xf32>
    %48 = vector.shape_cast %45 : vector<8x128xf32> to vector<1x8x128xf32>
    tpu.vector_store %arg3[%c0_30, %c0_31, %c4608], %48 {strides = array<i32>} : memref<1x8x8192xf32, #tpu.memory_space<vmem>>, vector<1x8x128xf32>,
    %49 = vector.extract_strided_slice %8 {offsets = [0, 1280], sizes = [8, 128], strides = [1, 1]} : vector<8x2048xf32> to vector<8x128xf32>
    %c0_32 = arith.constant 0 : index
    %c0_33 = arith.constant 0 : index
    %c5120 = arith.constant 5120 : index
    %50 = vector.load %arg3[%c0_32, %c0_33, %c5120] : memref<1x8x8192xf32, #tpu.memory_space<vmem>>, vector<1x8x128xf32>
    %51 = vector.shape_cast %50 : vector<1x8x128xf32> to vector<8x128xf32>
    %52 = vector.shape_cast %49 : vector<8x128xf32> to vector<1x8x128xf32>
    tpu.vector_store %arg3[%c0_32, %c0_33, %c5120], %52 {strides = array<i32>} : memref<1x8x8192xf32, #tpu.memory_space<vmem>>, vector<1x8x128xf32>,
    %53 = vector.extract_strided_slice %8 {offsets = [0, 1408], sizes = [8, 128], strides = [1, 1]} : vector<8x2048xf32> to vector<8x128xf32>
    %c0_34 = arith.constant 0 : index
    %c0_35 = arith.constant 0 : index
    %c5632 = arith.constant 5632 : index
    %54 = vector.load %arg3[%c0_34, %c0_35, %c5632] : memref<1x8x8192xf32, #tpu.memory_space<vmem>>, vector<1x8x128xf32>
    %55 = vector.shape_cast %54 : vector<1x8x128xf32> to vector<8x128xf32>
    %56 = vector.shape_cast %53 : vector<8x128xf32> to vector<1x8x128xf32>
    tpu.vector_store %arg3[%c0_34, %c0_35, %c5632], %56 {strides = array<i32>} : memref<1x8x8192xf32, #tpu.memory_space<vmem>>, vector<1x8x128xf32>,
    %57 = vector.extract_strided_slice %8 {offsets = [0, 1536], sizes = [8, 128], strides = [1, 1]} : vector<8x2048xf32> to vector<8x128xf32>
    %c0_36 = arith.constant 0 : index
    %c0_37 = arith.constant 0 : index
    %c6144 = arith.constant 6144 : index
    %58 = vector.load %arg3[%c0_36, %c0_37, %c6144] : memref<1x8x8192xf32, #tpu.memory_space<vmem>>, vector<1x8x128xf32>
    %59 = vector.shape_cast %58 : vector<1x8x128xf32> to vector<8x128xf32>
    %60 = vector.shape_cast %57 : vector<8x128xf32> to vector<1x8x128xf32>
    tpu.vector_store %arg3[%c0_36, %c0_37, %c6144], %60 {strides = array<i32>} : memref<1x8x8192xf32, #tpu.memory_space<vmem>>, vector<1x8x128xf32>,
    %61 = vector.extract_strided_slice %8 {offsets = [0, 1664], sizes = [8, 128], strides = [1, 1]} : vector<8x2048xf32> to vector<8x128xf32>
    %c0_38 = arith.constant 0 : index
    %c0_39 = arith.constant 0 : index
    %c6656 = arith.constant 6656 : index
    %62 = vector.load %arg3[%c0_38, %c0_39, %c6656] : memref<1x8x8192xf32, #tpu.memory_space<vmem>>, vector<1x8x128xf32>
    %63 = vector.shape_cast %62 : vector<1x8x128xf32> to vector<8x128xf32>
    %64 = vector.shape_cast %61 : vector<8x128xf32> to vector<1x8x128xf32>
    tpu.vector_store %arg3[%c0_38, %c0_39, %c6656], %64 {strides = array<i32>} : memref<1x8x8192xf32, #tpu.memory_space<vmem>>, vector<1x8x128xf32>,
    %65 = vector.extract_strided_slice %8 {offsets = [0, 1792], sizes = [8, 128], strides = [1, 1]} : vector<8x2048xf32> to vector<8x128xf32>
    %c0_40 = arith.constant 0 : index
    %c0_41 = arith.constant 0 : index
    %c7168 = arith.constant 7168 : index
    %66 = vector.load %arg3[%c0_40, %c0_41, %c7168] : memref<1x8x8192xf32, #tpu.memory_space<vmem>>, vector<1x8x128xf32>
    %67 = vector.shape_cast %66 : vector<1x8x128xf32> to vector<8x128xf32>
    %68 = vector.shape_cast %65 : vector<8x128xf32> to vector<1x8x128xf32>
    tpu.vector_store %arg3[%c0_40, %c0_41, %c7168], %68 {strides = array<i32>} : memref<1x8x8192xf32, #tpu.memory_space<vmem>>, vector<1x8x128xf32>,
    %69 = vector.extract_strided_slice %8 {offsets = [0, 1920], sizes = [8, 128], strides = [1, 1]} : vector<8x2048xf32> to vector<8x128xf32>
    %c0_42 = arith.constant 0 : index
    %c0_43 = arith.constant 0 : index
    %c7680 = arith.constant 7680 : index
    %70 = vector.load %arg3[%c0_42, %c0_43, %c7680] : memref<1x8x8192xf32, #tpu.memory_space<vmem>>, vector<1x8x128xf32>
    %71 = vector.shape_cast %70 : vector<1x8x128xf32> to vector<8x128xf32>
    %72 = vector.shape_cast %69 : vector<8x128xf32> to vector<1x8x128xf32>
    tpu.vector_store %arg3[%c0_42, %c0_43, %c7680], %72 {strides = array<i32>} : memref<1x8x8192xf32, #tpu.memory_space<vmem>>, vector<1x8x128xf32>,
    %c0_44 = arith.constant 0 : index
    %c0_45 = arith.constant 0 : index
    %c1_46 = arith.constant 1 : index
    %73 = vector.load %arg1[%c0_44, %c0_45, %c1_46] : memref<1x4x2304xf32, #tpu.memory_space<vmem>>, vector<1x4x2048xf32>
    %74 = vector.shape_cast %73 : vector<1x4x2048xf32> to vector<4x2048xf32>
    %c1_47 = arith.constant 1 : index
    %c0_48 = arith.constant 0 : index
    %75 = vector.load %arg4[%c1_47, %c0_48] : memref<17x2048xf32, #tpu.memory_space<vmem>>, vector<4x2048xf32>
    tpu.vector_store %arg4[%c1_47, %c0_48], %74 {strides = array<i32>} : memref<17x2048xf32, #tpu.memory_space<vmem>>, vector<4x2048xf32>,
    %c0_49 = arith.constant 0 : index
    %c0_50 = arith.constant 0 : index
    %c0_51 = arith.constant 0 : index
    %76 = vector.load %arg1[%c0_49, %c0_50, %c0_51] : memref<1x4x2304xf32, #tpu.memory_space<vmem>>, vector<1x4x2048xf32>
    %77 = vector.shape_cast %76 : vector<1x4x2048xf32> to vector<4x2048xf32>
    %c5 = arith.constant 5 : index
    %c0_52 = arith.constant 0 : index
    %78 = vector.load %arg4[%c5, %c0_52] : memref<17x2048xf32, #tpu.memory_space<vmem>>, vector<4x2048xf32>
    tpu.vector_store %arg4[%c5, %c0_52], %77 {strides = array<i32>} : memref<17x2048xf32, #tpu.memory_space<vmem>>, vector<4x2048xf32>,
    %c1_53 = arith.constant 1 : index
    %c0_54 = arith.constant 0 : index
    %c0_55 = arith.constant 0 : index
    %79 = vector.load %arg2[%c1_53, %c0_54, %c0_55] : memref<4x8x17xf32, #tpu.memory_space<vmem>>, vector<1x8x9xf32>
    %80 = vector.shape_cast %79 : vector<1x8x9xf32> to vector<8x9xf32>
    %c0_56 = arith.constant 0 : index
    %c0_57 = arith.constant 0 : index
    %81 = vector.load %arg4[%c0_56, %c0_57] : memref<17x2048xf32, #tpu.memory_space<vmem>>, vector<9x2048xf32>
    %cst_58 = arith.constant dense<0.000000e+00> : vector<8x2048xf32>
    %82 = tpu.matmul %80, %81, %cst_58 {dimension_numbers = #tpu.dot_dimension_numbers<[1], [0], [0], [1], [0, 0, 1, 1], [], []>} : vector<8x9xf32>, vector<9x2048xf32>, vector<8x2048xf32> -> vector<8x2048xf32>
    %83 = vector.extract_strided_slice %82 {offsets = [0, 0], sizes = [8, 128], strides = [1, 1]} : vector<8x2048xf32> to vector<8x128xf32>
    %c0_59 = arith.constant 0 : index
    %c0_60 = arith.constant 0 : index
    %c128 = arith.constant 128 : index
    %84 = vector.load %arg3[%c0_59, %c0_60, %c128] : memref<1x8x8192xf32, #tpu.memory_space<vmem>>, vector<1x8x128xf32>
    %85 = vector.shape_cast %84 : vector<1x8x128xf32> to vector<8x128xf32>
    %86 = vector.shape_cast %83 : vector<8x128xf32> to vector<1x8x128xf32>
    tpu.vector_store %arg3[%c0_59, %c0_60, %c128], %86 {strides = array<i32>} : memref<1x8x8192xf32, #tpu.memory_space<vmem>>, vector<1x8x128xf32>,
    %87 = vector.extract_strided_slice %82 {offsets = [0, 128], sizes = [8, 128], strides = [1, 1]} : vector<8x2048xf32> to vector<8x128xf32>
    %c0_61 = arith.constant 0 : index
    %c0_62 = arith.constant 0 : index
    %c640 = arith.constant 640 : index
    %88 = vector.load %arg3[%c0_61, %c0_62, %c640] : memref<1x8x8192xf32, #tpu.memory_space<vmem>>, vector<1x8x128xf32>
    %89 = vector.shape_cast %88 : vector<1x8x128xf32> to vector<8x128xf32>
    %90 = vector.shape_cast %87 : vector<8x128xf32> to vector<1x8x128xf32>
    tpu.vector_store %arg3[%c0_61, %c0_62, %c640], %90 {strides = array<i32>} : memref<1x8x8192xf32, #tpu.memory_space<vmem>>, vector<1x8x128xf32>,
    %91 = vector.extract_strided_slice %82 {offsets = [0, 256], sizes = [8, 128], strides = [1, 1]} : vector<8x2048xf32> to vector<8x128xf32>
    %c0_63 = arith.constant 0 : index
    %c0_64 = arith.constant 0 : index
    %c1152 = arith.constant 1152 : index
    %92 = vector.load %arg3[%c0_63, %c0_64, %c1152] : memref<1x8x8192xf32, #tpu.memory_space<vmem>>, vector<1x8x128xf32>
    %93 = vector.shape_cast %92 : vector<1x8x128xf32> to vector<8x128xf32>
    %94 = vector.shape_cast %91 : vector<8x128xf32> to vector<1x8x128xf32>
    tpu.vector_store %arg3[%c0_63, %c0_64, %c1152], %94 {strides = array<i32>} : memref<1x8x8192xf32, #tpu.memory_space<vmem>>, vector<1x8x128xf32>,
    %95 = vector.extract_strided_slice %82 {offsets = [0, 384], sizes = [8, 128], strides = [1, 1]} : vector<8x2048xf32> to vector<8x128xf32>
    %c0_65 = arith.constant 0 : index
    %c0_66 = arith.constant 0 : index
    %c1664 = arith.constant 1664 : index
    %96 = vector.load %arg3[%c0_65, %c0_66, %c1664] : memref<1x8x8192xf32, #tpu.memory_space<vmem>>, vector<1x8x128xf32>
    %97 = vector.shape_cast %96 : vector<1x8x128xf32> to vector<8x128xf32>
    %98 = vector.shape_cast %95 : vector<8x128xf32> to vector<1x8x128xf32>
    tpu.vector_store %arg3[%c0_65, %c0_66, %c1664], %98 {strides = array<i32>} : memref<1x8x8192xf32, #tpu.memory_space<vmem>>, vector<1x8x128xf32>,
    %99 = vector.extract_strided_slice %82 {offsets = [0, 512], sizes = [8, 128], strides = [1, 1]} : vector<8x2048xf32> to vector<8x128xf32>
    %c0_67 = arith.constant 0 : index
    %c0_68 = arith.constant 0 : index
    %c2176 = arith.constant 2176 : index
    %100 = vector.load %arg3[%c0_67, %c0_68, %c2176] : memref<1x8x8192xf32, #tpu.memory_space<vmem>>, vector<1x8x128xf32>
    %101 = vector.shape_cast %100 : vector<1x8x128xf32> to vector<8x128xf32>
    %102 = vector.shape_cast %99 : vector<8x128xf32> to vector<1x8x128xf32>
    tpu.vector_store %arg3[%c0_67, %c0_68, %c2176], %102 {strides = array<i32>} : memref<1x8x8192xf32, #tpu.memory_space<vmem>>, vector<1x8x128xf32>,
    %103 = vector.extract_strided_slice %82 {offsets = [0, 640], sizes = [8, 128], strides = [1, 1]} : vector<8x2048xf32> to vector<8x128xf32>
    %c0_69 = arith.constant 0 : index
    %c0_70 = arith.constant 0 : index
    %c2688 = arith.constant 2688 : index
    %104 = vector.load %arg3[%c0_69, %c0_70, %c2688] : memref<1x8x8192xf32, #tpu.memory_space<vmem>>, vector<1x8x128xf32>
    %105 = vector.shape_cast %104 : vector<1x8x128xf32> to vector<8x128xf32>
    %106 = vector.shape_cast %103 : vector<8x128xf32> to vector<1x8x128xf32>
    tpu.vector_store %arg3[%c0_69, %c0_70, %c2688], %106 {strides = array<i32>} : memref<1x8x8192xf32, #tpu.memory_space<vmem>>, vector<1x8x128xf32>,
    %107 = vector.extract_strided_slice %82 {offsets = [0, 768], sizes = [8, 128], strides = [1, 1]} : vector<8x2048xf32> to vector<8x128xf32>
    %c0_71 = arith.constant 0 : index
    %c0_72 = arith.constant 0 : index
    %c3200 = arith.constant 3200 : index
    %108 = vector.load %arg3[%c0_71, %c0_72, %c3200] : memref<1x8x8192xf32, #tpu.memory_space<vmem>>, vector<1x8x128xf32>
    %109 = vector.shape_cast %108 : vector<1x8x128xf32> to vector<8x128xf32>
    %110 = vector.shape_cast %107 : vector<8x128xf32> to vector<1x8x128xf32>
    tpu.vector_store %arg3[%c0_71, %c0_72, %c3200], %110 {strides = array<i32>} : memref<1x8x8192xf32, #tpu.memory_space<vmem>>, vector<1x8x128xf32>,
    %111 = vector.extract_strided_slice %82 {offsets = [0, 896], sizes = [8, 128], strides = [1, 1]} : vector<8x2048xf32> to vector<8x128xf32>
    %c0_73 = arith.constant 0 : index
    %c0_74 = arith.constant 0 : index
    %c3712 = arith.constant 3712 : index
    %112 = vector.load %arg3[%c0_73, %c0_74, %c3712] : memref<1x8x8192xf32, #tpu.memory_space<vmem>>, vector<1x8x128xf32>
    %113 = vector.shape_cast %112 : vector<1x8x128xf32> to vector<8x128xf32>
    %114 = vector.shape_cast %111 : vector<8x128xf32> to vector<1x8x128xf32>
    tpu.vector_store %arg3[%c0_73, %c0_74, %c3712], %114 {strides = array<i32>} : memref<1x8x8192xf32, #tpu.memory_space<vmem>>, vector<1x8x128xf32>,
    %115 = vector.extract_strided_slice %82 {offsets = [0, 1024], sizes = [8, 128], strides = [1, 1]} : vector<8x2048xf32> to vector<8x128xf32>
    %c0_75 = arith.constant 0 : index
    %c0_76 = arith.constant 0 : index
    %c4224 = arith.constant 4224 : index
    %116 = vector.load %arg3[%c0_75, %c0_76, %c4224] : memref<1x8x8192xf32, #tpu.memory_space<vmem>>, vector<1x8x128xf32>
    %117 = vector.shape_cast %116 : vector<1x8x128xf32> to vector<8x128xf32>
    %118 = vector.shape_cast %115 : vector<8x128xf32> to vector<1x8x128xf32>
    tpu.vector_store %arg3[%c0_75, %c0_76, %c4224], %118 {strides = array<i32>} : memref<1x8x8192xf32, #tpu.memory_space<vmem>>, vector<1x8x128xf32>,
    %119 = vector.extract_strided_slice %82 {offsets = [0, 1152], sizes = [8, 128], strides = [1, 1]} : vector<8x2048xf32> to vector<8x128xf32>
    %c0_77 = arith.constant 0 : index
    %c0_78 = arith.constant 0 : index
    %c4736 = arith.constant 4736 : index
    %120 = vector.load %arg3[%c0_77, %c0_78, %c4736] : memref<1x8x8192xf32, #tpu.memory_space<vmem>>, vector<1x8x128xf32>
    %121 = vector.shape_cast %120 : vector<1x8x128xf32> to vector<8x128xf32>
    %122 = vector.shape_cast %119 : vector<8x128xf32> to vector<1x8x128xf32>
    tpu.vector_store %arg3[%c0_77, %c0_78, %c4736], %122 {strides = array<i32>} : memref<1x8x8192xf32, #tpu.memory_space<vmem>>, vector<1x8x128xf32>,
    %123 = vector.extract_strided_slice %82 {offsets = [0, 1280], sizes = [8, 128], strides = [1, 1]} : vector<8x2048xf32> to vector<8x128xf32>
    %c0_79 = arith.constant 0 : index
    %c0_80 = arith.constant 0 : index
    %c5248 = arith.constant 5248 : index
    %124 = vector.load %arg3[%c0_79, %c0_80, %c5248] : memref<1x8x8192xf32, #tpu.memory_space<vmem>>, vector<1x8x128xf32>
    %125 = vector.shape_cast %124 : vector<1x8x128xf32> to vector<8x128xf32>
    %126 = vector.shape_cast %123 : vector<8x128xf32> to vector<1x8x128xf32>
    tpu.vector_store %arg3[%c0_79, %c0_80, %c5248], %126 {strides = array<i32>} : memref<1x8x8192xf32, #tpu.memory_space<vmem>>, vector<1x8x128xf32>,
    %127 = vector.extract_strided_slice %82 {offsets = [0, 1408], sizes = [8, 128], strides = [1, 1]} : vector<8x2048xf32> to vector<8x128xf32>
    %c0_81 = arith.constant 0 : index
    %c0_82 = arith.constant 0 : index
    %c5760 = arith.constant 5760 : index
    %128 = vector.load %arg3[%c0_81, %c0_82, %c5760] : memref<1x8x8192xf32, #tpu.memory_space<vmem>>, vector<1x8x128xf32>
    %129 = vector.shape_cast %128 : vector<1x8x128xf32> to vector<8x128xf32>
    %130 = vector.shape_cast %127 : vector<8x128xf32> to vector<1x8x128xf32>
    tpu.vector_store %arg3[%c0_81, %c0_82, %c5760], %130 {strides = array<i32>} : memref<1x8x8192xf32, #tpu.memory_space<vmem>>, vector<1x8x128xf32>,
    %131 = vector.extract_strided_slice %82 {offsets = [0, 1536], sizes = [8, 128], strides = [1, 1]} : vector<8x2048xf32> to vector<8x128xf32>
    %c0_83 = arith.constant 0 : index
    %c0_84 = arith.constant 0 : index
    %c6272 = arith.constant 6272 : index
    %132 = vector.load %arg3[%c0_83, %c0_84, %c6272] : memref<1x8x8192xf32, #tpu.memory_space<vmem>>, vector<1x8x128xf32>
    %133 = vector.shape_cast %132 : vector<1x8x128xf32> to vector<8x128xf32>
    %134 = vector.shape_cast %131 : vector<8x128xf32> to vector<1x8x128xf32>
    tpu.vector_store %arg3[%c0_83, %c0_84, %c6272], %134 {strides = array<i32>} : memref<1x8x8192xf32, #tpu.memory_space<vmem>>, vector<1x8x128xf32>,
    %135 = vector.extract_strided_slice %82 {offsets = [0, 1664], sizes = [8, 128], strides = [1, 1]} : vector<8x2048xf32> to vector<8x128xf32>
    %c0_85 = arith.constant 0 : index
    %c0_86 = arith.constant 0 : index
    %c6784 = arith.constant 6784 : index
    %136 = vector.load %arg3[%c0_85, %c0_86, %c6784] : memref<1x8x8192xf32, #tpu.memory_space<vmem>>, vector<1x8x128xf32>
    %137 = vector.shape_cast %136 : vector<1x8x128xf32> to vector<8x128xf32>
    %138 = vector.shape_cast %135 : vector<8x128xf32> to vector<1x8x128xf32>
    tpu.vector_store %arg3[%c0_85, %c0_86, %c6784], %138 {strides = array<i32>} : memref<1x8x8192xf32, #tpu.memory_space<vmem>>, vector<1x8x128xf32>,
    %139 = vector.extract_strided_slice %82 {offsets = [0, 1792], sizes = [8, 128], strides = [1, 1]} : vector<8x2048xf32> to vector<8x128xf32>
    %c0_87 = arith.constant 0 : index
    %c0_88 = arith.constant 0 : index
    %c7296 = arith.constant 7296 : index
    %140 = vector.load %arg3[%c0_87, %c0_88, %c7296] : memref<1x8x8192xf32, #tpu.memory_space<vmem>>, vector<1x8x128xf32>
    %141 = vector.shape_cast %140 : vector<1x8x128xf32> to vector<8x128xf32>
    %142 = vector.shape_cast %139 : vector<8x128xf32> to vector<1x8x128xf32>
    tpu.vector_store %arg3[%c0_87, %c0_88, %c7296], %142 {strides = array<i32>} : memref<1x8x8192xf32, #tpu.memory_space<vmem>>, vector<1x8x128xf32>,
    %143 = vector.extract_strided_slice %82 {offsets = [0, 1920], sizes = [8, 128], strides = [1, 1]} : vector<8x2048xf32> to vector<8x128xf32>
    %c0_89 = arith.constant 0 : index
    %c0_90 = arith.constant 0 : index
    %c7808 = arith.constant 7808 : index
    %144 = vector.load %arg3[%c0_89, %c0_90, %c7808] : memref<1x8x8192xf32, #tpu.memory_space<vmem>>, vector<1x8x128xf32>
    %145 = vector.shape_cast %144 : vector<1x8x128xf32> to vector<8x128xf32>
    %146 = vector.shape_cast %143 : vector<8x128xf32> to vector<1x8x128xf32>
    tpu.vector_store %arg3[%c0_89, %c0_90, %c7808], %146 {strides = array<i32>} : memref<1x8x8192xf32, #tpu.memory_space<vmem>>, vector<1x8x128xf32>,
    %c0_91 = arith.constant 0 : index
    %c0_92 = arith.constant 0 : index
    %c128_93 = arith.constant 128 : index
    %147 = vector.load %arg1[%c0_91, %c0_92, %c128_93] : memref<1x4x2304xf32, #tpu.memory_space<vmem>>, vector<1x4x2048xf32>
    %148 = vector.shape_cast %147 : vector<1x4x2048xf32> to vector<4x2048xf32>
    %c1_94 = arith.constant 1 : index
    %c0_95 = arith.constant 0 : index
    %149 = vector.load %arg4[%c1_94, %c0_95] : memref<17x2048xf32, #tpu.memory_space<vmem>>, vector<4x2048xf32>
    tpu.vector_store %arg4[%c1_94, %c0_95], %148 {strides = array<i32>} : memref<17x2048xf32, #tpu.memory_space<vmem>>, vector<4x2048xf32>,
    %c0_96 = arith.constant 0 : index
    %c0_97 = arith.constant 0 : index
    %c0_98 = arith.constant 0 : index
    %150 = vector.load %arg1[%c0_96, %c0_97, %c0_98] : memref<1x4x2304xf32, #tpu.memory_space<vmem>>, vector<1x4x2048xf32>
    %151 = vector.shape_cast %150 : vector<1x4x2048xf32> to vector<4x2048xf32>
    %c5_99 = arith.constant 5 : index
    %c0_100 = arith.constant 0 : index
    %152 = vector.load %arg4[%c5_99, %c0_100] : memref<17x2048xf32, #tpu.memory_space<vmem>>, vector<4x2048xf32>
    tpu.vector_store %arg4[%c5_99, %c0_100], %151 {strides = array<i32>} : memref<17x2048xf32, #tpu.memory_space<vmem>>, vector<4x2048xf32>,
    %c2 = arith.constant 2 : index
    %c0_101 = arith.constant 0 : index
    %c0_102 = arith.constant 0 : index
    %153 = vector.load %arg2[%c2, %c0_101, %c0_102] : memref<4x8x17xf32, #tpu.memory_space<vmem>>, vector<1x8x9xf32>
    %154 = vector.shape_cast %153 : vector<1x8x9xf32> to vector<8x9xf32>
    %c0_103 = arith.constant 0 : index
    %c0_104 = arith.constant 0 : index
    %155 = vector.load %arg4[%c0_103, %c0_104] : memref<17x2048xf32, #tpu.memory_space<vmem>>, vector<9x2048xf32>
    %cst_105 = arith.constant dense<0.000000e+00> : vector<8x2048xf32>
    %156 = tpu.matmul %154, %155, %cst_105 {dimension_numbers = #tpu.dot_dimension_numbers<[1], [0], [0], [1], [0, 0, 1, 1], [], []>} : vector<8x9xf32>, vector<9x2048xf32>, vector<8x2048xf32> -> vector<8x2048xf32>
    %157 = vector.extract_strided_slice %156 {offsets = [0, 0], sizes = [8, 128], strides = [1, 1]} : vector<8x2048xf32> to vector<8x128xf32>
    %c0_106 = arith.constant 0 : index
    %c0_107 = arith.constant 0 : index
    %c256 = arith.constant 256 : index
    %158 = vector.load %arg3[%c0_106, %c0_107, %c256] : memref<1x8x8192xf32, #tpu.memory_space<vmem>>, vector<1x8x128xf32>
    %159 = vector.shape_cast %158 : vector<1x8x128xf32> to vector<8x128xf32>
    %160 = vector.shape_cast %157 : vector<8x128xf32> to vector<1x8x128xf32>
    tpu.vector_store %arg3[%c0_106, %c0_107, %c256], %160 {strides = array<i32>} : memref<1x8x8192xf32, #tpu.memory_space<vmem>>, vector<1x8x128xf32>,
    %161 = vector.extract_strided_slice %156 {offsets = [0, 128], sizes = [8, 128], strides = [1, 1]} : vector<8x2048xf32> to vector<8x128xf32>
    %c0_108 = arith.constant 0 : index
    %c0_109 = arith.constant 0 : index
    %c768 = arith.constant 768 : index
    %162 = vector.load %arg3[%c0_108, %c0_109, %c768] : memref<1x8x8192xf32, #tpu.memory_space<vmem>>, vector<1x8x128xf32>
    %163 = vector.shape_cast %162 : vector<1x8x128xf32> to vector<8x128xf32>
    %164 = vector.shape_cast %161 : vector<8x128xf32> to vector<1x8x128xf32>
    tpu.vector_store %arg3[%c0_108, %c0_109, %c768], %164 {strides = array<i32>} : memref<1x8x8192xf32, #tpu.memory_space<vmem>>, vector<1x8x128xf32>,
    %165 = vector.extract_strided_slice %156 {offsets = [0, 256], sizes = [8, 128], strides = [1, 1]} : vector<8x2048xf32> to vector<8x128xf32>
    %c0_110 = arith.constant 0 : index
    %c0_111 = arith.constant 0 : index
    %c1280 = arith.constant 1280 : index
    %166 = vector.load %arg3[%c0_110, %c0_111, %c1280] : memref<1x8x8192xf32, #tpu.memory_space<vmem>>, vector<1x8x128xf32>
    %167 = vector.shape_cast %166 : vector<1x8x128xf32> to vector<8x128xf32>
    %168 = vector.shape_cast %165 : vector<8x128xf32> to vector<1x8x128xf32>
    tpu.vector_store %arg3[%c0_110, %c0_111, %c1280], %168 {strides = array<i32>} : memref<1x8x8192xf32, #tpu.memory_space<vmem>>, vector<1x8x128xf32>,
    %169 = vector.extract_strided_slice %156 {offsets = [0, 384], sizes = [8, 128], strides = [1, 1]} : vector<8x2048xf32> to vector<8x128xf32>
    %c0_112 = arith.constant 0 : index
    %c0_113 = arith.constant 0 : index
    %c1792 = arith.constant 1792 : index
    %170 = vector.load %arg3[%c0_112, %c0_113, %c1792] : memref<1x8x8192xf32, #tpu.memory_space<vmem>>, vector<1x8x128xf32>
    %171 = vector.shape_cast %170 : vector<1x8x128xf32> to vector<8x128xf32>
    %172 = vector.shape_cast %169 : vector<8x128xf32> to vector<1x8x128xf32>
    tpu.vector_store %arg3[%c0_112, %c0_113, %c1792], %172 {strides = array<i32>} : memref<1x8x8192xf32, #tpu.memory_space<vmem>>, vector<1x8x128xf32>,
    %173 = vector.extract_strided_slice %156 {offsets = [0, 512], sizes = [8, 128], strides = [1, 1]} : vector<8x2048xf32> to vector<8x128xf32>
    %c0_114 = arith.constant 0 : index
    %c0_115 = arith.constant 0 : index
    %c2304 = arith.constant 2304 : index
    %174 = vector.load %arg3[%c0_114, %c0_115, %c2304] : memref<1x8x8192xf32, #tpu.memory_space<vmem>>, vector<1x8x128xf32>
    %175 = vector.shape_cast %174 : vector<1x8x128xf32> to vector<8x128xf32>
    %176 = vector.shape_cast %173 : vector<8x128xf32> to vector<1x8x128xf32>
    tpu.vector_store %arg3[%c0_114, %c0_115, %c2304], %176 {strides = array<i32>} : memref<1x8x8192xf32, #tpu.memory_space<vmem>>, vector<1x8x128xf32>,
    %177 = vector.extract_strided_slice %156 {offsets = [0, 640], sizes = [8, 128], strides = [1, 1]} : vector<8x2048xf32> to vector<8x128xf32>
    %c0_116 = arith.constant 0 : index
    %c0_117 = arith.constant 0 : index
    %c2816 = arith.constant 2816 : index
    %178 = vector.load %arg3[%c0_116, %c0_117, %c2816] : memref<1x8x8192xf32, #tpu.memory_space<vmem>>, vector<1x8x128xf32>
    %179 = vector.shape_cast %178 : vector<1x8x128xf32> to vector<8x128xf32>
    %180 = vector.shape_cast %177 : vector<8x128xf32> to vector<1x8x128xf32>
    tpu.vector_store %arg3[%c0_116, %c0_117, %c2816], %180 {strides = array<i32>} : memref<1x8x8192xf32, #tpu.memory_space<vmem>>, vector<1x8x128xf32>,
    %181 = vector.extract_strided_slice %156 {offsets = [0, 768], sizes = [8, 128], strides = [1, 1]} : vector<8x2048xf32> to vector<8x128xf32>
    %c0_118 = arith.constant 0 : index
    %c0_119 = arith.constant 0 : index
    %c3328 = arith.constant 3328 : index
    %182 = vector.load %arg3[%c0_118, %c0_119, %c3328] : memref<1x8x8192xf32, #tpu.memory_space<vmem>>, vector<1x8x128xf32>
    %183 = vector.shape_cast %182 : vector<1x8x128xf32> to vector<8x128xf32>
    %184 = vector.shape_cast %181 : vector<8x128xf32> to vector<1x8x128xf32>
    tpu.vector_store %arg3[%c0_118, %c0_119, %c3328], %184 {strides = array<i32>} : memref<1x8x8192xf32, #tpu.memory_space<vmem>>, vector<1x8x128xf32>,
    %185 = vector.extract_strided_slice %156 {offsets = [0, 896], sizes = [8, 128], strides = [1, 1]} : vector<8x2048xf32> to vector<8x128xf32>
    %c0_120 = arith.constant 0 : index
    %c0_121 = arith.constant 0 : index
    %c3840 = arith.constant 3840 : index
    %186 = vector.load %arg3[%c0_120, %c0_121, %c3840] : memref<1x8x8192xf32, #tpu.memory_space<vmem>>, vector<1x8x128xf32>
    %187 = vector.shape_cast %186 : vector<1x8x128xf32> to vector<8x128xf32>
    %188 = vector.shape_cast %185 : vector<8x128xf32> to vector<1x8x128xf32>
    tpu.vector_store %arg3[%c0_120, %c0_121, %c3840], %188 {strides = array<i32>} : memref<1x8x8192xf32, #tpu.memory_space<vmem>>, vector<1x8x128xf32>,
    %189 = vector.extract_strided_slice %156 {offsets = [0, 1024], sizes = [8, 128], strides = [1, 1]} : vector<8x2048xf32> to vector<8x128xf32>
    %c0_122 = arith.constant 0 : index
    %c0_123 = arith.constant 0 : index
    %c4352 = arith.constant 4352 : index
    %190 = vector.load %arg3[%c0_122, %c0_123, %c4352] : memref<1x8x8192xf32, #tpu.memory_space<vmem>>, vector<1x8x128xf32>
    %191 = vector.shape_cast %190 : vector<1x8x128xf32> to vector<8x128xf32>
    %192 = vector.shape_cast %189 : vector<8x128xf32> to vector<1x8x128xf32>
    tpu.vector_store %arg3[%c0_122, %c0_123, %c4352], %192 {strides = array<i32>} : memref<1x8x8192xf32, #tpu.memory_space<vmem>>, vector<1x8x128xf32>,
    %193 = vector.extract_strided_slice %156 {offsets = [0, 1152], sizes = [8, 128], strides = [1, 1]} : vector<8x2048xf32> to vector<8x128xf32>
    %c0_124 = arith.constant 0 : index
    %c0_125 = arith.constant 0 : index
    %c4864 = arith.constant 4864 : index
    %194 = vector.load %arg3[%c0_124, %c0_125, %c4864] : memref<1x8x8192xf32, #tpu.memory_space<vmem>>, vector<1x8x128xf32>
    %195 = vector.shape_cast %194 : vector<1x8x128xf32> to vector<8x128xf32>
    %196 = vector.shape_cast %193 : vector<8x128xf32> to vector<1x8x128xf32>
    tpu.vector_store %arg3[%c0_124, %c0_125, %c4864], %196 {strides = array<i32>} : memref<1x8x8192xf32, #tpu.memory_space<vmem>>, vector<1x8x128xf32>,
    %197 = vector.extract_strided_slice %156 {offsets = [0, 1280], sizes = [8, 128], strides = [1, 1]} : vector<8x2048xf32> to vector<8x128xf32>
    %c0_126 = arith.constant 0 : index
    %c0_127 = arith.constant 0 : index
    %c5376 = arith.constant 5376 : index
    %198 = vector.load %arg3[%c0_126, %c0_127, %c5376] : memref<1x8x8192xf32, #tpu.memory_space<vmem>>, vector<1x8x128xf32>
    %199 = vector.shape_cast %198 : vector<1x8x128xf32> to vector<8x128xf32>
    %200 = vector.shape_cast %197 : vector<8x128xf32> to vector<1x8x128xf32>
    tpu.vector_store %arg3[%c0_126, %c0_127, %c5376], %200 {strides = array<i32>} : memref<1x8x8192xf32, #tpu.memory_space<vmem>>, vector<1x8x128xf32>,
    %201 = vector.extract_strided_slice %156 {offsets = [0, 1408], sizes = [8, 128], strides = [1, 1]} : vector<8x2048xf32> to vector<8x128xf32>
    %c0_128 = arith.constant 0 : index
    %c0_129 = arith.constant 0 : index
    %c5888 = arith.constant 5888 : index
    %202 = vector.load %arg3[%c0_128, %c0_129, %c5888] : memref<1x8x8192xf32, #tpu.memory_space<vmem>>, vector<1x8x128xf32>
    %203 = vector.shape_cast %202 : vector<1x8x128xf32> to vector<8x128xf32>
    %204 = vector.shape_cast %201 : vector<8x128xf32> to vector<1x8x128xf32>
    tpu.vector_store %arg3[%c0_128, %c0_129, %c5888], %204 {strides = array<i32>} : memref<1x8x8192xf32, #tpu.memory_space<vmem>>, vector<1x8x128xf32>,
    %205 = vector.extract_strided_slice %156 {offsets = [0, 1536], sizes = [8, 128], strides = [1, 1]} : vector<8x2048xf32> to vector<8x128xf32>
    %c0_130 = arith.constant 0 : index
    %c0_131 = arith.constant 0 : index
    %c6400 = arith.constant 6400 : index
    %206 = vector.load %arg3[%c0_130, %c0_131, %c6400] : memref<1x8x8192xf32, #tpu.memory_space<vmem>>, vector<1x8x128xf32>
    %207 = vector.shape_cast %206 : vector<1x8x128xf32> to vector<8x128xf32>
    %208 = vector.shape_cast %205 : vector<8x128xf32> to vector<1x8x128xf32>
    tpu.vector_store %arg3[%c0_130, %c0_131, %c6400], %208 {strides = array<i32>} : memref<1x8x8192xf32, #tpu.memory_space<vmem>>, vector<1x8x128xf32>,
    %209 = vector.extract_strided_slice %156 {offsets = [0, 1664], sizes = [8, 128], strides = [1, 1]} : vector<8x2048xf32> to vector<8x128xf32>
    %c0_132 = arith.constant 0 : index
    %c0_133 = arith.constant 0 : index
    %c6912 = arith.constant 6912 : index
    %210 = vector.load %arg3[%c0_132, %c0_133, %c6912] : memref<1x8x8192xf32, #tpu.memory_space<vmem>>, vector<1x8x128xf32>
    %211 = vector.shape_cast %210 : vector<1x8x128xf32> to vector<8x128xf32>
    %212 = vector.shape_cast %209 : vector<8x128xf32> to vector<1x8x128xf32>
    tpu.vector_store %arg3[%c0_132, %c0_133, %c6912], %212 {strides = array<i32>} : memref<1x8x8192xf32, #tpu.memory_space<vmem>>, vector<1x8x128xf32>,
    %213 = vector.extract_strided_slice %156 {offsets = [0, 1792], sizes = [8, 128], strides = [1, 1]} : vector<8x2048xf32> to vector<8x128xf32>
    %c0_134 = arith.constant 0 : index
    %c0_135 = arith.constant 0 : index
    %c7424 = arith.constant 7424 : index
    %214 = vector.load %arg3[%c0_134, %c0_135, %c7424] : memref<1x8x8192xf32, #tpu.memory_space<vmem>>, vector<1x8x128xf32>
    %215 = vector.shape_cast %214 : vector<1x8x128xf32> to vector<8x128xf32>
    %216 = vector.shape_cast %213 : vector<8x128xf32> to vector<1x8x128xf32>
    tpu.vector_store %arg3[%c0_134, %c0_135, %c7424], %216 {strides = array<i32>} : memref<1x8x8192xf32, #tpu.memory_space<vmem>>, vector<1x8x128xf32>,
    %217 = vector.extract_strided_slice %156 {offsets = [0, 1920], sizes = [8, 128], strides = [1, 1]} : vector<8x2048xf32> to vector<8x128xf32>
    %c0_136 = arith.constant 0 : index
    %c0_137 = arith.constant 0 : index
    %c7936 = arith.constant 7936 : index
    %218 = vector.load %arg3[%c0_136, %c0_137, %c7936] : memref<1x8x8192xf32, #tpu.memory_space<vmem>>, vector<1x8x128xf32>
    %219 = vector.shape_cast %218 : vector<1x8x128xf32> to vector<8x128xf32>
    %220 = vector.shape_cast %217 : vector<8x128xf32> to vector<1x8x128xf32>
    tpu.vector_store %arg3[%c0_136, %c0_137, %c7936], %220 {strides = array<i32>} : memref<1x8x8192xf32, #tpu.memory_space<vmem>>, vector<1x8x128xf32>,
    %c0_138 = arith.constant 0 : index
    %c0_139 = arith.constant 0 : index
    %c129 = arith.constant 129 : index
    %221 = vector.load %arg1[%c0_138, %c0_139, %c129] : memref<1x4x2304xf32, #tpu.memory_space<vmem>>, vector<1x4x2048xf32>
    %222 = vector.shape_cast %221 : vector<1x4x2048xf32> to vector<4x2048xf32>
    %c1_140 = arith.constant 1 : index
    %c0_141 = arith.constant 0 : index
    %223 = vector.load %arg4[%c1_140, %c0_141] : memref<17x2048xf32, #tpu.memory_space<vmem>>, vector<4x2048xf32>
    tpu.vector_store %arg4[%c1_140, %c0_141], %222 {strides = array<i32>} : memref<17x2048xf32, #tpu.memory_space<vmem>>, vector<4x2048xf32>,
    %c0_142 = arith.constant 0 : index
    %c0_143 = arith.constant 0 : index
    %c128_144 = arith.constant 128 : index
    %224 = vector.load %arg1[%c0_142, %c0_143, %c128_144] : memref<1x4x2304xf32, #tpu.memory_space<vmem>>, vector<1x4x2048xf32>
    %225 = vector.shape_cast %224 : vector<1x4x2048xf32> to vector<4x2048xf32>
    %c5_145 = arith.constant 5 : index
    %c0_146 = arith.constant 0 : index
    %226 = vector.load %arg4[%c5_145, %c0_146] : memref<17x2048xf32, #tpu.memory_space<vmem>>, vector<4x2048xf32>
    tpu.vector_store %arg4[%c5_145, %c0_146], %225 {strides = array<i32>} : memref<17x2048xf32, #tpu.memory_space<vmem>>, vector<4x2048xf32>,
    %c0_147 = arith.constant 0 : index
    %c0_148 = arith.constant 0 : index
    %c1_149 = arith.constant 1 : index
    %227 = vector.load %arg1[%c0_147, %c0_148, %c1_149] : memref<1x4x2304xf32, #tpu.memory_space<vmem>>, vector<1x4x2048xf32>
    %228 = vector.shape_cast %227 : vector<1x4x2048xf32> to vector<4x2048xf32>
    %c9 = arith.constant 9 : index
    %c0_150 = arith.constant 0 : index
    %229 = vector.load %arg4[%c9, %c0_150] : memref<17x2048xf32, #tpu.memory_space<vmem>>, vector<4x2048xf32>
    tpu.vector_store %arg4[%c9, %c0_150], %228 {strides = array<i32>} : memref<17x2048xf32, #tpu.memory_space<vmem>>, vector<4x2048xf32>,
    %c0_151 = arith.constant 0 : index
    %c0_152 = arith.constant 0 : index
    %c0_153 = arith.constant 0 : index
    %230 = vector.load %arg1[%c0_151, %c0_152, %c0_153] : memref<1x4x2304xf32, #tpu.memory_space<vmem>>, vector<1x4x2048xf32>
    %231 = vector.shape_cast %230 : vector<1x4x2048xf32> to vector<4x2048xf32>
    %c13 = arith.constant 13 : index
    %c0_154 = arith.constant 0 : index
    %232 = vector.load %arg4[%c13, %c0_154] : memref<17x2048xf32, #tpu.memory_space<vmem>>, vector<4x2048xf32>
    tpu.vector_store %arg4[%c13, %c0_154], %231 {strides = array<i32>} : memref<17x2048xf32, #tpu.memory_space<vmem>>, vector<4x2048xf32>,
    %c3 = arith.constant 3 : index
    %c0_155 = arith.constant 0 : index
    %c0_156 = arith.constant 0 : index
    %233 = vector.load %arg2[%c3, %c0_155, %c0_156] : memref<4x8x17xf32, #tpu.memory_space<vmem>>, vector<1x8x17xf32>
    %234 = vector.shape_cast %233 : vector<1x8x17xf32> to vector<8x17xf32>
    %c0_157 = arith.constant 0 : index
    %c0_158 = arith.constant 0 : index
    %235 = vector.load %arg4[%c0_157, %c0_158] : memref<17x2048xf32, #tpu.memory_space<vmem>>, vector<17x2048xf32>
    %cst_159 = arith.constant dense<0.000000e+00> : vector<8x2048xf32>
    %236 = tpu.matmul %234, %235, %cst_159 {dimension_numbers = #tpu.dot_dimension_numbers<[1], [0], [0], [1], [0, 0, 1, 1], [], []>} : vector<8x17xf32>, vector<17x2048xf32>, vector<8x2048xf32> -> vector<8x2048xf32>
    %237 = vector.extract_strided_slice %236 {offsets = [0, 0], sizes = [8, 128], strides = [1, 1]} : vector<8x2048xf32> to vector<8x128xf32>
    %c0_160 = arith.constant 0 : index
    %c0_161 = arith.constant 0 : index
    %c384 = arith.constant 384 : index
    %238 = vector.load %arg3[%c0_160, %c0_161, %c384] : memref<1x8x8192xf32, #tpu.memory_space<vmem>>, vector<1x8x128xf32>
    %239 = vector.shape_cast %238 : vector<1x8x128xf32> to vector<8x128xf32>
    %240 = vector.shape_cast %237 : vector<8x128xf32> to vector<1x8x128xf32>
    tpu.vector_store %arg3[%c0_160, %c0_161, %c384], %240 {strides = array<i32>} : memref<1x8x8192xf32, #tpu.memory_space<vmem>>, vector<1x8x128xf32>,
    %241 = vector.extract_strided_slice %236 {offsets = [0, 128], sizes = [8, 128], strides = [1, 1]} : vector<8x2048xf32> to vector<8x128xf32>
    %c0_162 = arith.constant 0 : index
    %c0_163 = arith.constant 0 : index
    %c896 = arith.constant 896 : index
    %242 = vector.load %arg3[%c0_162, %c0_163, %c896] : memref<1x8x8192xf32, #tpu.memory_space<vmem>>, vector<1x8x128xf32>
    %243 = vector.shape_cast %242 : vector<1x8x128xf32> to vector<8x128xf32>
    %244 = vector.shape_cast %241 : vector<8x128xf32> to vector<1x8x128xf32>
    tpu.vector_store %arg3[%c0_162, %c0_163, %c896], %244 {strides = array<i32>} : memref<1x8x8192xf32, #tpu.memory_space<vmem>>, vector<1x8x128xf32>,
    %245 = vector.extract_strided_slice %236 {offsets = [0, 256], sizes = [8, 128], strides = [1, 1]} : vector<8x2048xf32> to vector<8x128xf32>
    %c0_164 = arith.constant 0 : index
    %c0_165 = arith.constant 0 : index
    %c1408 = arith.constant 1408 : index
    %246 = vector.load %arg3[%c0_164, %c0_165, %c1408] : memref<1x8x8192xf32, #tpu.memory_space<vmem>>, vector<1x8x128xf32>
    %247 = vector.shape_cast %246 : vector<1x8x128xf32> to vector<8x128xf32>
    %248 = vector.shape_cast %245 : vector<8x128xf32> to vector<1x8x128xf32>
    tpu.vector_store %arg3[%c0_164, %c0_165, %c1408], %248 {strides = array<i32>} : memref<1x8x8192xf32, #tpu.memory_space<vmem>>, vector<1x8x128xf32>,
    %249 = vector.extract_strided_slice %236 {offsets = [0, 384], sizes = [8, 128], strides = [1, 1]} : vector<8x2048xf32> to vector<8x128xf32>
    %c0_166 = arith.constant 0 : index
    %c0_167 = arith.constant 0 : index
    %c1920 = arith.constant 1920 : index
    %250 = vector.load %arg3[%c0_166, %c0_167, %c1920] : memref<1x8x8192xf32, #tpu.memory_space<vmem>>, vector<1x8x128xf32>
    %251 = vector.shape_cast %250 : vector<1x8x128xf32> to vector<8x128xf32>
    %252 = vector.shape_cast %249 : vector<8x128xf32> to vector<1x8x128xf32>
    tpu.vector_store %arg3[%c0_166, %c0_167, %c1920], %252 {strides = array<i32>} : memref<1x8x8192xf32, #tpu.memory_space<vmem>>, vector<1x8x128xf32>,
    %253 = vector.extract_strided_slice %236 {offsets = [0, 512], sizes = [8, 128], strides = [1, 1]} : vector<8x2048xf32> to vector<8x128xf32>
    %c0_168 = arith.constant 0 : index
    %c0_169 = arith.constant 0 : index
    %c2432 = arith.constant 2432 : index
    %254 = vector.load %arg3[%c0_168, %c0_169, %c2432] : memref<1x8x8192xf32, #tpu.memory_space<vmem>>, vector<1x8x128xf32>
    %255 = vector.shape_cast %254 : vector<1x8x128xf32> to vector<8x128xf32>
    %256 = vector.shape_cast %253 : vector<8x128xf32> to vector<1x8x128xf32>
    tpu.vector_store %arg3[%c0_168, %c0_169, %c2432], %256 {strides = array<i32>} : memref<1x8x8192xf32, #tpu.memory_space<vmem>>, vector<1x8x128xf32>,
    %257 = vector.extract_strided_slice %236 {offsets = [0, 640], sizes = [8, 128], strides = [1, 1]} : vector<8x2048xf32> to vector<8x128xf32>
    %c0_170 = arith.constant 0 : index
    %c0_171 = arith.constant 0 : index
    %c2944 = arith.constant 2944 : index
    %258 = vector.load %arg3[%c0_170, %c0_171, %c2944] : memref<1x8x8192xf32, #tpu.memory_space<vmem>>, vector<1x8x128xf32>
    %259 = vector.shape_cast %258 : vector<1x8x128xf32> to vector<8x128xf32>
    %260 = vector.shape_cast %257 : vector<8x128xf32> to vector<1x8x128xf32>
    tpu.vector_store %arg3[%c0_170, %c0_171, %c2944], %260 {strides = array<i32>} : memref<1x8x8192xf32, #tpu.memory_space<vmem>>, vector<1x8x128xf32>,
    %261 = vector.extract_strided_slice %236 {offsets = [0, 768], sizes = [8, 128], strides = [1, 1]} : vector<8x2048xf32> to vector<8x128xf32>
    %c0_172 = arith.constant 0 : index
    %c0_173 = arith.constant 0 : index
    %c3456 = arith.constant 3456 : index
    %262 = vector.load %arg3[%c0_172, %c0_173, %c3456] : memref<1x8x8192xf32, #tpu.memory_space<vmem>>, vector<1x8x128xf32>
    %263 = vector.shape_cast %262 : vector<1x8x128xf32> to vector<8x128xf32>
    %264 = vector.shape_cast %261 : vector<8x128xf32> to vector<1x8x128xf32>
    tpu.vector_store %arg3[%c0_172, %c0_173, %c3456], %264 {strides = array<i32>} : memref<1x8x8192xf32, #tpu.memory_space<vmem>>, vector<1x8x128xf32>,
    %265 = vector.extract_strided_slice %236 {offsets = [0, 896], sizes = [8, 128], strides = [1, 1]} : vector<8x2048xf32> to vector<8x128xf32>
    %c0_174 = arith.constant 0 : index
    %c0_175 = arith.constant 0 : index
    %c3968 = arith.constant 3968 : index
    %266 = vector.load %arg3[%c0_174, %c0_175, %c3968] : memref<1x8x8192xf32, #tpu.memory_space<vmem>>, vector<1x8x128xf32>
    %267 = vector.shape_cast %266 : vector<1x8x128xf32> to vector<8x128xf32>
    %268 = vector.shape_cast %265 : vector<8x128xf32> to vector<1x8x128xf32>
    tpu.vector_store %arg3[%c0_174, %c0_175, %c3968], %268 {strides = array<i32>} : memref<1x8x8192xf32, #tpu.memory_space<vmem>>, vector<1x8x128xf32>,
    %269 = vector.extract_strided_slice %236 {offsets = [0, 1024], sizes = [8, 128], strides = [1, 1]} : vector<8x2048xf32> to vector<8x128xf32>
    %c0_176 = arith.constant 0 : index
    %c0_177 = arith.constant 0 : index
    %c4480 = arith.constant 4480 : index
    %270 = vector.load %arg3[%c0_176, %c0_177, %c4480] : memref<1x8x8192xf32, #tpu.memory_space<vmem>>, vector<1x8x128xf32>
    %271 = vector.shape_cast %270 : vector<1x8x128xf32> to vector<8x128xf32>
    %272 = vector.shape_cast %269 : vector<8x128xf32> to vector<1x8x128xf32>
    tpu.vector_store %arg3[%c0_176, %c0_177, %c4480], %272 {strides = array<i32>} : memref<1x8x8192xf32, #tpu.memory_space<vmem>>, vector<1x8x128xf32>,
    %273 = vector.extract_strided_slice %236 {offsets = [0, 1152], sizes = [8, 128], strides = [1, 1]} : vector<8x2048xf32> to vector<8x128xf32>
    %c0_178 = arith.constant 0 : index
    %c0_179 = arith.constant 0 : index
    %c4992 = arith.constant 4992 : index
    %274 = vector.load %arg3[%c0_178, %c0_179, %c4992] : memref<1x8x8192xf32, #tpu.memory_space<vmem>>, vector<1x8x128xf32>
    %275 = vector.shape_cast %274 : vector<1x8x128xf32> to vector<8x128xf32>
    %276 = vector.shape_cast %273 : vector<8x128xf32> to vector<1x8x128xf32>
    tpu.vector_store %arg3[%c0_178, %c0_179, %c4992], %276 {strides = array<i32>} : memref<1x8x8192xf32, #tpu.memory_space<vmem>>, vector<1x8x128xf32>,
    %277 = vector.extract_strided_slice %236 {offsets = [0, 1280], sizes = [8, 128], strides = [1, 1]} : vector<8x2048xf32> to vector<8x128xf32>
    %c0_180 = arith.constant 0 : index
    %c0_181 = arith.constant 0 : index
    %c5504 = arith.constant 5504 : index
    %278 = vector.load %arg3[%c0_180, %c0_181, %c5504] : memref<1x8x8192xf32, #tpu.memory_space<vmem>>, vector<1x8x128xf32>
    %279 = vector.shape_cast %278 : vector<1x8x128xf32> to vector<8x128xf32>
    %280 = vector.shape_cast %277 : vector<8x128xf32> to vector<1x8x128xf32>
    tpu.vector_store %arg3[%c0_180, %c0_181, %c5504], %280 {strides = array<i32>} : memref<1x8x8192xf32, #tpu.memory_space<vmem>>, vector<1x8x128xf32>,
    %281 = vector.extract_strided_slice %236 {offsets = [0, 1408], sizes = [8, 128], strides = [1, 1]} : vector<8x2048xf32> to vector<8x128xf32>
    %c0_182 = arith.constant 0 : index
    %c0_183 = arith.constant 0 : index
    %c6016 = arith.constant 6016 : index
    %282 = vector.load %arg3[%c0_182, %c0_183, %c6016] : memref<1x8x8192xf32, #tpu.memory_space<vmem>>, vector<1x8x128xf32>
    %283 = vector.shape_cast %282 : vector<1x8x128xf32> to vector<8x128xf32>
    %284 = vector.shape_cast %281 : vector<8x128xf32> to vector<1x8x128xf32>
    tpu.vector_store %arg3[%c0_182, %c0_183, %c6016], %284 {strides = array<i32>} : memref<1x8x8192xf32, #tpu.memory_space<vmem>>, vector<1x8x128xf32>,
    %285 = vector.extract_strided_slice %236 {offsets = [0, 1536], sizes = [8, 128], strides = [1, 1]} : vector<8x2048xf32> to vector<8x128xf32>
    %c0_184 = arith.constant 0 : index
    %c0_185 = arith.constant 0 : index
    %c6528 = arith.constant 6528 : index
    %286 = vector.load %arg3[%c0_184, %c0_185, %c6528] : memref<1x8x8192xf32, #tpu.memory_space<vmem>>, vector<1x8x128xf32>
    %287 = vector.shape_cast %286 : vector<1x8x128xf32> to vector<8x128xf32>
    %288 = vector.shape_cast %285 : vector<8x128xf32> to vector<1x8x128xf32>
    tpu.vector_store %arg3[%c0_184, %c0_185, %c6528], %288 {strides = array<i32>} : memref<1x8x8192xf32, #tpu.memory_space<vmem>>, vector<1x8x128xf32>,
    %289 = vector.extract_strided_slice %236 {offsets = [0, 1664], sizes = [8, 128], strides = [1, 1]} : vector<8x2048xf32> to vector<8x128xf32>
    %c0_186 = arith.constant 0 : index
    %c0_187 = arith.constant 0 : index
    %c7040 = arith.constant 7040 : index
    %290 = vector.load %arg3[%c0_186, %c0_187, %c7040] : memref<1x8x8192xf32, #tpu.memory_space<vmem>>, vector<1x8x128xf32>
    %291 = vector.shape_cast %290 : vector<1x8x128xf32> to vector<8x128xf32>
    %292 = vector.shape_cast %289 : vector<8x128xf32> to vector<1x8x128xf32>
    tpu.vector_store %arg3[%c0_186, %c0_187, %c7040], %292 {strides = array<i32>} : memref<1x8x8192xf32, #tpu.memory_space<vmem>>, vector<1x8x128xf32>,
    %293 = vector.extract_strided_slice %236 {offsets = [0, 1792], sizes = [8, 128], strides = [1, 1]} : vector<8x2048xf32> to vector<8x128xf32>
    %c0_188 = arith.constant 0 : index
    %c0_189 = arith.constant 0 : index
    %c7552 = arith.constant 7552 : index
    %294 = vector.load %arg3[%c0_188, %c0_189, %c7552] : memref<1x8x8192xf32, #tpu.memory_space<vmem>>, vector<1x8x128xf32>
    %295 = vector.shape_cast %294 : vector<1x8x128xf32> to vector<8x128xf32>
    %296 = vector.shape_cast %293 : vector<8x128xf32> to vector<1x8x128xf32>
    tpu.vector_store %arg3[%c0_188, %c0_189, %c7552], %296 {strides = array<i32>} : memref<1x8x8192xf32, #tpu.memory_space<vmem>>, vector<1x8x128xf32>,
    %297 = vector.extract_strided_slice %236 {offsets = [0, 1920], sizes = [8, 128], strides = [1, 1]} : vector<8x2048xf32> to vector<8x128xf32>
    %c0_190 = arith.constant 0 : index
    %c0_191 = arith.constant 0 : index
    %c8064 = arith.constant 8064 : index
    %298 = vector.load %arg3[%c0_190, %c0_191, %c8064] : memref<1x8x8192xf32, #tpu.memory_space<vmem>>, vector<1x8x128xf32>
    %299 = vector.shape_cast %298 : vector<1x8x128xf32> to vector<8x128xf32>
    %300 = vector.shape_cast %297 : vector<8x128xf32> to vector<1x8x128xf32>
    tpu.vector_store %arg3[%c0_190, %c0_191, %c8064], %300 {strides = array<i32>} : memref<1x8x8192xf32, #tpu.memory_space<vmem>>, vector<1x8x128xf32>,
    return
  }
  func.func @transform_0(%arg0: i32) -> (i32, i32, i32) {
    %c0_i32 = arith.constant 0 : i32
    %c0_i32_0 = arith.constant 0 : i32
    %c0_i32_1 = arith.constant 0 : i32
    return %arg0, %c0_i32, %c0_i32_0 : i32, i32, i32
  }
  func.func @transform_1(%arg0: i32) -> (i32, i32, i32) {
    %c0_i32 = arith.constant 0 : i32
    %c0_i32_0 = arith.constant 0 : i32
    %c0_i32_1 = arith.constant 0 : i32
    %c0_i32_2 = arith.constant 0 : i32
    return %c0_i32, %c0_i32_0, %c0_i32_1 : i32, i32, i32
  }
  func.func @transform_2(%arg0: i32) -> (i32, i32, i32) {
    %c0_i32 = arith.constant 0 : i32
    %c0_i32_0 = arith.constant 0 : i32
    %c0_i32_1 = arith.constant 0 : i32
    return %arg0, %c0_i32, %c0_i32_0 : i32, i32, i32
  }
}

</mosaic_0001>

<llo_original>
// kernel: conv_transpose2d.1
$region0: #{conv_transpose2d.1}
  #allocation0 [shape = 'u32[]', space=smem, size = 0x4, offset = 0x4, fixed_abs, tag = 'smem constant byte address 0x4 - core index']
  #allocation1 [shape = 'u32[144,128]{1,0:T(1,128)}', space=vmem, size = 0x12000, scoped, tag = 'internal scratch']
  #allocation2 [shape = 'f32[17,2048]{1,0:T(8,128)}', space=vmem, size = 0x30000, scoped, tag = 'scratch operand']
  %s0 = inlined_call_operand.vmem [shape: f32[2,4,2304], index: 0, kind: input, shape index: {}]
  %s1 = inlined_call_operand.vmem [shape: f32[4,8,17], index: 1, kind: input, shape index: {}]
  %s2 = inlined_call_operand.vmem [shape: f32[2,8,8192], index: 2, kind: output, shape index: {}]
  %s3 = sld [smem:[#allocation0]]
  $region41: #{conv_transpose2d.1} parent=0
    _
  %s5 = ssub.s32 1, %s3
  %s6 = scalar_select 0, %s5, %s3
  loop: start=0, step=1, limit=4
  $region2: #{conv_transpose2d.1} parent=0 // loop_pre_header
    _
  $region3: #{conv_transpose2d.1} parent=0 // loop_header
    %s8 = sphi 0, %s12
    %p9 = scmp.ge.s32.totalorder %s8, 4
    %s18 = sphi 0, %s20
    %s21 = sphi 0, %s18
    %s22 = sphi 0, %s21
    %s38 = sphi 0, %s22
    %s42 = sphi 0, %s42
    %s44 = sphi 0, %s42
    %s45 = sphi 0, %s44
    %s59 = sphi 0, %s45
    %s65 = sphi 0, %s67
    %s68 = sphi 0, %s65
    %s69 = sphi 0, %s68
    %s85 = sphi 0, %s69
  $region4: #{conv_transpose2d.1} parent=0 // loop_header_branch
    %11 = sbr.rel (%p9) target = $region8
  $region5: #{conv_transpose2d.1} parent=0 // loop_body
    %s13 = ssub.s32 %s8, 1
    %s14 = ssub.s32 %s8, 2
    %s15 = sadd.s32 %s8, 1
    %s16 = ssub.s32 %s8, %s15
    %p17 = scmp.eq.s32.totalorder %s16, 0
    %s19 = sadd.s32 %s18, 1
    %s20 = scalar_select %p17, %s18, %s19
    %p23 = pneg %p17
    %p24 = scmp.eq.s32.totalorder %s8, 1
    %p25 = por %p23, %p24
    %p26 = scmp.ne.s32.totalorder %s18, %s21
    %p27 = scmp.eq.s32.totalorder %s8, 0
    %p28 = por %p26, %p27
    %p29 = scmp.ne.s32.totalorder %s18, %s21
    %p30 = scmp.eq.s32.totalorder %s13, 1
    %p31 = por %p29, %p30
    %p32 = scmp.ne.s32.totalorder %s21, %s22
    %p33 = scmp.eq.s32.totalorder %s13, 0
    %p34 = por %p32, %p33
    %p35 = scmp.ne.s32.totalorder %s21, %s22
    %p36 = scmp.eq.s32.totalorder %s14, 1
    %p37 = por %p35, %p36
    %p39 = scmp.ne.s32.totalorder %s22, %s38
    %p40 = scmp.eq.s32.totalorder %s14, 0
    %p41 = por %p39, %p40
    %s43 = sadd.s32 %s42, 1
    %p46 = scmp.eq.s32.totalorder %s8, 1
    %p47 = scmp.ne.s32.totalorder %s42, %s44
    %p48 = scmp.eq.s32.totalorder %s8, 0
    %p49 = por %p47, %p48
    %p50 = scmp.ne.s32.totalorder %s42, %s44
    %p51 = scmp.eq.s32.totalorder %s13, 1
    %p52 = por %p50, %p51
    %p53 = scmp.ne.s32.totalorder %s44, %s45
    %p54 = scmp.eq.s32.totalorder %s13, 0
    %p55 = por %p53, %p54
    %p56 = scmp.ne.s32.totalorder %s44, %s45
    %p57 = scmp.eq.s32.totalorder %s14, 1
    %p58 = por %p56, %p57
    %p60 = scmp.ne.s32.totalorder %s45, %s59
    %p61 = scmp.eq.s32.totalorder %s14, 0
    %p62 = por %p60, %p61
    %s63 = ssub.s32 %s8, %s15
    %p64 = scmp.eq.s32.totalorder %s63, 0
    %s66 = sadd.s32 %s65, 1
    %s67 = scalar_select %p64, %s65, %s66
    %p70 = pneg %p64
    %p71 = scmp.eq.s32.totalorder %s8, 1
    %p72 = por %p70, %p71
    %p73 = scmp.ne.s32.totalorder %s65, %s68
    %p74 = scmp.eq.s32.totalorder %s8, 0
    %p75 = por %p73, %p74
    %p76 = scmp.ne.s32.totalorder %s65, %s68
    %p77 = scmp.eq.s32.totalorder %s13, 1
    %p78 = por %p76, %p77
    %p79 = scmp.ne.s32.totalorder %s68, %s69
    %p80 = scmp.eq.s32.totalorder %s13, 0
    %p81 = por %p79, %p80
    %p82 = scmp.ne.s32.totalorder %s68, %s69
    %p83 = scmp.eq.s32.totalorder %s14, 1
    %p84 = por %p82, %p83
    %p86 = scmp.ne.s32.totalorder %s69, %s85
    %p87 = scmp.eq.s32.totalorder %s14, 0
    %p88 = por %p86, %p87
    %p89 = scmp.le.s32.totalorder 1, %s8
    %p90 = scmp.lt.s32.totalorder %s8, 3
    %p91 = pnand %p89, %p90
    %p92 = pneg %p91
    // Predicated region
    $region9: #{conv_transpose2d.1} parent=5 // pred_check
      _
    $region10: #{conv_transpose2d.1} parent=5 // pred_check_branch
      %94 = sbr.rel (%p91) target = $region12
    $region11: #{conv_transpose2d.1} parent=5 // pred_region
      %s95 = ssub.s32 %s8, 1
      // Predicated region
      $region13: #{conv_transpose2d.1} parent=11 // pred_check
        %p96 = pneg %p55
      $region14: #{conv_transpose2d.1} parent=11 // pred_check_branch
        %98 = sbr.rel (%p96) target = $region16
      $region15: #{conv_transpose2d.1} parent=11 // pred_region
        _
      $region16: #{conv_transpose2d.1} parent=11 // pred_fallthru
        _
    $region12: #{conv_transpose2d.1} parent=5 // pred_fallthru
      _
    %p99 = scmp.lt.s32.totalorder %s8, 2
    // Predicated region
    $region17: #{conv_transpose2d.1} parent=5 // pred_check
      %p100 = pneg %p99
    $region18: #{conv_transpose2d.1} parent=5 // pred_check_branch
      %102 = sbr.rel (%p100) target = $region20
    $region19: #{conv_transpose2d.1} parent=5 // pred_region
      // Predicated region
      $region21: #{conv_transpose2d.1} parent=19 // pred_check
        %p103 = pneg %p28
      $region22: #{conv_transpose2d.1} parent=19 // pred_check_branch
        %105 = sbr.rel (%p103) target = $region24
      $region23: #{conv_transpose2d.1} parent=19 // pred_region
        %p106 = scmp.lt.s32.totalorder %s8, 1
        %s107 = scalar_select %p106, %s8, 1
        %s108 = smul.addr %s107, 18
        %s109 = smul.addr %s108, 4
        %s110 = scalar_lea.vmem %s0, %s109
      $region24: #{conv_transpose2d.1} parent=19 // pred_fallthru
        _
    $region20: #{conv_transpose2d.1} parent=5 // pred_fallthru
      _
    %p111 = scmp.le.s32.totalorder 1, %s8
    %p112 = scmp.lt.s32.totalorder %s8, 3
    %p113 = pnand %p111, %p112
    %p114 = pneg %p113
    // Predicated region
    $region25: #{conv_transpose2d.1} parent=5 // pred_check
      _
    $region26: #{conv_transpose2d.1} parent=5 // pred_check_branch
      %116 = sbr.rel (%p113) target = $region28
    $region27: #{conv_transpose2d.1} parent=5 // pred_region
      %s117 = ssub.s32 %s8, 1
      %p118 = scmp.lt.s32.totalorder %s13, 1
      %s119 = scalar_select %p118, %s13, 1
      %s120 = smul.addr %s119, 18
      %s121 = smul.addr %s120, 4
      %s122 = scalar_lea.vmem %s0, %s121
      %p123 = pneg %p34
      %p124 = pneg %p31
      %p125 = pneg %p55
      %p126 = pneg %p52
      %p127 = pneg %p81
      %p128 = pneg %p78
      %p129 = scmp.lt.s32.totalorder %s13, 1
      %s130 = scalar_select %p129, %s13, 1
      %s131 = smul.addr %s130, 64
      %s132 = smul.addr %s131, 8
      %s133 = scalar_lea.vmem %s2, %s132
      %p134 = scmp.lt.s32.totalorder %s13, 1
      %s135 = scalar_select %p134, %s13, 1
      %s136 = smul.addr %s135, 18
      %s137 = smul.addr %s136, 4
      %s138 = scalar_lea.vmem %s0, %s137
      %p139 = scmp.lt.s32.totalorder %s13, 1
      %s140 = scalar_select %p139, %s13, 1
      %s141 = smul.addr %s140, 64
      %s142 = smul.addr %s141, 8
      %s143 = scalar_lea.vmem %s2, %s142
      %144 = vst [vmem:[#allocation2] ss:$8 sm:$0xf] 1.0
      %145 = vst [vmem:[#allocation2] ss:$8 sm:$0xf0] 1.0
      %s146 = scalar_lea.vmem [#allocation2], 64
      %147 = vst [vmem:[%s146] ss:$8 sm:$0xf] 1.0
      %148 = vst [vmem:[%s146] ss:$8 sm:$0xf0] 1.0
      %v149 = vld [vmem:[%s138] sm:$0xff]
      %v150 = vld [vmem:[%s138 + $0x8] sm:$0xff]
      %v151 = vld [vmem:[%s138 + $0x10] sm:$0xff]
      %v152 = vld [vmem:[%s138 + $0x18] sm:$0xff]
      %v153 = vld [vmem:[%s138 + $0x20] sm:$0xff]
      %v154 = vld [vmem:[%s138 + $0x28] sm:$0xff]
      %v155 = vld [vmem:[%s138 + $0x30] sm:$0xff]
      %v156 = vld [vmem:[%s138 + $0x38] sm:$0xff]
      %v165 = vcombine.high %v149, %v149
      %v166 = vcombine.high %v150, %v150
      %v167 = vcombine.high %v151, %v151
      %v168 = vcombine.high %v152, %v152
      %v169 = vcombine.high %v153, %v153
      %v170 = vcombine.high %v154, %v154
      %v171 = vcombine.high %v155, %v155
      %v172 = vcombine.high %v156, %v156
      %v173 = vrot.slane %v149, 7
      %v174 = vrot.slane %v165, 7
      %v175 = vrot.slane %v150, 7
      %v176 = vrot.slane %v166, 7
      %v177 = vrot.slane %v151, 7
      %v178 = vrot.slane %v167, 7
      %v179 = vrot.slane %v152, 7
      %v180 = vrot.slane %v168, 7
      %v181 = vrot.slane %v153, 7
      %v182 = vrot.slane %v169, 7
      %v183 = vrot.slane %v154, 7
      %v184 = vrot.slane %v170, 7
      %v185 = vrot.slane %v155, 7
      %v186 = vrot.slane %v171, 7
      %v187 = vrot.slane %v156, 7
      %v188 = vrot.slane %v172, 7
      %205 = vst [vmem:[#allocation2] sm:$0x1e] %v173
      %206 = vst [vmem:[#allocation2 + $0x8] sm:$0x1e] %v174
      %207 = vst [vmem:[#allocation2 + $0x10] sm:$0x1e] %v175
      %208 = vst [vmem:[#allocation2 + $0x18] sm:$0x1e] %v176
      %209 = vst [vmem:[#allocation2 + $0x20] sm:$0x1e] %v177
      %210 = vst [vmem:[#allocation2 + $0x28] sm:$0x1e] %v178
      %211 = vst [vmem:[#allocation2 + $0x30] sm:$0x1e] %v179
      %212 = vst [vmem:[#allocation2 + $0x38] sm:$0x1e] %v180
      %213 = vst [vmem:[#allocation2 + $0x40] sm:$0x1e] %v181
      %214 = vst [vmem:[#allocation2 + $0x48] sm:$0x1e] %v182
      %215 = vst [vmem:[#allocation2 + $0x50] sm:$0x1e] %v183
      %216 = vst [vmem:[#allocation2 + $0x58] sm:$0x1e] %v184
      %217 = vst [vmem:[#allocation2 + $0x60] sm:$0x1e] %v185
      %218 = vst [vmem:[#allocation2 + $0x68] sm:$0x1e] %v186
      %219 = vst [vmem:[#allocation2 + $0x70] sm:$0x1e] %v187
      %220 = vst [vmem:[#allocation2 + $0x78] sm:$0x1e] %v188
      %v221 = vld [vmem:[%s1] sm:$0xff]
      %v222 = vld [vmem:[#allocation2] sm:$0x1f]
      %v223 = vld [vmem:[#allocation2 + $0x8] sm:$0x1f]
      %v224 = vld [vmem:[#allocation2 + $0x10] sm:$0x1f]
      %v225 = vld [vmem:[#allocation2 + $0x18] sm:$0x1f]
      %v226 = vld [vmem:[#allocation2 + $0x20] sm:$0x1f]
      %v227 = vld [vmem:[#allocation2 + $0x28] sm:$0x1f]
      %v228 = vld [vmem:[#allocation2 + $0x30] sm:$0x1f]
      %v229 = vld [vmem:[#allocation2 + $0x38] sm:$0x1f]
      %v230 = vld [vmem:[#allocation2 + $0x40] sm:$0x1f]
      %v231 = vld [vmem:[#allocation2 + $0x48] sm:$0x1f]
      %v232 = vld [vmem:[#allocation2 + $0x50] sm:$0x1f]
      %v233 = vld [vmem:[#allocation2 + $0x58] sm:$0x1f]
      %v234 = vld [vmem:[#allocation2 + $0x60] sm:$0x1f]
      %v235 = vld [vmem:[#allocation2 + $0x68] sm:$0x1f]
      %v236 = vld [vmem:[#allocation2 + $0x70] sm:$0x1f]
      %v237 = vld [vmem:[#allocation2 + $0x78] sm:$0x1f]
      %vm238 = vcmask 39936
      %v240 = vsel %vm238, %v221, 0
      %vm242 = vcmask 1044480
      %v244 = vsel %vm242, %v222, 0
      %v247 = vsel %vm242, %v223, 0
      %v250 = vsel %vm242, %v224, 0
      %v253 = vsel %vm242, %v225, 0
      %v256 = vsel %vm242, %v226, 0
      %v259 = vsel %vm242, %v227, 0
      %v262 = vsel %vm242, %v228, 0
      %v265 = vsel %vm242, %v229, 0
      %v268 = vsel %vm242, %v230, 0
      %v271 = vsel %vm242, %v231, 0
      %v274 = vsel %vm242, %v232, 0
      %v277 = vsel %vm242, %v233, 0
      %v280 = vsel %vm242, %v234, 0
      %v283 = vsel %vm242, %v235, 0
      %v286 = vsel %vm242, %v236, 0
      %v289 = vsel %vm242, %v237, 0
      %291 = vmatprep.subr.mxu0 %v247
      %292 = vmatpush1.msra.mxu0 %v244
      %293 = vmatprep.subr.mxu0 0.0
      %294 = vmatpush1.msra.mxu0 0.0
      %295 = vmatprep.subr.mxu0 0.0
      %296 = vmatpush1.msra.mxu0 0.0
      %297 = vmatprep.subr.mxu0 0.0
      %298 = vmatpush1.msra.mxu0 0.0
      %299 = vmatprep.subr.mxu0 0.0
      %300 = vmatpush1.msra.mxu0 0.0
      %301 = vmatprep.subr.mxu0 0.0
      %302 = vmatpush1.msra.mxu0 0.0
      %303 = vmatprep.subr.mxu0 0.0
      %304 = vmatpush1.msra.mxu0 0.0
      %305 = vmatprep.subr.mxu0 0.0
      %306 = vmatpush1.msra.mxu0 0.0
      %307 = vmatprep.subr.mxu0 0.0
      %308 = vmatpush1.msra.mxu0 0.0
      %309 = vmatprep.subr.mxu0 0.0
      %310 = vmatpush1.msra.mxu0 0.0
      %311 = vmatprep.subr.mxu0 0.0
      %312 = vmatpush1.msra.mxu0 0.0
      %313 = vmatprep.subr.mxu0 0.0
      %314 = vmatpush1.msra.mxu0 0.0
      %315 = vmatprep.subr.mxu0 0.0
      %316 = vmatpush1.msra.mxu0 0.0
      %317 = vmatprep.subr.mxu0 0.0
      %318 = vmatpush1.msra.mxu0 0.0
      %319 = vmatprep.subr.mxu0 0.0
      %320 = vmatpush1.msra.mxu0 0.0
      %321 = vmatprep.subr.mxu0 0.0
      %322 = vmatpush1.msra.mxu0 0.0
      %323 = vmatprep.subr.mxu0 0.0
      %324 = vmatpush1.msra.mxu0 0.0
      %325 = vmatprep.subr.mxu0 0.0
      %326 = vmatpush1.msra.mxu0 0.0
      %327 = vmatprep.subr.mxu0 0.0
      %328 = vmatpush1.msra.mxu0 0.0
      %329 = vmatprep.subr.mxu0 0.0
      %330 = vmatpush1.msra.mxu0 0.0
      %331 = vmatprep.subr.mxu0 0.0
      %332 = vmatpush1.msra.mxu0 0.0
      %333 = vmatprep.subr.mxu0 0.0
      %334 = vmatpush1.msra.mxu0 0.0
      %335 = vmatprep.subr.mxu0 0.0
      %336 = vmatpush1.msra.mxu0 0.0
      %337 = vmatprep.subr.mxu0 0.0
      %338 = vmatpush1.msra.mxu0 0.0
      %339 = vmatprep.subr.mxu0 0.0
      %340 = vmatpush1.msra.mxu0 0.0
      %341 = vmatprep.subr.mxu0 0.0
      %342 = vmatpush1.msra.mxu0 0.0
      %343 = vmatprep.subr.mxu0 0.0
      %344 = vmatpush1.msra.mxu0 0.0
      %345 = vmatprep.subr.mxu0 0.0
      %346 = vmatpush1.msra.mxu0 0.0
      %347 = vmatprep.subr.mxu0 0.0
      %348 = vmatpush1.msra.mxu0 0.0
      %349 = vmatprep.subr.mxu0 0.0
      %350 = vmatpush1.msra.mxu0 0.0
      %351 = vmatprep.subr.mxu0 0.0
      %352 = vmatpush1.msra.mxu0 0.0
      %353 = vmatprep.subr.mxu0 0.0
      %354 = vmatpush1.msra.mxu0 0.0
      %355 = vmatprep.mubr.f32.mxu0 0.0
      %356 = vmatmul.mubr.f32.gmra.mrb[0].mxu0 %v240
      %v357 = vpop.f32.mrb[0].mxu0
      %v358 = vadd.f32 0.0, %v357
      %v359 = vpop.f32.mrb[0].mxu0
      %v360 = vadd.f32 0.0, %v359
      %361 = vdwg.mxu0
      %362 = vmatprep.subr.mxu0 %v253
      %363 = vmatpush1.msra.mxu0 %v250
      %364 = vmatprep.subr.mxu0 0.0
      %365 = vmatpush1.msra.mxu0 0.0
      %366 = vmatprep.subr.mxu0 0.0
      %367 = vmatpush1.msra.mxu0 0.0
      %368 = vmatprep.subr.mxu0 0.0
      %369 = vmatpush1.msra.mxu0 0.0
      %370 = vmatprep.subr.mxu0 0.0
      %371 = vmatpush1.msra.mxu0 0.0
      %372 = vmatprep.subr.mxu0 0.0
      %373 = vmatpush1.msra.mxu0 0.0
      %374 = vmatprep.subr.mxu0 0.0
      %375 = vmatpush1.msra.mxu0 0.0
      %376 = vmatprep.subr.mxu0 0.0
      %377 = vmatpush1.msra.mxu0 0.0
      %378 = vmatprep.subr.mxu0 0.0
      %379 = vmatpush1.msra.mxu0 0.0
      %380 = vmatprep.subr.mxu0 0.0
      %381 = vmatpush1.msra.mxu0 0.0
      %382 = vmatprep.subr.mxu0 0.0
      %383 = vmatpush1.msra.mxu0 0.0
      %384 = vmatprep.subr.mxu0 0.0
      %385 = vmatpush1.msra.mxu0 0.0
      %386 = vmatprep.subr.mxu0 0.0
      %387 = vmatpush1.msra.mxu0 0.0
      %388 = vmatprep.subr.mxu0 0.0
      %389 = vmatpush1.msra.mxu0 0.0
      %390 = vmatprep.subr.mxu0 0.0
      %391 = vmatpush1.msra.mxu0 0.0
      %392 = vmatprep.subr.mxu0 0.0
      %393 = vmatpush1.msra.mxu0 0.0
      %394 = vmatprep.subr.mxu0 0.0
      %395 = vmatpush1.msra.mxu0 0.0
      %396 = vmatprep.subr.mxu0 0.0
      %397 = vmatpush1.msra.mxu0 0.0
      %398 = vmatprep.subr.mxu0 0.0
      %399 = vmatpush1.msra.mxu0 0.0
      %400 = vmatprep.subr.mxu0 0.0
      %401 = vmatpush1.msra.mxu0 0.0
      %402 = vmatprep.subr.mxu0 0.0
      %403 = vmatpush1.msra.mxu0 0.0
      %404 = vmatprep.subr.mxu0 0.0
      %405 = vmatpush1.msra.mxu0 0.0
      %406 = vmatprep.subr.mxu0 0.0
      %407 = vmatpush1.msra.mxu0 0.0
      %408 = vmatprep.subr.mxu0 0.0
      %409 = vmatpush1.msra.mxu0 0.0
      %410 = vmatprep.subr.mxu0 0.0
      %411 = vmatpush1.msra.mxu0 0.0
      %412 = vmatprep.subr.mxu0 0.0
      %413 = vmatpush1.msra.mxu0 0.0
      %414 = vmatprep.subr.mxu0 0.0
      %415 = vmatpush1.msra.mxu0 0.0
      %416 = vmatprep.subr.mxu0 0.0
      %417 = vmatpush1.msra.mxu0 0.0
      %418 = vmatprep.subr.mxu0 0.0
      %419 = vmatpush1.msra.mxu0 0.0
      %420 = vmatprep.subr.mxu0 0.0
      %421 = vmatpush1.msra.mxu0 0.0
      %422 = vmatprep.subr.mxu0 0.0
      %423 = vmatpush1.msra.mxu0 0.0
      %424 = vmatprep.subr.mxu0 0.0
      %425 = vmatpush1.msra.mxu0 0.0
      %426 = vmatprep.mubr.f32.mxu0 0.0
      %427 = vmatmul.mubr.f32.gmra.mrb[0].mxu0 %v240
      %v428 = vpop.f32.mrb[0].mxu0
      %v429 = vadd.f32 0.0, %v428
      %v430 = vpop.f32.mrb[0].mxu0
      %v431 = vadd.f32 0.0, %v430
      %432 = vdwg.mxu0
      %433 = vmatprep.subr.mxu0 %v259
      %434 = vmatpush1.msra.mxu0 %v256
      %435 = vmatprep.subr.mxu0 0.0
      %436 = vmatpush1.msra.mxu0 0.0
      %437 = vmatprep.subr.mxu0 0.0
      %438 = vmatpush1.msra.mxu0 0.0
      %439 = vmatprep.subr.mxu0 0.0
      %440 = vmatpush1.msra.mxu0 0.0
      %441 = vmatprep.subr.mxu0 0.0
      %442 = vmatpush1.msra.mxu0 0.0
      %443 = vmatprep.subr.mxu0 0.0
      %444 = vmatpush1.msra.mxu0 0.0
      %445 = vmatprep.subr.mxu0 0.0
      %446 = vmatpush1.msra.mxu0 0.0
      %447 = vmatprep.subr.mxu0 0.0
      %448 = vmatpush1.msra.mxu0 0.0
      %449 = vmatprep.subr.mxu0 0.0
      %450 = vmatpush1.msra.mxu0 0.0
      %451 = vmatprep.subr.mxu0 0.0
      %452 = vmatpush1.msra.mxu0 0.0
      %453 = vmatprep.subr.mxu0 0.0
      %454 = vmatpush1.msra.mxu0 0.0
      %455 = vmatprep.subr.mxu0 0.0
      %456 = vmatpush1.msra.mxu0 0.0
      %457 = vmatprep.subr.mxu0 0.0
      %458 = vmatpush1.msra.mxu0 0.0
      %459 = vmatprep.subr.mxu0 0.0
      %460 = vmatpush1.msra.mxu0 0.0
      %461 = vmatprep.subr.mxu0 0.0
      %462 = vmatpush1.msra.mxu0 0.0
      %463 = vmatprep.subr.mxu0 0.0
      %464 = vmatpush1.msra.mxu0 0.0
      %465 = vmatprep.subr.mxu0 0.0
      %466 = vmatpush1.msra.mxu0 0.0
      %467 = vmatprep.subr.mxu0 0.0
      %468 = vmatpush1.msra.mxu0 0.0
      %469 = vmatprep.subr.mxu0 0.0
      %470 = vmatpush1.msra.mxu0 0.0
      %471 = vmatprep.subr.mxu0 0.0
      %472 = vmatpush1.msra.mxu0 0.0
      %473 = vmatprep.subr.mxu0 0.0
      %474 = vmatpush1.msra.mxu0 0.0
      %475 = vmatprep.subr.mxu0 0.0
      %476 = vmatpush1.msra.mxu0 0.0
      %477 = vmatprep.subr.mxu0 0.0
      %478 = vmatpush1.msra.mxu0 0.0
      %479 = vmatprep.subr.mxu0 0.0
      %480 = vmatpush1.msra.mxu0 0.0
      %481 = vmatprep.subr.mxu0 0.0
      %482 = vmatpush1.msra.mxu0 0.0
      %483 = vmatprep.subr.mxu0 0.0
      %484 = vmatpush1.msra.mxu0 0.0
      %485 = vmatprep.subr.mxu0 0.0
      %486 = vmatpush1.msra.mxu0 0.0
      %487 = vmatprep.subr.mxu0 0.0
      %488 = vmatpush1.msra.mxu0 0.0
      %489 = vmatprep.subr.mxu0 0.0
      %490 = vmatpush1.msra.mxu0 0.0
      %491 = vmatprep.subr.mxu0 0.0
      %492 = vmatpush1.msra.mxu0 0.0
      %493 = vmatprep.subr.mxu0 0.0
      %494 = vmatpush1.msra.mxu0 0.0
      %495 = vmatprep.subr.mxu0 0.0
      %496 = vmatpush1.msra.mxu0 0.0
      %497 = vmatprep.mubr.f32.mxu0 0.0
      %498 = vmatmul.mubr.f32.gmra.mrb[0].mxu0 %v240
      %v499 = vpop.f32.mrb[0].mxu0
      %v500 = vadd.f32 0.0, %v499
      %v501 = vpop.f32.mrb[0].mxu0
      %v502 = vadd.f32 0.0, %v501
      %503 = vdwg.mxu0
      %504 = vmatprep.subr.mxu0 %v265
      %505 = vmatpush1.msra.mxu0 %v262
      %506 = vmatprep.subr.mxu0 0.0
      %507 = vmatpush1.msra.mxu0 0.0
      %508 = vmatprep.subr.mxu0 0.0
      %509 = vmatpush1.msra.mxu0 0.0
      %510 = vmatprep.subr.mxu0 0.0
      %511 = vmatpush1.msra.mxu0 0.0
      %512 = vmatprep.subr.mxu0 0.0
      %513 = vmatpush1.msra.mxu0 0.0
      %514 = vmatprep.subr.mxu0 0.0
      %515 = vmatpush1.msra.mxu0 0.0
      %516 = vmatprep.subr.mxu0 0.0
      %517 = vmatpush1.msra.mxu0 0.0
      %518 = vmatprep.subr.mxu0 0.0
      %519 = vmatpush1.msra.mxu0 0.0
      %520 = vmatprep.subr.mxu0 0.0
      %521 = vmatpush1.msra.mxu0 0.0
      %522 = vmatprep.subr.mxu0 0.0
      %523 = vmatpush1.msra.mxu0 0.0
      %524 = vmatprep.subr.mxu0 0.0
      %525 = vmatpush1.msra.mxu0 0.0
      %526 = vmatprep.subr.mxu0 0.0
      %527 = vmatpush1.msra.mxu0 0.0
      %528 = vmatprep.subr.mxu0 0.0
      %529 = vmatpush1.msra.mxu0 0.0
      %530 = vmatprep.subr.mxu0 0.0
      %531 = vmatpush1.msra.mxu0 0.0
      %532 = vmatprep.subr.mxu0 0.0
      %533 = vmatpush1.msra.mxu0 0.0
      %534 = vmatprep.subr.mxu0 0.0
      %535 = vmatpush1.msra.mxu0 0.0
      %536 = vmatprep.subr.mxu0 0.0
      %537 = vmatpush1.msra.mxu0 0.0
      %538 = vmatprep.subr.mxu0 0.0
      %539 = vmatpush1.msra.mxu0 0.0
      %540 = vmatprep.subr.mxu0 0.0
      %541 = vmatpush1.msra.mxu0 0.0
      %542 = vmatprep.subr.mxu0 0.0
      %543 = vmatpush1.msra.mxu0 0.0
      %544 = vmatprep.subr.mxu0 0.0
      %545 = vmatpush1.msra.mxu0 0.0
      %546 = vmatprep.subr.mxu0 0.0
      %547 = vmatpush1.msra.mxu0 0.0
      %548 = vmatprep.subr.mxu0 0.0
      %549 = vmatpush1.msra.mxu0 0.0
      %550 = vmatprep.subr.mxu0 0.0
      %551 = vmatpush1.msra.mxu0 0.0
      %552 = vmatprep.subr.mxu0 0.0
      %553 = vmatpush1.msra.mxu0 0.0
      %554 = vmatprep.subr.mxu0 0.0
      %555 = vmatpush1.msra.mxu0 0.0
      %556 = vmatprep.subr.mxu0 0.0
      %557 = vmatpush1.msra.mxu0 0.0
      %558 = vmatprep.subr.mxu0 0.0
      %559 = vmatpush1.msra.mxu0 0.0
      %560 = vmatprep.subr.mxu0 0.0
      %561 = vmatpush1.msra.mxu0 0.0
      %562 = vmatprep.subr.mxu0 0.0
      %563 = vmatpush1.msra.mxu0 0.0
      %564 = vmatprep.subr.mxu0 0.0
      %565 = vmatpush1.msra.mxu0 0.0
      %566 = vmatprep.subr.mxu0 0.0
      %567 = vmatpush1.msra.mxu0 0.0
      %568 = vmatprep.mubr.f32.mxu0 0.0
      %569 = vmatmul.mubr.f32.gmra.mrb[0].mxu0 %v240
      %v570 = vpop.f32.mrb[0].mxu0
      %v571 = vadd.f32 0.0, %v570
      %v572 = vpop.f32.mrb[0].mxu0
      %v573 = vadd.f32 0.0, %v572
      %574 = vdwg.mxu0
      %575 = vmatprep.subr.mxu0 %v271
      %576 = vmatpush1.msra.mxu0 %v268
      %577 = vmatprep.subr.mxu0 0.0
      %578 = vmatpush1.msra.mxu0 0.0
      %579 = vmatprep.subr.mxu0 0.0
      %580 = vmatpush1.msra.mxu0 0.0
      %581 = vmatprep.subr.mxu0 0.0
      %582 = vmatpush1.msra.mxu0 0.0
      %583 = vmatprep.subr.mxu0 0.0
      %584 = vmatpush1.msra.mxu0 0.0
      %585 = vmatprep.subr.mxu0 0.0
      %586 = vmatpush1.msra.mxu0 0.0
      %587 = vmatprep.subr.mxu0 0.0
      %588 = vmatpush1.msra.mxu0 0.0
      %589 = vmatprep.subr.mxu0 0.0
      %590 = vmatpush1.msra.mxu0 0.0
      %591 = vmatprep.subr.mxu0 0.0
      %592 = vmatpush1.msra.mxu0 0.0
      %593 = vmatprep.subr.mxu0 0.0
      %594 = vmatpush1.msra.mxu0 0.0
      %595 = vmatprep.subr.mxu0 0.0
      %596 = vmatpush1.msra.mxu0 0.0
      %597 = vmatprep.subr.mxu0 0.0
      %598 = vmatpush1.msra.mxu0 0.0
      %599 = vmatprep.subr.mxu0 0.0
      %600 = vmatpush1.msra.mxu0 0.0
      %601 = vmatprep.subr.mxu0 0.0
      %602 = vmatpush1.msra.mxu0 0.0
      %603 = vmatprep.subr.mxu0 0.0
      %604 = vmatpush1.msra.mxu0 0.0
      %605 = vmatprep.subr.mxu0 0.0
      %606 = vmatpush1.msra.mxu0 0.0
      %607 = vmatprep.subr.mxu0 0.0
      %608 = vmatpush1.msra.mxu0 0.0
      %609 = vmatprep.subr.mxu0 0.0
      %610 = vmatpush1.msra.mxu0 0.0
      %611 = vmatprep.subr.mxu0 0.0
      %612 = vmatpush1.msra.mxu0 0.0
      %613 = vmatprep.subr.mxu0 0.0
      %614 = vmatpush1.msra.mxu0 0.0
      %615 = vmatprep.subr.mxu0 0.0
      %616 = vmatpush1.msra.mxu0 0.0
      %617 = vmatprep.subr.mxu0 0.0
      %618 = vmatpush1.msra.mxu0 0.0
      %619 = vmatprep.subr.mxu0 0.0
      %620 = vmatpush1.msra.mxu0 0.0
      %621 = vmatprep.subr.mxu0 0.0
      %622 = vmatpush1.msra.mxu0 0.0
      %623 = vmatprep.subr.mxu0 0.0
      %624 = vmatpush1.msra.mxu0 0.0
      %625 = vmatprep.subr.mxu0 0.0
      %626 = vmatpush1.msra.mxu0 0.0
      %627 = vmatprep.subr.mxu0 0.0
      %628 = vmatpush1.msra.mxu0 0.0
      %629 = vmatprep.subr.mxu0 0.0
      %630 = vmatpush1.msra.mxu0 0.0
      %631 = vmatprep.subr.mxu0 0.0
      %632 = vmatpush1.msra.mxu0 0.0
      %633 = vmatprep.subr.mxu0 0.0
      %634 = vmatpush1.msra.mxu0 0.0
      %635 = vmatprep.subr.mxu0 0.0
      %636 = vmatpush1.msra.mxu0 0.0
      %637 = vmatprep.subr.mxu0 0.0
      %638 = vmatpush1.msra.mxu0 0.0
      %639 = vmatprep.mubr.f32.mxu0 0.0
      %640 = vmatmul.mubr.f32.gmra.mrb[0].mxu0 %v240
      %v641 = vpop.f32.mrb[0].mxu0
      %v642 = vadd.f32 0.0, %v641
      %v643 = vpop.f32.mrb[0].mxu0
      %v644 = vadd.f32 0.0, %v643
      %645 = vdwg.mxu0
      %646 = vmatprep.subr.mxu0 %v277
      %647 = vmatpush1.msra.mxu0 %v274
      %648 = vmatprep.subr.mxu0 0.0
      %649 = vmatpush1.msra.mxu0 0.0
      %650 = vmatprep.subr.mxu0 0.0
      %651 = vmatpush1.msra.mxu0 0.0
      %652 = vmatprep.subr.mxu0 0.0
      %653 = vmatpush1.msra.mxu0 0.0
      %654 = vmatprep.subr.mxu0 0.0
      %655 = vmatpush1.msra.mxu0 0.0
      %656 = vmatprep.subr.mxu0 0.0
      %657 = vmatpush1.msra.mxu0 0.0
      %658 = vmatprep.subr.mxu0 0.0
      %659 = vmatpush1.msra.mxu0 0.0
      %660 = vmatprep.subr.mxu0 0.0
      %661 = vmatpush1.msra.mxu0 0.0
      %662 = vmatprep.subr.mxu0 0.0
      %663 = vmatpush1.msra.mxu0 0.0
      %664 = vmatprep.subr.mxu0 0.0
      %665 = vmatpush1.msra.mxu0 0.0
      %666 = vmatprep.subr.mxu0 0.0
      %667 = vmatpush1.msra.mxu0 0.0
      %668 = vmatprep.subr.mxu0 0.0
      %669 = vmatpush1.msra.mxu0 0.0
      %670 = vmatprep.subr.mxu0 0.0
      %671 = vmatpush1.msra.mxu0 0.0
      %672 = vmatprep.subr.mxu0 0.0
      %673 = vmatpush1.msra.mxu0 0.0
      %674 = vmatprep.subr.mxu0 0.0
      %675 = vmatpush1.msra.mxu0 0.0
      %676 = vmatprep.subr.mxu0 0.0
      %677 = vmatpush1.msra.mxu0 0.0
      %678 = vmatprep.subr.mxu0 0.0
      %679 = vmatpush1.msra.mxu0 0.0
      %680 = vmatprep.subr.mxu0 0.0
      %681 = vmatpush1.msra.mxu0 0.0
      %682 = vmatprep.subr.mxu0 0.0
      %683 = vmatpush1.msra.mxu0 0.0
      %684 = vmatprep.subr.mxu0 0.0
      %685 = vmatpush1.msra.mxu0 0.0
      %686 = vmatprep.subr.mxu0 0.0
      %687 = vmatpush1.msra.mxu0 0.0
      %688 = vmatprep.subr.mxu0 0.0
      %689 = vmatpush1.msra.mxu0 0.0
      %690 = vmatprep.subr.mxu0 0.0
      %691 = vmatpush1.msra.mxu0 0.0
      %692 = vmatprep.subr.mxu0 0.0
      %693 = vmatpush1.msra.mxu0 0.0
      %694 = vmatprep.subr.mxu0 0.0
      %695 = vmatpush1.msra.mxu0 0.0
      %696 = vmatprep.subr.mxu0 0.0
      %697 = vmatpush1.msra.mxu0 0.0
      %698 = vmatprep.subr.mxu0 0.0
      %699 = vmatpush1.msra.mxu0 0.0
      %700 = vmatprep.subr.mxu0 0.0
      %701 = vmatpush1.msra.mxu0 0.0
      %702 = vmatprep.subr.mxu0 0.0
      %703 = vmatpush1.msra.mxu0 0.0
      %704 = vmatprep.subr.mxu0 0.0
      %705 = vmatpush1.msra.mxu0 0.0
      %706 = vmatprep.subr.mxu0 0.0
      %707 = vmatpush1.msra.mxu0 0.0
      %708 = vmatprep.subr.mxu0 0.0
      %709 = vmatpush1.msra.mxu0 0.0
      %710 = vmatprep.mubr.f32.mxu0 0.0
      %711 = vmatmul.mubr.f32.gmra.mrb[0].mxu0 %v240
      %v712 = vpop.f32.mrb[0].mxu0
      %v713 = vadd.f32 0.0, %v712
      %v714 = vpop.f32.mrb[0].mxu0
      %v715 = vadd.f32 0.0, %v714
      %716 = vdwg.mxu0
      %717 = vmatprep.subr.mxu0 %v283
      %718 = vmatpush1.msra.mxu0 %v280
      %719 = vmatprep.subr.mxu0 0.0
      %720 = vmatpush1.msra.mxu0 0.0
      %721 = vmatprep.subr.mxu0 0.0
      %722 = vmatpush1.msra.mxu0 0.0
      %723 = vmatprep.subr.mxu0 0.0
      %724 = vmatpush1.msra.mxu0 0.0
      %725 = vmatprep.subr.mxu0 0.0
      %726 = vmatpush1.msra.mxu0 0.0
      %727 = vmatprep.subr.mxu0 0.0
      %728 = vmatpush1.msra.mxu0 0.0
      %729 = vmatprep.subr.mxu0 0.0
      %730 = vmatpush1.msra.mxu0 0.0
      %731 = vmatprep.subr.mxu0 0.0
      %732 = vmatpush1.msra.mxu0 0.0
      %733 = vmatprep.subr.mxu0 0.0
      %734 = vmatpush1.msra.mxu0 0.0
      %735 = vmatprep.subr.mxu0 0.0
      %736 = vmatpush1.msra.mxu0 0.0
      %737 = vmatprep.subr.mxu0 0.0
      %738 = vmatpush1.msra.mxu0 0.0
      %739 = vmatprep.subr.mxu0 0.0
      %740 = vmatpush1.msra.mxu0 0.0
      %741 = vmatprep.subr.mxu0 0.0
      %742 = vmatpush1.msra.mxu0 0.0
      %743 = vmatprep.subr.mxu0 0.0
      %744 = vmatpush1.msra.mxu0 0.0
      %745 = vmatprep.subr.mxu0 0.0
      %746 = vmatpush1.msra.mxu0 0.0
      %747 = vmatprep.subr.mxu0 0.0
      %748 = vmatpush1.msra.mxu0 0.0
      %749 = vmatprep.subr.mxu0 0.0
      %750 = vmatpush1.msra.mxu0 0.0
      %751 = vmatprep.subr.mxu0 0.0
      %752 = vmatpush1.msra.mxu0 0.0
      %753 = vmatprep.subr.mxu0 0.0
      %754 = vmatpush1.msra.mxu0 0.0
      %755 = vmatprep.subr.mxu0 0.0
      %756 = vmatpush1.msra.mxu0 0.0
      %757 = vmatprep.subr.mxu0 0.0
      %758 = vmatpush1.msra.mxu0 0.0
      %759 = vmatprep.subr.mxu0 0.0
      %760 = vmatpush1.msra.mxu0 0.0
      %761 = vmatprep.subr.mxu0 0.0
      %762 = vmatpush1.msra.mxu0 0.0
      %763 = vmatprep.subr.mxu0 0.0
      %764 = vmatpush1.msra.mxu0 0.0
      %765 = vmatprep.subr.mxu0 0.0
      %766 = vmatpush1.msra.mxu0 0.0
      %767 = vmatprep.subr.mxu0 0.0
      %768 = vmatpush1.msra.mxu0 0.0
      %769 = vmatprep.subr.mxu0 0.0
      %770 = vmatpush1.msra.mxu0 0.0
      %771 = vmatprep.subr.mxu0 0.0
      %772 = vmatpush1.msra.mxu0 0.0
      %773 = vmatprep.subr.mxu0 0.0
      %774 = vmatpush1.msra.mxu0 0.0
      %775 = vmatprep.subr.mxu0 0.0
      %776 = vmatpush1.msra.mxu0 0.0
      %777 = vmatprep.subr.mxu0 0.0
      %778 = vmatpush1.msra.mxu0 0.0
      %779 = vmatprep.subr.mxu0 0.0
      %780 = vmatpush1.msra.mxu0 0.0
      %781 = vmatprep.mubr.f32.mxu0 0.0
      %782 = vmatmul.mubr.f32.gmra.mrb[0].mxu0 %v240
      %v783 = vpop.f32.mrb[0].mxu0
      %v784 = vadd.f32 0.0, %v783
      %v785 = vpop.f32.mrb[0].mxu0
      %v786 = vadd.f32 0.0, %v785
      %787 = vdwg.mxu0
      %788 = vmatprep.subr.mxu0 %v289
      %789 = vmatpush1.msra.mxu0 %v286
      %790 = vmatprep.subr.mxu0 0.0
      %791 = vmatpush1.msra.mxu0 0.0
      %792 = vmatprep.subr.mxu0 0.0
      %793 = vmatpush1.msra.mxu0 0.0
      %794 = vmatprep.subr.mxu0 0.0
      %795 = vmatpush1.msra.mxu0 0.0
      %796 = vmatprep.subr.mxu0 0.0
      %797 = vmatpush1.msra.mxu0 0.0
      %798 = vmatprep.subr.mxu0 0.0
      %799 = vmatpush1.msra.mxu0 0.0
      %800 = vmatprep.subr.mxu0 0.0
      %801 = vmatpush1.msra.mxu0 0.0
      %802 = vmatprep.subr.mxu0 0.0
      %803 = vmatpush1.msra.mxu0 0.0
      %804 = vmatprep.subr.mxu0 0.0
      %805 = vmatpush1.msra.mxu0 0.0
      %806 = vmatprep.subr.mxu0 0.0
      %807 = vmatpush1.msra.mxu0 0.0
      %808 = vmatprep.subr.mxu0 0.0
      %809 = vmatpush1.msra.mxu0 0.0
      %810 = vmatprep.subr.mxu0 0.0
      %811 = vmatpush1.msra.mxu0 0.0
      %812 = vmatprep.subr.mxu0 0.0
      %813 = vmatpush1.msra.mxu0 0.0
      %814 = vmatprep.subr.mxu0 0.0
      %815 = vmatpush1.msra.mxu0 0.0
      %816 = vmatprep.subr.mxu0 0.0
      %817 = vmatpush1.msra.mxu0 0.0
      %818 = vmatprep.subr.mxu0 0.0
      %819 = vmatpush1.msra.mxu0 0.0
      %820 = vmatprep.subr.mxu0 0.0
      %821 = vmatpush1.msra.mxu0 0.0
      %822 = vmatprep.subr.mxu0 0.0
      %823 = vmatpush1.msra.mxu0 0.0
      %824 = vmatprep.subr.mxu0 0.0
      %825 = vmatpush1.msra.mxu0 0.0
      %826 = vmatprep.subr.mxu0 0.0
      %827 = vmatpush1.msra.mxu0 0.0
      %828 = vmatprep.subr.mxu0 0.0
      %829 = vmatpush1.msra.mxu0 0.0
      %830 = vmatprep.subr.mxu0 0.0
      %831 = vmatpush1.msra.mxu0 0.0
      %832 = vmatprep.subr.mxu0 0.0
      %833 = vmatpush1.msra.mxu0 0.0
      %834 = vmatprep.subr.mxu0 0.0
      %835 = vmatpush1.msra.mxu0 0.0
      %836 = vmatprep.subr.mxu0 0.0
      %837 = vmatpush1.msra.mxu0 0.0
      %838 = vmatprep.subr.mxu0 0.0
      %839 = vmatpush1.msra.mxu0 0.0
      %840 = vmatprep.subr.mxu0 0.0
      %841 = vmatpush1.msra.mxu0 0.0
      %842 = vmatprep.subr.mxu0 0.0
      %843 = vmatpush1.msra.mxu0 0.0
      %844 = vmatprep.subr.mxu0 0.0
      %845 = vmatpush1.msra.mxu0 0.0
      %846 = vmatprep.subr.mxu0 0.0
      %847 = vmatpush1.msra.mxu0 0.0
      %848 = vmatprep.subr.mxu0 0.0
      %849 = vmatpush1.msra.mxu0 0.0
      %850 = vmatprep.subr.mxu0 0.0
      %851 = vmatpush1.msra.mxu0 0.0
      %852 = vmatprep.mubr.f32.mxu0 0.0
      %853 = vmatmul.mubr.f32.gmra.mrb[0].mxu0 %v240
      %v854 = vpop.f32.mrb[0].mxu0
      %v855 = vadd.f32 0.0, %v854
      %v856 = vpop.f32.mrb[0].mxu0
      %v857 = vadd.f32 0.0, %v856
      %858 = vdwg.mxu0
      %859 = vst [vmem:[%s143] sm:$0xff] %v358
      %860 = vst [vmem:[%s143 + $0x20] sm:$0xff] %v360
      %861 = vst [vmem:[%s143 + $0x40] sm:$0xff] %v429
      %862 = vst [vmem:[%s143 + $0x60] sm:$0xff] %v431
      %863 = vst [vmem:[%s143 + $0x80] sm:$0xff] %v500
      %864 = vst [vmem:[%s143 + $0xa0] sm:$0xff] %v502
      %865 = vst [vmem:[%s143 + $0xc0] sm:$0xff] %v571
      %866 = vst [vmem:[%s143 + $0xe0] sm:$0xff] %v573
      %867 = vst [vmem:[%s143 + $0x100] sm:$0xff] %v642
      %868 = vst [vmem:[%s143 + $0x120] sm:$0xff] %v644
      %869 = vst [vmem:[%s143 + $0x140] sm:$0xff] %v713
      %870 = vst [vmem:[%s143 + $0x160] sm:$0xff] %v715
      %871 = vst [vmem:[%s143 + $0x180] sm:$0xff] %v784
      %872 = vst [vmem:[%s143 + $0x1a0] sm:$0xff] %v786
      %873 = vst [vmem:[%s143 + $0x1c0] sm:$0xff] %v855
      %874 = vst [vmem:[%s143 + $0x1e0] sm:$0xff] %v857
      %v875 = vld [vmem:[%s138] sm:$0xff]
      %v876 = vld [vmem:[%s138 + $0x8] sm:$0xff]
      %v877 = vld [vmem:[%s138 + $0x10] sm:$0xff]
      %v878 = vld [vmem:[%s138 + $0x18] sm:$0xff]
      %v879 = vld [vmem:[%s138 + $0x20] sm:$0xff]
      %v880 = vld [vmem:[%s138 + $0x28] sm:$0xff]
      %v881 = vld [vmem:[%s138 + $0x30] sm:$0xff]
      %v882 = vld [vmem:[%s138 + $0x38] sm:$0xff]
      %v883 = vld [vmem:[%s138 + $0x40] sm:$0xf]
      %v893 = vcombine.high %v875, %v875
      %v894 = vcombine.high %v876, %v876
      %v895 = vcombine.high %v877, %v877
      %v896 = vcombine.high %v878, %v878
      %v897 = vcombine.high %v879, %v879
      %v898 = vcombine.high %v880, %v880
      %v899 = vcombine.high %v881, %v881
      %v900 = vcombine.high %v882, %v882
      %v901 = vrot.slane %v875, 7
      %v902 = vrot.slane %v893, 7
      %v903 = vrot.slane %v876, 7
      %v904 = vrot.slane %v894, 7
      %v905 = vrot.slane %v877, 7
      %v906 = vrot.slane %v895, 7
      %v907 = vrot.slane %v878, 7
      %v908 = vrot.slane %v896, 7
      %v909 = vrot.slane %v879, 7
      %v910 = vrot.slane %v897, 7
      %v911 = vrot.slane %v880, 7
      %v912 = vrot.slane %v898, 7
      %v913 = vrot.slane %v881, 7
      %v914 = vrot.slane %v899, 7
      %v915 = vrot.slane %v882, 7
      %v916 = vrot.slane %v900, 7
      %v917 = vrot.slane %v883, 7
      %918 = vrot.lane.b32.xlu0 %v901, 127
      %v919 = vpop.permute.xlu0 %918
      %920 = vrot.lane.b32.xlu0 %v902, 127
      %v921 = vpop.permute.xlu0 %920
      %922 = vrot.lane.b32.xlu0 %v903, 127
      %v923 = vpop.permute.xlu0 %922
      %924 = vrot.lane.b32.xlu0 %v904, 127
      %v925 = vpop.permute.xlu0 %924
      %926 = vrot.lane.b32.xlu0 %v905, 127
      %v927 = vpop.permute.xlu0 %926
      %928 = vrot.lane.b32.xlu0 %v906, 127
      %v929 = vpop.permute.xlu0 %928
      %930 = vrot.lane.b32.xlu0 %v907, 127
      %v931 = vpop.permute.xlu0 %930
      %932 = vrot.lane.b32.xlu0 %v908, 127
      %v933 = vpop.permute.xlu0 %932
      %934 = vrot.lane.b32.xlu0 %v909, 127
      %v935 = vpop.permute.xlu0 %934
      %936 = vrot.lane.b32.xlu0 %v910, 127
      %v937 = vpop.permute.xlu0 %936
      %938 = vrot.lane.b32.xlu0 %v911, 127
      %v939 = vpop.permute.xlu0 %938
      %940 = vrot.lane.b32.xlu0 %v912, 127
      %v941 = vpop.permute.xlu0 %940
      %942 = vrot.lane.b32.xlu0 %v913, 127
      %v943 = vpop.permute.xlu0 %942
      %944 = vrot.lane.b32.xlu0 %v914, 127
      %v945 = vpop.permute.xlu0 %944
      %946 = vrot.lane.b32.xlu0 %v915, 127
      %v947 = vpop.permute.xlu0 %946
      %948 = vrot.lane.b32.xlu0 %v916, 127
      %v949 = vpop.permute.xlu0 %948
      %950 = vrot.lane.b32.xlu0 %v917, 127
      %v951 = vpop.permute.xlu0 %950
      %vm952 = vcmask 1039360
      %v953 = vsel %vm952, %v919, %v921
      %v954 = vsel %vm952, %v921, %v923
      %v955 = vsel %vm952, %v923, %v925
      %v956 = vsel %vm952, %v925, %v927
      %v957 = vsel %vm952, %v927, %v929
      %v958 = vsel %vm952, %v929, %v931
      %v959 = vsel %vm952, %v931, %v933
      %v960 = vsel %vm952, %v933, %v935
      %v961 = vsel %vm952, %v935, %v937
      %v962 = vsel %vm952, %v937, %v939
      %v963 = vsel %vm952, %v939, %v941
      %v964 = vsel %vm952, %v941, %v943
      %v965 = vsel %vm952, %v943, %v945
      %v966 = vsel %vm952, %v945, %v947
      %v967 = vsel %vm952, %v947, %v949
      %v968 = vsel %vm952, %v949, %v951
      %985 = vst [vmem:[#allocation2] sm:$0x1e] %v953
      %986 = vst [vmem:[#allocation2 + $0x8] sm:$0x1e] %v954
      %987 = vst [vmem:[#allocation2 + $0x10] sm:$0x1e] %v955
      %988 = vst [vmem:[#allocation2 + $0x18] sm:$0x1e] %v956
      %989 = vst [vmem:[#allocation2 + $0x20] sm:$0x1e] %v957
      %990 = vst [vmem:[#allocation2 + $0x28] sm:$0x1e] %v958
      %991 = vst [vmem:[#allocation2 + $0x30] sm:$0x1e] %v959
      %992 = vst [vmem:[#allocation2 + $0x38] sm:$0x1e] %v960
      %993 = vst [vmem:[#allocation2 + $0x40] sm:$0x1e] %v961
      %994 = vst [vmem:[#allocation2 + $0x48] sm:$0x1e] %v962
      %995 = vst [vmem:[#allocation2 + $0x50] sm:$0x1e] %v963
      %996 = vst [vmem:[#allocation2 + $0x58] sm:$0x1e] %v964
      %997 = vst [vmem:[#allocation2 + $0x60] sm:$0x1e] %v965
      %998 = vst [vmem:[#allocation2 + $0x68] sm:$0x1e] %v966
      %999 = vst [vmem:[#allocation2 + $0x70] sm:$0x1e] %v967
      %1000 = vst [vmem:[#allocation2 + $0x78] sm:$0x1e] %v968
      %v1001 = vld [vmem:[%s138] sm:$0xff]
      %v1002 = vld [vmem:[%s138 + $0x8] sm:$0xff]
      %v1003 = vld [vmem:[%s138 + $0x10] sm:$0xff]
      %v1004 = vld [vmem:[%s138 + $0x18] sm:$0xff]
      %v1005 = vld [vmem:[%s138 + $0x20] sm:$0xff]
      %v1006 = vld [vmem:[%s138 + $0x28] sm:$0xff]
      %v1007 = vld [vmem:[%s138 + $0x30] sm:$0xff]
      %v1008 = vld [vmem:[%s138 + $0x38] sm:$0xff]
      %v1017 = vcombine.high %v1001, %v1001
      %v1018 = vcombine.high %v1002, %v1002
      %v1019 = vcombine.high %v1003, %v1003
      %v1020 = vcombine.high %v1004, %v1004
      %v1021 = vcombine.high %v1005, %v1005
      %v1022 = vcombine.high %v1006, %v1006
      %v1023 = vcombine.high %v1007, %v1007
      %v1024 = vcombine.high %v1008, %v1008
      %v1025 = vrot.slane %v1001, 3
      %v1026 = vrot.slane %v1017, 3
      %v1027 = vrot.slane %v1002, 3
      %v1028 = vrot.slane %v1018, 3
      %v1029 = vrot.slane %v1003, 3
      %v1030 = vrot.slane %v1019, 3
      %v1031 = vrot.slane %v1004, 3
      %v1032 = vrot.slane %v1020, 3
      %v1033 = vrot.slane %v1005, 3
      %v1034 = vrot.slane %v1021, 3
      %v1035 = vrot.slane %v1006, 3
      %v1036 = vrot.slane %v1022, 3
      %v1037 = vrot.slane %v1007, 3
      %v1038 = vrot.slane %v1023, 3
      %v1039 = vrot.slane %v1008, 3
      %v1040 = vrot.slane %v1024, 3
      %1057 = vst [vmem:[#allocation2] sm:$0xe0] %v1025
      %1058 = vst [vmem:[#allocation2 + $0x8] sm:$0xe0] %v1026
      %1059 = vst [vmem:[#allocation2 + $0x10] sm:$0xe0] %v1027
      %1060 = vst [vmem:[#allocation2 + $0x18] sm:$0xe0] %v1028
      %1061 = vst [vmem:[#allocation2 + $0x20] sm:$0xe0] %v1029
      %1062 = vst [vmem:[#allocation2 + $0x28] sm:$0xe0] %v1030
      %1063 = vst [vmem:[#allocation2 + $0x30] sm:$0xe0] %v1031
      %1064 = vst [vmem:[#allocation2 + $0x38] sm:$0xe0] %v1032
      %1065 = vst [vmem:[#allocation2 + $0x40] sm:$0xe0] %v1033
      %1066 = vst [vmem:[#allocation2 + $0x48] sm:$0xe0] %v1034
      %1067 = vst [vmem:[#allocation2 + $0x50] sm:$0xe0] %v1035
      %1068 = vst [vmem:[#allocation2 + $0x58] sm:$0xe0] %v1036
      %1069 = vst [vmem:[#allocation2 + $0x60] sm:$0xe0] %v1037
      %1070 = vst [vmem:[#allocation2 + $0x68] sm:$0xe0] %v1038
      %1071 = vst [vmem:[#allocation2 + $0x70] sm:$0xe0] %v1039
      %1072 = vst [vmem:[#allocation2 + $0x78] sm:$0xe0] %v1040
      %1073 = vst [vmem:[#allocation2 + $0x80] sm:$0x1] %v1025
      %1074 = vst [vmem:[#allocation2 + $0x88] sm:$0x1] %v1026
      %1075 = vst [vmem:[#allocation2 + $0x90] sm:$0x1] %v1027
      %1076 = vst [vmem:[#allocation2 + $0x98] sm:$0x1] %v1028
      %1077 = vst [vmem:[#allocation2 + $0xa0] sm:$0x1] %v1029
      %1078 = vst [vmem:[#allocation2 + $0xa8] sm:$0x1] %v1030
      %1079 = vst [vmem:[#allocation2 + $0xb0] sm:$0x1] %v1031
      %1080 = vst [vmem:[#allocation2 + $0xb8] sm:$0x1] %v1032
      %1081 = vst [vmem:[#allocation2 + $0xc0] sm:$0x1] %v1033
      %1082 = vst [vmem:[#allocation2 + $0xc8] sm:$0x1] %v1034
      %1083 = vst [vmem:[#allocation2 + $0xd0] sm:$0x1] %v1035
      %1084 = vst [vmem:[#allocation2 + $0xd8] sm:$0x1] %v1036
      %1085 = vst [vmem:[#allocation2 + $0xe0] sm:$0x1] %v1037
      %1086 = vst [vmem:[#allocation2 + $0xe8] sm:$0x1] %v1038
      %1087 = vst [vmem:[#allocation2 + $0xf0] sm:$0x1] %v1039
      %1088 = vst [vmem:[#allocation2 + $0xf8] sm:$0x1] %v1040
      %s1089 = scalar_lea.vmem %s1, 8
      %v1090 = vld [vmem:[%s1089] sm:$0xff]
      %v1091 = vld [vmem:[#allocation2] sm:$0xff]
      %v1092 = vld [vmem:[#allocation2 + $0x8] sm:$0xff]
      %v1093 = vld [vmem:[#allocation2 + $0x10] sm:$0xff]
      %v1094 = vld [vmem:[#allocation2 + $0x18] sm:$0xff]
      %v1095 = vld [vmem:[#allocation2 + $0x20] sm:$0xff]
      %v1096 = vld [vmem:[#allocation2 + $0x28] sm:$0xff]
      %v1097 = vld [vmem:[#allocation2 + $0x30] sm:$0xff]
      %v1098 = vld [vmem:[#allocation2 + $0x38] sm:$0xff]
      %v1099 = vld [vmem:[#allocation2 + $0x40] sm:$0xff]
      %v1100 = vld [vmem:[#allocation2 + $0x48] sm:$0xff]
      %v1101 = vld [vmem:[#allocation2 + $0x50] sm:$0xff]
      %v1102 = vld [vmem:[#allocation2 + $0x58] sm:$0xff]
      %v1103 = vld [vmem:[#allocation2 + $0x60] sm:$0xff]
      %v1104 = vld [vmem:[#allocation2 + $0x68] sm:$0xff]
      %v1105 = vld [vmem:[#allocation2 + $0x70] sm:$0xff]
      %v1106 = vld [vmem:[#allocation2 + $0x78] sm:$0xff]
      %v1107 = vld [vmem:[#allocation2 + $0x80] sm:$0x1]
      %v1108 = vld [vmem:[#allocation2 + $0x88] sm:$0x1]
      %v1109 = vld [vmem:[#allocation2 + $0x90] sm:$0x1]
      %v1110 = vld [vmem:[#allocation2 + $0x98] sm:$0x1]
      %v1111 = vld [vmem:[#allocation2 + $0xa0] sm:$0x1]
      %v1112 = vld [vmem:[#allocation2 + $0xa8] sm:$0x1]
      %v1113 = vld [vmem:[#allocation2 + $0xb0] sm:$0x1]
      %v1114 = vld [vmem:[#allocation2 + $0xb8] sm:$0x1]
      %v1115 = vld [vmem:[#allocation2 + $0xc0] sm:$0x1]
      %v1116 = vld [vmem:[#allocation2 + $0xc8] sm:$0x1]
      %v1117 = vld [vmem:[#allocation2 + $0xd0] sm:$0x1]
      %v1118 = vld [vmem:[#allocation2 + $0xd8] sm:$0x1]
      %v1119 = vld [vmem:[#allocation2 + $0xe0] sm:$0x1]
      %v1120 = vld [vmem:[#allocation2 + $0xe8] sm:$0x1]
      %v1121 = vld [vmem:[#allocation2 + $0xf0] sm:$0x1]
      %v1122 = vld [vmem:[#allocation2 + $0xf8] sm:$0x1]
      %vm1123 = vcmask 72704
      %v1125 = vsel %vm1123, %v1090, 0
      %vm1127 = vcmask 1040384
      %v1129 = vsel %vm1127, %v1107, 0
      %v1132 = vsel %vm1127, %v1108, 0
      %v1135 = vsel %vm1127, %v1109, 0
      %v1138 = vsel %vm1127, %v1110, 0
      %v1141 = vsel %vm1127, %v1111, 0
      %v1144 = vsel %vm1127, %v1112, 0
      %v1147 = vsel %vm1127, %v1113, 0
      %v1150 = vsel %vm1127, %v1114, 0
      %v1153 = vsel %vm1127, %v1115, 0
      %v1156 = vsel %vm1127, %v1116, 0
      %v1159 = vsel %vm1127, %v1117, 0
      %v1162 = vsel %vm1127, %v1118, 0
      %v1165 = vsel %vm1127, %v1119, 0
      %v1168 = vsel %vm1127, %v1120, 0
      %v1171 = vsel %vm1127, %v1121, 0
      %v1174 = vsel %vm1127, %v1122, 0
      %1176 = vmatprep.subr.mxu0 %v1092
      %1177 = vmatpush1.msra.mxu0 %v1091
      %1178 = vmatprep.subr.mxu0 %v1132
      %1179 = vmatpush1.msra.mxu0 %v1129
      %1180 = vmatprep.subr.mxu0 0.0
      %1181 = vmatpush1.msra.mxu0 0.0
      %1182 = vmatprep.subr.mxu0 0.0
      %1183 = vmatpush1.msra.mxu0 0.0
      %1184 = vmatprep.subr.mxu0 0.0
      %1185 = vmatpush1.msra.mxu0 0.0
      %1186 = vmatprep.subr.mxu0 0.0
      %1187 = vmatpush1.msra.mxu0 0.0
      %1188 = vmatprep.subr.mxu0 0.0
      %1189 = vmatpush1.msra.mxu0 0.0
      %1190 = vmatprep.subr.mxu0 0.0
      %1191 = vmatpush1.msra.mxu0 0.0
      %1192 = vmatprep.subr.mxu0 0.0
      %1193 = vmatpush1.msra.mxu0 0.0
      %1194 = vmatprep.subr.mxu0 0.0
      %1195 = vmatpush1.msra.mxu0 0.0
      %1196 = vmatprep.subr.mxu0 0.0
      %1197 = vmatpush1.msra.mxu0 0.0
      %1198 = vmatprep.subr.mxu0 0.0
      %1199 = vmatpush1.msra.mxu0 0.0
      %1200 = vmatprep.subr.mxu0 0.0
      %1201 = vmatpush1.msra.mxu0 0.0
      %1202 = vmatprep.subr.mxu0 0.0
      %1203 = vmatpush1.msra.mxu0 0.0
      %1204 = vmatprep.subr.mxu0 0.0
      %1205 = vmatpush1.msra.mxu0 0.0
      %1206 = vmatprep.subr.mxu0 0.0
      %1207 = vmatpush1.msra.mxu0 0.0
      %1208 = vmatprep.subr.mxu0 0.0
      %1209 = vmatpush1.msra.mxu0 0.0
      %1210 = vmatprep.subr.mxu0 0.0
      %1211 = vmatpush1.msra.mxu0 0.0
      %1212 = vmatprep.subr.mxu0 0.0
      %1213 = vmatpush1.msra.mxu0 0.0
      %1214 = vmatprep.subr.mxu0 0.0
      %1215 = vmatpush1.msra.mxu0 0.0
      %1216 = vmatprep.subr.mxu0 0.0
      %1217 = vmatpush1.msra.mxu0 0.0
      %1218 = vmatprep.subr.mxu0 0.0
      %1219 = vmatpush1.msra.mxu0 0.0
      %1220 = vmatprep.subr.mxu0 0.0
      %1221 = vmatpush1.msra.mxu0 0.0
      %1222 = vmatprep.subr.mxu0 0.0
      %1223 = vmatpush1.msra.mxu0 0.0
      %1224 = vmatprep.subr.mxu0 0.0
      %1225 = vmatpush1.msra.mxu0 0.0
      %1226 = vmatprep.subr.mxu0 0.0
      %1227 = vmatpush1.msra.mxu0 0.0
      %1228 = vmatprep.subr.mxu0 0.0
      %1229 = vmatpush1.msra.mxu0 0.0
      %1230 = vmatprep.subr.mxu0 0.0
      %1231 = vmatpush1.msra.mxu0 0.0
      %1232 = vmatprep.subr.mxu0 0.0
      %1233 = vmatpush1.msra.mxu0 0.0
      %1234 = vmatprep.subr.mxu0 0.0
      %1235 = vmatpush1.msra.mxu0 0.0
      %1236 = vmatprep.subr.mxu0 0.0
      %1237 = vmatpush1.msra.mxu0 0.0
      %1238 = vmatprep.subr.mxu0 0.0
      %1239 = vmatpush1.msra.mxu0 0.0
      %1240 = vmatprep.mubr.f32.mxu0 0.0
      %1241 = vmatmul.mubr.f32.gmra.mrb[0].mxu0 %v1125
      %v1242 = vpop.f32.mrb[0].mxu0
      %v1243 = vadd.f32 0.0, %v1242
      %v1244 = vpop.f32.mrb[0].mxu0
      %v1245 = vadd.f32 0.0, %v1244
      %1246 = vdwg.mxu0
      %1247 = vmatprep.subr.mxu0 %v1094
      %1248 = vmatpush1.msra.mxu0 %v1093
      %1249 = vmatprep.subr.mxu0 %v1138
      %1250 = vmatpush1.msra.mxu0 %v1135
      %1251 = vmatprep.subr.mxu0 0.0
      %1252 = vmatpush1.msra.mxu0 0.0
      %1253 = vmatprep.subr.mxu0 0.0
      %1254 = vmatpush1.msra.mxu0 0.0
      %1255 = vmatprep.subr.mxu0 0.0
      %1256 = vmatpush1.msra.mxu0 0.0
      %1257 = vmatprep.subr.mxu0 0.0
      %1258 = vmatpush1.msra.mxu0 0.0
      %1259 = vmatprep.subr.mxu0 0.0
      %1260 = vmatpush1.msra.mxu0 0.0
      %1261 = vmatprep.subr.mxu0 0.0
      %1262 = vmatpush1.msra.mxu0 0.0
      %1263 = vmatprep.subr.mxu0 0.0
      %1264 = vmatpush1.msra.mxu0 0.0
      %1265 = vmatprep.subr.mxu0 0.0
      %1266 = vmatpush1.msra.mxu0 0.0
      %1267 = vmatprep.subr.mxu0 0.0
      %1268 = vmatpush1.msra.mxu0 0.0
      %1269 = vmatprep.subr.mxu0 0.0
      %1270 = vmatpush1.msra.mxu0 0.0
      %1271 = vmatprep.subr.mxu0 0.0
      %1272 = vmatpush1.msra.mxu0 0.0
      %1273 = vmatprep.subr.mxu0 0.0
      %1274 = vmatpush1.msra.mxu0 0.0
      %1275 = vmatprep.subr.mxu0 0.0
      %1276 = vmatpush1.msra.mxu0 0.0
      %1277 = vmatprep.subr.mxu0 0.0
      %1278 = vmatpush1.msra.mxu0 0.0
      %1279 = vmatprep.subr.mxu0 0.0
      %1280 = vmatpush1.msra.mxu0 0.0
      %1281 = vmatprep.subr.mxu0 0.0
      %1282 = vmatpush1.msra.mxu0 0.0
      %1283 = vmatprep.subr.mxu0 0.0
      %1284 = vmatpush1.msra.mxu0 0.0
      %1285 = vmatprep.subr.mxu0 0.0
      %1286 = vmatpush1.msra.mxu0 0.0
      %1287 = vmatprep.subr.mxu0 0.0
      %1288 = vmatpush1.msra.mxu0 0.0
      %1289 = vmatprep.subr.mxu0 0.0
      %1290 = vmatpush1.msra.mxu0 0.0
      %1291 = vmatprep.subr.mxu0 0.0
      %1292 = vmatpush1.msra.mxu0 0.0
      %1293 = vmatprep.subr.mxu0 0.0
      %1294 = vmatpush1.msra.mxu0 0.0
      %1295 = vmatprep.subr.mxu0 0.0
      %1296 = vmatpush1.msra.mxu0 0.0
      %1297 = vmatprep.subr.mxu0 0.0
      %1298 = vmatpush1.msra.mxu0 0.0
      %1299 = vmatprep.subr.mxu0 0.0
      %1300 = vmatpush1.msra.mxu0 0.0
      %1301 = vmatprep.subr.mxu0 0.0
      %1302 = vmatpush1.msra.mxu0 0.0
      %1303 = vmatprep.subr.mxu0 0.0
      %1304 = vmatpush1.msra.mxu0 0.0
      %1305 = vmatprep.subr.mxu0 0.0
      %1306 = vmatpush1.msra.mxu0 0.0
      %1307 = vmatprep.subr.mxu0 0.0
      %1308 = vmatpush1.msra.mxu0 0.0
      %1309 = vmatprep.subr.mxu0 0.0
      %1310 = vmatpush1.msra.mxu0 0.0
      %1311 = vmatprep.mubr.f32.mxu0 0.0
      %1312 = vmatmul.mubr.f32.gmra.mrb[0].mxu0 %v1125
      %v1313 = vpop.f32.mrb[0].mxu0
      %v1314 = vadd.f32 0.0, %v1313
      %v1315 = vpop.f32.mrb[0].mxu0
      %v1316 = vadd.f32 0.0, %v1315
      %1317 = vdwg.mxu0
      %1318 = vmatprep.subr.mxu0 %v1096
      %1319 = vmatpush1.msra.mxu0 %v1095
      %1320 = vmatprep.subr.mxu0 %v1144
      %1321 = vmatpush1.msra.mxu0 %v1141
      %1322 = vmatprep.subr.mxu0 0.0
      %1323 = vmatpush1.msra.mxu0 0.0
      %1324 = vmatprep.subr.mxu0 0.0
      %1325 = vmatpush1.msra.mxu0 0.0
      %1326 = vmatprep.subr.mxu0 0.0
      %1327 = vmatpush1.msra.mxu0 0.0
      %1328 = vmatprep.subr.mxu0 0.0
      %1329 = vmatpush1.msra.mxu0 0.0
      %1330 = vmatprep.subr.mxu0 0.0
      %1331 = vmatpush1.msra.mxu0 0.0
      %1332 = vmatprep.subr.mxu0 0.0
      %1333 = vmatpush1.msra.mxu0 0.0
      %1334 = vmatprep.subr.mxu0 0.0
      %1335 = vmatpush1.msra.mxu0 0.0
      %1336 = vmatprep.subr.mxu0 0.0
      %1337 = vmatpush1.msra.mxu0 0.0
      %1338 = vmatprep.subr.mxu0 0.0
      %1339 = vmatpush1.msra.mxu0 0.0
      %1340 = vmatprep.subr.mxu0 0.0
      %1341 = vmatpush1.msra.mxu0 0.0
      %1342 = vmatprep.subr.mxu0 0.0
      %1343 = vmatpush1.msra.mxu0 0.0
      %1344 = vmatprep.subr.mxu0 0.0
      %1345 = vmatpush1.msra.mxu0 0.0
      %1346 = vmatprep.subr.mxu0 0.0
      %1347 = vmatpush1.msra.mxu0 0.0
      %1348 = vmatprep.subr.mxu0 0.0
      %1349 = vmatpush1.msra.mxu0 0.0
      %1350 = vmatprep.subr.mxu0 0.0
      %1351 = vmatpush1.msra.mxu0 0.0
      %1352 = vmatprep.subr.mxu0 0.0
      %1353 = vmatpush1.msra.mxu0 0.0
      %1354 = vmatprep.subr.mxu0 0.0
      %1355 = vmatpush1.msra.mxu0 0.0
      %1356 = vmatprep.subr.mxu0 0.0
      %1357 = vmatpush1.msra.mxu0 0.0
      %1358 = vmatprep.subr.mxu0 0.0
      %1359 = vmatpush1.msra.mxu0 0.0
      %1360 = vmatprep.subr.mxu0 0.0
      %1361 = vmatpush1.msra.mxu0 0.0
      %1362 = vmatprep.subr.mxu0 0.0
      %1363 = vmatpush1.msra.mxu0 0.0
      %1364 = vmatprep.subr.mxu0 0.0
      %1365 = vmatpush1.msra.mxu0 0.0
      %1366 = vmatprep.subr.mxu0 0.0
      %1367 = vmatpush1.msra.mxu0 0.0
      %1368 = vmatprep.subr.mxu0 0.0
      %1369 = vmatpush1.msra.mxu0 0.0
      %1370 = vmatprep.subr.mxu0 0.0
      %1371 = vmatpush1.msra.mxu0 0.0
      %1372 = vmatprep.subr.mxu0 0.0
      %1373 = vmatpush1.msra.mxu0 0.0
      %1374 = vmatprep.subr.mxu0 0.0
      %1375 = vmatpush1.msra.mxu0 0.0
      %1376 = vmatprep.subr.mxu0 0.0
      %1377 = vmatpush1.msra.mxu0 0.0
      %1378 = vmatprep.subr.mxu0 0.0
      %1379 = vmatpush1.msra.mxu0 0.0
      %1380 = vmatprep.subr.mxu0 0.0
      %1381 = vmatpush1.msra.mxu0 0.0
      %1382 = vmatprep.mubr.f32.mxu0 0.0
      %1383 = vmatmul.mubr.f32.gmra.mrb[0].mxu0 %v1125
      %v1384 = vpop.f32.mrb[0].mxu0
      %v1385 = vadd.f32 0.0, %v1384
      %v1386 = vpop.f32.mrb[0].mxu0
      %v1387 = vadd.f32 0.0, %v1386
      %1388 = vdwg.mxu0
      %1389 = vmatprep.subr.mxu0 %v1098
      %1390 = vmatpush1.msra.mxu0 %v1097
      %1391 = vmatprep.subr.mxu0 %v1150
      %1392 = vmatpush1.msra.mxu0 %v1147
      %1393 = vmatprep.subr.mxu0 0.0
      %1394 = vmatpush1.msra.mxu0 0.0
      %1395 = vmatprep.subr.mxu0 0.0
      %1396 = vmatpush1.msra.mxu0 0.0
      %1397 = vmatprep.subr.mxu0 0.0
      %1398 = vmatpush1.msra.mxu0 0.0
      %1399 = vmatprep.subr.mxu0 0.0
      %1400 = vmatpush1.msra.mxu0 0.0
      %1401 = vmatprep.subr.mxu0 0.0
      %1402 = vmatpush1.msra.mxu0 0.0
      %1403 = vmatprep.subr.mxu0 0.0
      %1404 = vmatpush1.msra.mxu0 0.0
      %1405 = vmatprep.subr.mxu0 0.0
      %1406 = vmatpush1.msra.mxu0 0.0
      %1407 = vmatprep.subr.mxu0 0.0
      %1408 = vmatpush1.msra.mxu0 0.0
      %1409 = vmatprep.subr.mxu0 0.0
      %1410 = vmatpush1.msra.mxu0 0.0
      %1411 = vmatprep.subr.mxu0 0.0
      %1412 = vmatpush1.msra.mxu0 0.0
      %1413 = vmatprep.subr.mxu0 0.0
      %1414 = vmatpush1.msra.mxu0 0.0
      %1415 = vmatprep.subr.mxu0 0.0
      %1416 = vmatpush1.msra.mxu0 0.0
      %1417 = vmatprep.subr.mxu0 0.0
      %1418 = vmatpush1.msra.mxu0 0.0
      %1419 = vmatprep.subr.mxu0 0.0
      %1420 = vmatpush1.msra.mxu0 0.0
      %1421 = vmatprep.subr.mxu0 0.0
      %1422 = vmatpush1.msra.mxu0 0.0
      %1423 = vmatprep.subr.mxu0 0.0
      %1424 = vmatpush1.msra.mxu0 0.0
      %1425 = vmatprep.subr.mxu0 0.0
      %1426 = vmatpush1.msra.mxu0 0.0
      %1427 = vmatprep.subr.mxu0 0.0
      %1428 = vmatpush1.msra.mxu0 0.0
      %1429 = vmatprep.subr.mxu0 0.0
      %1430 = vmatpush1.msra.mxu0 0.0
      %1431 = vmatprep.subr.mxu0 0.0
      %1432 = vmatpush1.msra.mxu0 0.0
      %1433 = vmatprep.subr.mxu0 0.0
      %1434 = vmatpush1.msra.mxu0 0.0
      %1435 = vmatprep.subr.mxu0 0.0
      %1436 = vmatpush1.msra.mxu0 0.0
      %1437 = vmatprep.subr.mxu0 0.0
      %1438 = vmatpush1.msra.mxu0 0.0
      %1439 = vmatprep.subr.mxu0 0.0
      %1440 = vmatpush1.msra.mxu0 0.0
      %1441 = vmatprep.subr.mxu0 0.0
      %1442 = vmatpush1.msra.mxu0 0.0
      %1443 = vmatprep.subr.mxu0 0.0
      %1444 = vmatpush1.msra.mxu0 0.0
      %1445 = vmatprep.subr.mxu0 0.0
      %1446 = vmatpush1.msra.mxu0 0.0
      %1447 = vmatprep.subr.mxu0 0.0
      %1448 = vmatpush1.msra.mxu0 0.0
      %1449 = vmatprep.subr.mxu0 0.0
      %1450 = vmatpush1.msra.mxu0 0.0
      %1451 = vmatprep.subr.mxu0 0.0
      %1452 = vmatpush1.msra.mxu0 0.0
      %1453 = vmatprep.mubr.f32.mxu0 0.0
      %1454 = vmatmul.mubr.f32.gmra.mrb[0].mxu0 %v1125
      %v1455 = vpop.f32.mrb[0].mxu0
      %v1456 = vadd.f32 0.0, %v1455
      %v1457 = vpop.f32.mrb[0].mxu0
      %v1458 = vadd.f32 0.0, %v1457
      %1459 = vdwg.mxu0
      %1460 = vmatprep.subr.mxu0 %v1100
      %1461 = vmatpush1.msra.mxu0 %v1099
      %1462 = vmatprep.subr.mxu0 %v1156
      %1463 = vmatpush1.msra.mxu0 %v1153
      %1464 = vmatprep.subr.mxu0 0.0
      %1465 = vmatpush1.msra.mxu0 0.0
      %1466 = vmatprep.subr.mxu0 0.0
      %1467 = vmatpush1.msra.mxu0 0.0
      %1468 = vmatprep.subr.mxu0 0.0
      %1469 = vmatpush1.msra.mxu0 0.0
      %1470 = vmatprep.subr.mxu0 0.0
      %1471 = vmatpush1.msra.mxu0 0.0
      %1472 = vmatprep.subr.mxu0 0.0
      %1473 = vmatpush1.msra.mxu0 0.0
      %1474 = vmatprep.subr.mxu0 0.0
      %1475 = vmatpush1.msra.mxu0 0.0
      %1476 = vmatprep.subr.mxu0 0.0
      %1477 = vmatpush1.msra.mxu0 0.0
      %1478 = vmatprep.subr.mxu0 0.0
      %1479 = vmatpush1.msra.mxu0 0.0
      %1480 = vmatprep.subr.mxu0 0.0
      %1481 = vmatpush1.msra.mxu0 0.0
      %1482 = vmatprep.subr.mxu0 0.0
      %1483 = vmatpush1.msra.mxu0 0.0
      %1484 = vmatprep.subr.mxu0 0.0
      %1485 = vmatpush1.msra.mxu0 0.0
      %1486 = vmatprep.subr.mxu0 0.0
      %1487 = vmatpush1.msra.mxu0 0.0
      %1488 = vmatprep.subr.mxu0 0.0
      %1489 = vmatpush1.msra.mxu0 0.0
      %1490 = vmatprep.subr.mxu0 0.0
      %1491 = vmatpush1.msra.mxu0 0.0
      %1492 = vmatprep.subr.mxu0 0.0
      %1493 = vmatpush1.msra.mxu0 0.0
      %1494 = vmatprep.subr.mxu0 0.0
      %1495 = vmatpush1.msra.mxu0 0.0
      %1496 = vmatprep.subr.mxu0 0.0
      %1497 = vmatpush1.msra.mxu0 0.0
      %1498 = vmatprep.subr.mxu0 0.0
      %1499 = vmatpush1.msra.mxu0 0.0
      %1500 = vmatprep.subr.mxu0 0.0
      %1501 = vmatpush1.msra.mxu0 0.0
      %1502 = vmatprep.subr.mxu0 0.0
      %1503 = vmatpush1.msra.mxu0 0.0
      %1504 = vmatprep.subr.mxu0 0.0
      %1505 = vmatpush1.msra.mxu0 0.0
      %1506 = vmatprep.subr.mxu0 0.0
      %1507 = vmatpush1.msra.mxu0 0.0
      %1508 = vmatprep.subr.mxu0 0.0
      %1509 = vmatpush1.msra.mxu0 0.0
      %1510 = vmatprep.subr.mxu0 0.0
      %1511 = vmatpush1.msra.mxu0 0.0
      %1512 = vmatprep.subr.mxu0 0.0
      %1513 = vmatpush1.msra.mxu0 0.0
      %1514 = vmatprep.subr.mxu0 0.0
      %1515 = vmatpush1.msra.mxu0 0.0
      %1516 = vmatprep.subr.mxu0 0.0
      %1517 = vmatpush1.msra.mxu0 0.0
      %1518 = vmatprep.subr.mxu0 0.0
      %1519 = vmatpush1.msra.mxu0 0.0
      %1520 = vmatprep.subr.mxu0 0.0
      %1521 = vmatpush1.msra.mxu0 0.0
      %1522 = vmatprep.subr.mxu0 0.0
      %1523 = vmatpush1.msra.mxu0 0.0
      %1524 = vmatprep.mubr.f32.mxu0 0.0
      %1525 = vmatmul.mubr.f32.gmra.mrb[0].mxu0 %v1125
      %v1526 = vpop.f32.mrb[0].mxu0
      %v1527 = vadd.f32 0.0, %v1526
      %v1528 = vpop.f32.mrb[0].mxu0
      %v1529 = vadd.f32 0.0, %v1528
      %1530 = vdwg.mxu0
      %1531 = vmatprep.subr.mxu0 %v1102
      %1532 = vmatpush1.msra.mxu0 %v1101
      %1533 = vmatprep.subr.mxu0 %v1162
      %1534 = vmatpush1.msra.mxu0 %v1159
      %1535 = vmatprep.subr.mxu0 0.0
      %1536 = vmatpush1.msra.mxu0 0.0
      %1537 = vmatprep.subr.mxu0 0.0
      %1538 = vmatpush1.msra.mxu0 0.0
      %1539 = vmatprep.subr.mxu0 0.0
      %1540 = vmatpush1.msra.mxu0 0.0
      %1541 = vmatprep.subr.mxu0 0.0
      %1542 = vmatpush1.msra.mxu0 0.0
      %1543 = vmatprep.subr.mxu0 0.0
      %1544 = vmatpush1.msra.mxu0 0.0
      %1545 = vmatprep.subr.mxu0 0.0
      %1546 = vmatpush1.msra.mxu0 0.0
      %1547 = vmatprep.subr.mxu0 0.0
      %1548 = vmatpush1.msra.mxu0 0.0
      %1549 = vmatprep.subr.mxu0 0.0
      %1550 = vmatpush1.msra.mxu0 0.0
      %1551 = vmatprep.subr.mxu0 0.0
      %1552 = vmatpush1.msra.mxu0 0.0
      %1553 = vmatprep.subr.mxu0 0.0
      %1554 = vmatpush1.msra.mxu0 0.0
      %1555 = vmatprep.subr.mxu0 0.0
      %1556 = vmatpush1.msra.mxu0 0.0
      %1557 = vmatprep.subr.mxu0 0.0
      %1558 = vmatpush1.msra.mxu0 0.0
      %1559 = vmatprep.subr.mxu0 0.0
      %1560 = vmatpush1.msra.mxu0 0.0
      %1561 = vmatprep.subr.mxu0 0.0
      %1562 = vmatpush1.msra.mxu0 0.0
      %1563 = vmatprep.subr.mxu0 0.0
      %1564 = vmatpush1.msra.mxu0 0.0
      %1565 = vmatprep.subr.mxu0 0.0
      %1566 = vmatpush1.msra.mxu0 0.0
      %1567 = vmatprep.subr.mxu0 0.0
      %1568 = vmatpush1.msra.mxu0 0.0
      %1569 = vmatprep.subr.mxu0 0.0
      %1570 = vmatpush1.msra.mxu0 0.0
      %1571 = vmatprep.subr.mxu0 0.0
      %1572 = vmatpush1.msra.mxu0 0.0
      %1573 = vmatprep.subr.mxu0 0.0
      %1574 = vmatpush1.msra.mxu0 0.0
      %1575 = vmatprep.subr.mxu0 0.0
      %1576 = vmatpush1.msra.mxu0 0.0
      %1577 = vmatprep.subr.mxu0 0.0
      %1578 = vmatpush1.msra.mxu0 0.0
      %1579 = vmatprep.subr.mxu0 0.0
      %1580 = vmatpush1.msra.mxu0 0.0
      %1581 = vmatprep.subr.mxu0 0.0
      %1582 = vmatpush1.msra.mxu0 0.0
      %1583 = vmatprep.subr.mxu0 0.0
      %1584 = vmatpush1.msra.mxu0 0.0
      %1585 = vmatprep.subr.mxu0 0.0
      %1586 = vmatpush1.msra.mxu0 0.0
      %1587 = vmatprep.subr.mxu0 0.0
      %1588 = vmatpush1.msra.mxu0 0.0
      %1589 = vmatprep.subr.mxu0 0.0
      %1590 = vmatpush1.msra.mxu0 0.0
      %1591 = vmatprep.subr.mxu0 0.0
      %1592 = vmatpush1.msra.mxu0 0.0
      %1593 = vmatprep.subr.mxu0 0.0
      %1594 = vmatpush1.msra.mxu0 0.0
      %1595 = vmatprep.mubr.f32.mxu0 0.0
      %1596 = vmatmul.mubr.f32.gmra.mrb[0].mxu0 %v1125
      %v1597 = vpop.f32.mrb[0].mxu0
      %v1598 = vadd.f32 0.0, %v1597
      %v1599 = vpop.f32.mrb[0].mxu0
      %v1600 = vadd.f32 0.0, %v1599
      %1601 = vdwg.mxu0
      %1602 = vmatprep.subr.mxu0 %v1104
      %1603 = vmatpush1.msra.mxu0 %v1103
      %1604 = vmatprep.subr.mxu0 %v1168
      %1605 = vmatpush1.msra.mxu0 %v1165
      %1606 = vmatprep.subr.mxu0 0.0
      %1607 = vmatpush1.msra.mxu0 0.0
      %1608 = vmatprep.subr.mxu0 0.0
      %1609 = vmatpush1.msra.mxu0 0.0
      %1610 = vmatprep.subr.mxu0 0.0
      %1611 = vmatpush1.msra.mxu0 0.0
      %1612 = vmatprep.subr.mxu0 0.0
      %1613 = vmatpush1.msra.mxu0 0.0
      %1614 = vmatprep.subr.mxu0 0.0
      %1615 = vmatpush1.msra.mxu0 0.0
      %1616 = vmatprep.subr.mxu0 0.0
      %1617 = vmatpush1.msra.mxu0 0.0
      %1618 = vmatprep.subr.mxu0 0.0
      %1619 = vmatpush1.msra.mxu0 0.0
      %1620 = vmatprep.subr.mxu0 0.0
      %1621 = vmatpush1.msra.mxu0 0.0
      %1622 = vmatprep.subr.mxu0 0.0
      %1623 = vmatpush1.msra.mxu0 0.0
      %1624 = vmatprep.subr.mxu0 0.0
      %1625 = vmatpush1.msra.mxu0 0.0
      %1626 = vmatprep.subr.mxu0 0.0
      %1627 = vmatpush1.msra.mxu0 0.0
      %1628 = vmatprep.subr.mxu0 0.0
      %1629 = vmatpush1.msra.mxu0 0.0
      %1630 = vmatprep.subr.mxu0 0.0
      %1631 = vmatpush1.msra.mxu0 0.0
      %1632 = vmatprep.subr.mxu0 0.0
      %1633 = vmatpush1.msra.mxu0 0.0
      %1634 = vmatprep.subr.mxu0 0.0
      %1635 = vmatpush1.msra.mxu0 0.0
      %1636 = vmatprep.subr.mxu0 0.0
      %1637 = vmatpush1.msra.mxu0 0.0
      %1638 = vmatprep.subr.mxu0 0.0
      %1639 = vmatpush1.msra.mxu0 0.0
      %1640 = vmatprep.subr.mxu0 0.0
      %1641 = vmatpush1.msra.mxu0 0.0
      %1642 = vmatprep.subr.mxu0 0.0
      %1643 = vmatpush1.msra.mxu0 0.0
      %1644 = vmatprep.subr.mxu0 0.0
      %1645 = vmatpush1.msra.mxu0 0.0
      %1646 = vmatprep.subr.mxu0 0.0
      %1647 = vmatpush1.msra.mxu0 0.0
      %1648 = vmatprep.subr.mxu0 0.0
      %1649 = vmatpush1.msra.mxu0 0.0
      %1650 = vmatprep.subr.mxu0 0.0
      %1651 = vmatpush1.msra.mxu0 0.0
      %1652 = vmatprep.subr.mxu0 0.0
      %1653 = vmatpush1.msra.mxu0 0.0
      %1654 = vmatprep.subr.mxu0 0.0
      %1655 = vmatpush1.msra.mxu0 0.0
      %1656 = vmatprep.subr.mxu0 0.0
      %1657 = vmatpush1.msra.mxu0 0.0
      %1658 = vmatprep.subr.mxu0 0.0
      %1659 = vmatpush1.msra.mxu0 0.0
      %1660 = vmatprep.subr.mxu0 0.0
      %1661 = vmatpush1.msra.mxu0 0.0
      %1662 = vmatprep.subr.mxu0 0.0
      %1663 = vmatpush1.msra.mxu0 0.0
      %1664 = vmatprep.subr.mxu0 0.0
      %1665 = vmatpush1.msra.mxu0 0.0
      %1666 = vmatprep.mubr.f32.mxu0 0.0
      %1667 = vmatmul.mubr.f32.gmra.mrb[0].mxu0 %v1125
      %v1668 = vpop.f32.mrb[0].mxu0
      %v1669 = vadd.f32 0.0, %v1668
      %v1670 = vpop.f32.mrb[0].mxu0
      %v1671 = vadd.f32 0.0, %v1670
      %1672 = vdwg.mxu0
      %1673 = vmatprep.subr.mxu0 %v1106
      %1674 = vmatpush1.msra.mxu0 %v1105
      %1675 = vmatprep.subr.mxu0 %v1174
      %1676 = vmatpush1.msra.mxu0 %v1171
      %1677 = vmatprep.subr.mxu0 0.0
      %1678 = vmatpush1.msra.mxu0 0.0
      %1679 = vmatprep.subr.mxu0 0.0
      %1680 = vmatpush1.msra.mxu0 0.0
      %1681 = vmatprep.subr.mxu0 0.0
      %1682 = vmatpush1.msra.mxu0 0.0
      %1683 = vmatprep.subr.mxu0 0.0
      %1684 = vmatpush1.msra.mxu0 0.0
      %1685 = vmatprep.subr.mxu0 0.0
      %1686 = vmatpush1.msra.mxu0 0.0
      %1687 = vmatprep.subr.mxu0 0.0
      %1688 = vmatpush1.msra.mxu0 0.0
      %1689 = vmatprep.subr.mxu0 0.0
      %1690 = vmatpush1.msra.mxu0 0.0
      %1691 = vmatprep.subr.mxu0 0.0
      %1692 = vmatpush1.msra.mxu0 0.0
      %1693 = vmatprep.subr.mxu0 0.0
      %1694 = vmatpush1.msra.mxu0 0.0
      %1695 = vmatprep.subr.mxu0 0.0
      %1696 = vmatpush1.msra.mxu0 0.0
      %1697 = vmatprep.subr.mxu0 0.0
      %1698 = vmatpush1.msra.mxu0 0.0
      %1699 = vmatprep.subr.mxu0 0.0
      %1700 = vmatpush1.msra.mxu0 0.0
      %1701 = vmatprep.subr.mxu0 0.0
      %1702 = vmatpush1.msra.mxu0 0.0
      %1703 = vmatprep.subr.mxu0 0.0
      %1704 = vmatpush1.msra.mxu0 0.0
      %1705 = vmatprep.subr.mxu0 0.0
      %1706 = vmatpush1.msra.mxu0 0.0
      %1707 = vmatprep.subr.mxu0 0.0
      %1708 = vmatpush1.msra.mxu0 0.0
      %1709 = vmatprep.subr.mxu0 0.0
      %1710 = vmatpush1.msra.mxu0 0.0
      %1711 = vmatprep.subr.mxu0 0.0
      %1712 = vmatpush1.msra.mxu0 0.0
      %1713 = vmatprep.subr.mxu0 0.0
      %1714 = vmatpush1.msra.mxu0 0.0
      %1715 = vmatprep.subr.mxu0 0.0
      %1716 = vmatpush1.msra.mxu0 0.0
      %1717 = vmatprep.subr.mxu0 0.0
      %1718 = vmatpush1.msra.mxu0 0.0
      %1719 = vmatprep.subr.mxu0 0.0
      %1720 = vmatpush1.msra.mxu0 0.0
      %1721 = vmatprep.subr.mxu0 0.0
      %1722 = vmatpush1.msra.mxu0 0.0
      %1723 = vmatprep.subr.mxu0 0.0
      %1724 = vmatpush1.msra.mxu0 0.0
      %1725 = vmatprep.subr.mxu0 0.0
      %1726 = vmatpush1.msra.mxu0 0.0
      %1727 = vmatprep.subr.mxu0 0.0
      %1728 = vmatpush1.msra.mxu0 0.0
      %1729 = vmatprep.subr.mxu0 0.0
      %1730 = vmatpush1.msra.mxu0 0.0
      %1731 = vmatprep.subr.mxu0 0.0
      %1732 = vmatpush1.msra.mxu0 0.0
      %1733 = vmatprep.subr.mxu0 0.0
      %1734 = vmatpush1.msra.mxu0 0.0
      %1735 = vmatprep.subr.mxu0 0.0
      %1736 = vmatpush1.msra.mxu0 0.0
      %1737 = vmatprep.mubr.f32.mxu0 0.0
      %1738 = vmatmul.mubr.f32.gmra.mrb[0].mxu0 %v1125
      %v1739 = vpop.f32.mrb[0].mxu0
      %v1740 = vadd.f32 0.0, %v1739
      %v1741 = vpop.f32.mrb[0].mxu0
      %v1742 = vadd.f32 0.0, %v1741
      %1743 = vdwg.mxu0
      %1744 = vst [vmem:[%s143 + $0x8] sm:$0xff] %v1243
      %1745 = vst [vmem:[%s143 + $0x28] sm:$0xff] %v1245
      %1746 = vst [vmem:[%s143 + $0x48] sm:$0xff] %v1314
      %1747 = vst [vmem:[%s143 + $0x68] sm:$0xff] %v1316
      %1748 = vst [vmem:[%s143 + $0x88] sm:$0xff] %v1385
      %1749 = vst [vmem:[%s143 + $0xa8] sm:$0xff] %v1387
      %1750 = vst [vmem:[%s143 + $0xc8] sm:$0xff] %v1456
      %1751 = vst [vmem:[%s143 + $0xe8] sm:$0xff] %v1458
      %1752 = vst [vmem:[%s143 + $0x108] sm:$0xff] %v1527
      %1753 = vst [vmem:[%s143 + $0x128] sm:$0xff] %v1529
      %1754 = vst [vmem:[%s143 + $0x148] sm:$0xff] %v1598
      %1755 = vst [vmem:[%s143 + $0x168] sm:$0xff] %v1600
      %1756 = vst [vmem:[%s143 + $0x188] sm:$0xff] %v1669
      %1757 = vst [vmem:[%s143 + $0x1a8] sm:$0xff] %v1671
      %1758 = vst [vmem:[%s143 + $0x1c8] sm:$0xff] %v1740
      %1759 = vst [vmem:[%s143 + $0x1e8] sm:$0xff] %v1742
      %v1760 = vld [vmem:[%s138 + $0x4] sm:$0xff]
      %v1761 = vld [vmem:[%s138 + $0xc] sm:$0xff]
      %v1762 = vld [vmem:[%s138 + $0x14] sm:$0xff]
      %v1763 = vld [vmem:[%s138 + $0x1c] sm:$0xff]
      %v1764 = vld [vmem:[%s138 + $0x24] sm:$0xff]
      %v1765 = vld [vmem:[%s138 + $0x2c] sm:$0xff]
      %v1766 = vld [vmem:[%s138 + $0x34] sm:$0xff]
      %v1767 = vld [vmem:[%s138 + $0x3c] sm:$0xff]
      %v1776 = vcombine.high %v1760, %v1760
      %v1777 = vcombine.high %v1761, %v1761
      %v1778 = vcombine.high %v1762, %v1762
      %v1779 = vcombine.high %v1763, %v1763
      %v1780 = vcombine.high %v1764, %v1764
      %v1781 = vcombine.high %v1765, %v1765
      %v1782 = vcombine.high %v1766, %v1766
      %v1783 = vcombine.high %v1767, %v1767
      %v1784 = vrot.slane %v1760, 7
      %v1785 = vrot.slane %v1776, 7
      %v1786 = vrot.slane %v1761, 7
      %v1787 = vrot.slane %v1777, 7
      %v1788 = vrot.slane %v1762, 7
      %v1789 = vrot.slane %v1778, 7
      %v1790 = vrot.slane %v1763, 7
      %v1791 = vrot.slane %v1779, 7
      %v1792 = vrot.slane %v1764, 7
      %v1793 = vrot.slane %v1780, 7
      %v1794 = vrot.slane %v1765, 7
      %v1795 = vrot.slane %v1781, 7
      %v1796 = vrot.slane %v1766, 7
      %v1797 = vrot.slane %v1782, 7
      %v1798 = vrot.slane %v1767, 7
      %v1799 = vrot.slane %v1783, 7
      %1816 = vst [vmem:[#allocation2] sm:$0x1e] %v1784
      %1817 = vst [vmem:[#allocation2 + $0x8] sm:$0x1e] %v1785
      %1818 = vst [vmem:[#allocation2 + $0x10] sm:$0x1e] %v1786
      %1819 = vst [vmem:[#allocation2 + $0x18] sm:$0x1e] %v1787
      %1820 = vst [vmem:[#allocation2 + $0x20] sm:$0x1e] %v1788
      %1821 = vst [vmem:[#allocation2 + $0x28] sm:$0x1e] %v1789
      %1822 = vst [vmem:[#allocation2 + $0x30] sm:$0x1e] %v1790
      %1823 = vst [vmem:[#allocation2 + $0x38] sm:$0x1e] %v1791
      %1824 = vst [vmem:[#allocation2 + $0x40] sm:$0x1e] %v1792
      %1825 = vst [vmem:[#allocation2 + $0x48] sm:$0x1e] %v1793
      %1826 = vst [vmem:[#allocation2 + $0x50] sm:$0x1e] %v1794
      %1827 = vst [vmem:[#allocation2 + $0x58] sm:$0x1e] %v1795
      %1828 = vst [vmem:[#allocation2 + $0x60] sm:$0x1e] %v1796
      %1829 = vst [vmem:[#allocation2 + $0x68] sm:$0x1e] %v1797
      %1830 = vst [vmem:[#allocation2 + $0x70] sm:$0x1e] %v1798
      %1831 = vst [vmem:[#allocation2 + $0x78] sm:$0x1e] %v1799
      %v1832 = vld [vmem:[%s138] sm:$0xff]
      %v1833 = vld [vmem:[%s138 + $0x8] sm:$0xff]
      %v1834 = vld [vmem:[%s138 + $0x10] sm:$0xff]
      %v1835 = vld [vmem:[%s138 + $0x18] sm:$0xff]
      %v1836 = vld [vmem:[%s138 + $0x20] sm:$0xff]
      %v1837 = vld [vmem:[%s138 + $0x28] sm:$0xff]
      %v1838 = vld [vmem:[%s138 + $0x30] sm:$0xff]
      %v1839 = vld [vmem:[%s138 + $0x38] sm:$0xff]
      %v1848 = vcombine.high %v1832, %v1832
      %v1849 = vcombine.high %v1833, %v1833
      %v1850 = vcombine.high %v1834, %v1834
      %v1851 = vcombine.high %v1835, %v1835
      %v1852 = vcombine.high %v1836, %v1836
      %v1853 = vcombine.high %v1837, %v1837
      %v1854 = vcombine.high %v1838, %v1838
      %v1855 = vcombine.high %v1839, %v1839
      %v1856 = vrot.slane %v1832, 3
      %v1857 = vrot.slane %v1848, 3
      %v1858 = vrot.slane %v1833, 3
      %v1859 = vrot.slane %v1849, 3
      %v1860 = vrot.slane %v1834, 3
      %v1861 = vrot.slane %v1850, 3
      %v1862 = vrot.slane %v1835, 3
      %v1863 = vrot.slane %v1851, 3
      %v1864 = vrot.slane %v1836, 3
      %v1865 = vrot.slane %v1852, 3
      %v1866 = vrot.slane %v1837, 3
      %v1867 = vrot.slane %v1853, 3
      %v1868 = vrot.slane %v1838, 3
      %v1869 = vrot.slane %v1854, 3
      %v1870 = vrot.slane %v1839, 3
      %v1871 = vrot.slane %v1855, 3
      %1888 = vst [vmem:[#allocation2] sm:$0xe0] %v1856
      %1889 = vst [vmem:[#allocation2 + $0x8] sm:$0xe0] %v1857
      %1890 = vst [vmem:[#allocation2 + $0x10] sm:$0xe0] %v1858
      %1891 = vst [vmem:[#allocation2 + $0x18] sm:$0xe0] %v1859
      %1892 = vst [vmem:[#allocation2 + $0x20] sm:$0xe0] %v1860
      %1893 = vst [vmem:[#allocation2 + $0x28] sm:$0xe0] %v1861
      %1894 = vst [vmem:[#allocation2 + $0x30] sm:$0xe0] %v1862
      %1895 = vst [vmem:[#allocation2 + $0x38] sm:$0xe0] %v1863
      %1896 = vst [vmem:[#allocation2 + $0x40] sm:$0xe0] %v1864
      %1897 = vst [vmem:[#allocation2 + $0x48] sm:$0xe0] %v1865
      %1898 = vst [vmem:[#allocation2 + $0x50] sm:$0xe0] %v1866
      %1899 = vst [vmem:[#allocation2 + $0x58] sm:$0xe0] %v1867
      %1900 = vst [vmem:[#allocation2 + $0x60] sm:$0xe0] %v1868
      %1901 = vst [vmem:[#allocation2 + $0x68] sm:$0xe0] %v1869
      %1902 = vst [vmem:[#allocation2 + $0x70] sm:$0xe0] %v1870
      %1903 = vst [vmem:[#allocation2 + $0x78] sm:$0xe0] %v1871
      %1904 = vst [vmem:[#allocation2 + $0x80] sm:$0x1] %v1856
      %1905 = vst [vmem:[#allocation2 + $0x88] sm:$0x1] %v1857
      %1906 = vst [vmem:[#allocation2 + $0x90] sm:$0x1] %v1858
      %1907 = vst [vmem:[#allocation2 + $0x98] sm:$0x1] %v1859
      %1908 = vst [vmem:[#allocation2 + $0xa0] sm:$0x1] %v1860
      %1909 = vst [vmem:[#allocation2 + $0xa8] sm:$0x1] %v1861
      %1910 = vst [vmem:[#allocation2 + $0xb0] sm:$0x1] %v1862
      %1911 = vst [vmem:[#allocation2 + $0xb8] sm:$0x1] %v1863
      %1912 = vst [vmem:[#allocation2 + $0xc0] sm:$0x1] %v1864
      %1913 = vst [vmem:[#allocation2 + $0xc8] sm:$0x1] %v1865
      %1914 = vst [vmem:[#allocation2 + $0xd0] sm:$0x1] %v1866
      %1915 = vst [vmem:[#allocation2 + $0xd8] sm:$0x1] %v1867
      %1916 = vst [vmem:[#allocation2 + $0xe0] sm:$0x1] %v1868
      %1917 = vst [vmem:[#allocation2 + $0xe8] sm:$0x1] %v1869
      %1918 = vst [vmem:[#allocation2 + $0xf0] sm:$0x1] %v1870
      %1919 = vst [vmem:[#allocation2 + $0xf8] sm:$0x1] %v1871
      %s1920 = scalar_lea.vmem %s1, 16
      %v1921 = vld [vmem:[%s1920] sm:$0xff]
      %v1922 = vld [vmem:[#allocation2] sm:$0xff]
      %v1923 = vld [vmem:[#allocation2 + $0x8] sm:$0xff]
      %v1924 = vld [vmem:[#allocation2 + $0x10] sm:$0xff]
      %v1925 = vld [vmem:[#allocation2 + $0x18] sm:$0xff]
      %v1926 = vld [vmem:[#allocation2 + $0x20] sm:$0xff]
      %v1927 = vld [vmem:[#allocation2 + $0x28] sm:$0xff]
      %v1928 = vld [vmem:[#allocation2 + $0x30] sm:$0xff]
      %v1929 = vld [vmem:[#allocation2 + $0x38] sm:$0xff]
      %v1930 = vld [vmem:[#allocation2 + $0x40] sm:$0xff]
      %v1931 = vld [vmem:[#allocation2 + $0x48] sm:$0xff]
      %v1932 = vld [vmem:[#allocation2 + $0x50] sm:$0xff]
      %v1933 = vld [vmem:[#allocation2 + $0x58] sm:$0xff]
      %v1934 = vld [vmem:[#allocation2 + $0x60] sm:$0xff]
      %v1935 = vld [vmem:[#allocation2 + $0x68] sm:$0xff]
      %v1936 = vld [vmem:[#allocation2 + $0x70] sm:$0xff]
      %v1937 = vld [vmem:[#allocation2 + $0x78] sm:$0xff]
      %v1938 = vld [vmem:[#allocation2 + $0x80] sm:$0x1]
      %v1939 = vld [vmem:[#allocation2 + $0x88] sm:$0x1]
      %v1940 = vld [vmem:[#allocation2 + $0x90] sm:$0x1]
      %v1941 = vld [vmem:[#allocation2 + $0x98] sm:$0x1]
      %v1942 = vld [vmem:[#allocation2 + $0xa0] sm:$0x1]
      %v1943 = vld [vmem:[#allocation2 + $0xa8] sm:$0x1]
      %v1944 = vld [vmem:[#allocation2 + $0xb0] sm:$0x1]
      %v1945 = vld [vmem:[#allocation2 + $0xb8] sm:$0x1]
      %v1946 = vld [vmem:[#allocation2 + $0xc0] sm:$0x1]
      %v1947 = vld [vmem:[#allocation2 + $0xc8] sm:$0x1]
      %v1948 = vld [vmem:[#allocation2 + $0xd0] sm:$0x1]
      %v1949 = vld [vmem:[#allocation2 + $0xd8] sm:$0x1]
      %v1950 = vld [vmem:[#allocation2 + $0xe0] sm:$0x1]
      %v1951 = vld [vmem:[#allocation2 + $0xe8] sm:$0x1]
      %v1952 = vld [vmem:[#allocation2 + $0xf0] sm:$0x1]
      %v1953 = vld [vmem:[#allocation2 + $0xf8] sm:$0x1]
      %v1955 = vsel %vm1123, %v1921, 0
      %v1958 = vsel %vm1127, %v1938, 0
      %v1961 = vsel %vm1127, %v1939, 0
      %v1964 = vsel %vm1127, %v1940, 0
      %v1967 = vsel %vm1127, %v1941, 0
      %v1970 = vsel %vm1127, %v1942, 0
      %v1973 = vsel %vm1127, %v1943, 0
      %v1976 = vsel %vm1127, %v1944, 0
      %v1979 = vsel %vm1127, %v1945, 0
      %v1982 = vsel %vm1127, %v1946, 0
      %v1985 = vsel %vm1127, %v1947, 0
      %v1988 = vsel %vm1127, %v1948, 0
      %v1991 = vsel %vm1127, %v1949, 0
      %v1994 = vsel %vm1127, %v1950, 0
      %v1997 = vsel %vm1127, %v1951, 0
      %v2000 = vsel %vm1127, %v1952, 0
      %v2003 = vsel %vm1127, %v1953, 0
      %2005 = vmatprep.subr.mxu0 %v1923
      %2006 = vmatpush1.msra.mxu0 %v1922
      %2007 = vmatprep.subr.mxu0 %v1961
      %2008 = vmatpush1.msra.mxu0 %v1958
      %2009 = vmatprep.subr.mxu0 0.0
      %2010 = vmatpush1.msra.mxu0 0.0
      %2011 = vmatprep.subr.mxu0 0.0
      %2012 = vmatpush1.msra.mxu0 0.0
      %2013 = vmatprep.subr.mxu0 0.0
      %2014 = vmatpush1.msra.mxu0 0.0
      %2015 = vmatprep.subr.mxu0 0.0
      %2016 = vmatpush1.msra.mxu0 0.0
      %2017 = vmatprep.subr.mxu0 0.0
      %2018 = vmatpush1.msra.mxu0 0.0
      %2019 = vmatprep.subr.mxu0 0.0
      %2020 = vmatpush1.msra.mxu0 0.0
      %2021 = vmatprep.subr.mxu0 0.0
      %2022 = vmatpush1.msra.mxu0 0.0
      %2023 = vmatprep.subr.mxu0 0.0
      %2024 = vmatpush1.msra.mxu0 0.0
      %2025 = vmatprep.subr.mxu0 0.0
      %2026 = vmatpush1.msra.mxu0 0.0
      %2027 = vmatprep.subr.mxu0 0.0
      %2028 = vmatpush1.msra.mxu0 0.0
      %2029 = vmatprep.subr.mxu0 0.0
      %2030 = vmatpush1.msra.mxu0 0.0
      %2031 = vmatprep.subr.mxu0 0.0
      %2032 = vmatpush1.msra.mxu0 0.0
      %2033 = vmatprep.subr.mxu0 0.0
      %2034 = vmatpush1.msra.mxu0 0.0
      %2035 = vmatprep.subr.mxu0 0.0
      %2036 = vmatpush1.msra.mxu0 0.0
      %2037 = vmatprep.subr.mxu0 0.0
      %2038 = vmatpush1.msra.mxu0 0.0
      %2039 = vmatprep.subr.mxu0 0.0
      %2040 = vmatpush1.msra.mxu0 0.0
      %2041 = vmatprep.subr.mxu0 0.0
      %2042 = vmatpush1.msra.mxu0 0.0
      %2043 = vmatprep.subr.mxu0 0.0
      %2044 = vmatpush1.msra.mxu0 0.0
      %2045 = vmatprep.subr.mxu0 0.0
      %2046 = vmatpush1.msra.mxu0 0.0
      %2047 = vmatprep.subr.mxu0 0.0
      %2048 = vmatpush1.msra.mxu0 0.0
      %2049 = vmatprep.subr.mxu0 0.0
      %2050 = vmatpush1.msra.mxu0 0.0
      %2051 = vmatprep.subr.mxu0 0.0
      %2052 = vmatpush1.msra.mxu0 0.0
      %2053 = vmatprep.subr.mxu0 0.0
      %2054 = vmatpush1.msra.mxu0 0.0
      %2055 = vmatprep.subr.mxu0 0.0
      %2056 = vmatpush1.msra.mxu0 0.0
      %2057 = vmatprep.subr.mxu0 0.0
      %2058 = vmatpush1.msra.mxu0 0.0
      %2059 = vmatprep.subr.mxu0 0.0
      %2060 = vmatpush1.msra.mxu0 0.0
      %2061 = vmatprep.subr.mxu0 0.0
      %2062 = vmatpush1.msra.mxu0 0.0
      %2063 = vmatprep.subr.mxu0 0.0
      %2064 = vmatpush1.msra.mxu0 0.0
      %2065 = vmatprep.subr.mxu0 0.0
      %2066 = vmatpush1.msra.mxu0 0.0
      %2067 = vmatprep.subr.mxu0 0.0
      %2068 = vmatpush1.msra.mxu0 0.0
      %2069 = vmatprep.mubr.f32.mxu0 0.0
      %2070 = vmatmul.mubr.f32.gmra.mrb[0].mxu0 %v1955
      %v2071 = vpop.f32.mrb[0].mxu0
      %v2072 = vadd.f32 0.0, %v2071
      %v2073 = vpop.f32.mrb[0].mxu0
      %v2074 = vadd.f32 0.0, %v2073
      %2075 = vdwg.mxu0
      %2076 = vmatprep.subr.mxu0 %v1925
      %2077 = vmatpush1.msra.mxu0 %v1924
      %2078 = vmatprep.subr.mxu0 %v1967
      %2079 = vmatpush1.msra.mxu0 %v1964
      %2080 = vmatprep.subr.mxu0 0.0
      %2081 = vmatpush1.msra.mxu0 0.0
      %2082 = vmatprep.subr.mxu0 0.0
      %2083 = vmatpush1.msra.mxu0 0.0
      %2084 = vmatprep.subr.mxu0 0.0
      %2085 = vmatpush1.msra.mxu0 0.0
      %2086 = vmatprep.subr.mxu0 0.0
      %2087 = vmatpush1.msra.mxu0 0.0
      %2088 = vmatprep.subr.mxu0 0.0
      %2089 = vmatpush1.msra.mxu0 0.0
      %2090 = vmatprep.subr.mxu0 0.0
      %2091 = vmatpush1.msra.mxu0 0.0
      %2092 = vmatprep.subr.mxu0 0.0
      %2093 = vmatpush1.msra.mxu0 0.0
      %2094 = vmatprep.subr.mxu0 0.0
      %2095 = vmatpush1.msra.mxu0 0.0
      %2096 = vmatprep.subr.mxu0 0.0
      %2097 = vmatpush1.msra.mxu0 0.0
      %2098 = vmatprep.subr.mxu0 0.0
      %2099 = vmatpush1.msra.mxu0 0.0
      %2100 = vmatprep.subr.mxu0 0.0
      %2101 = vmatpush1.msra.mxu0 0.0
      %2102 = vmatprep.subr.mxu0 0.0
      %2103 = vmatpush1.msra.mxu0 0.0
      %2104 = vmatprep.subr.mxu0 0.0
      %2105 = vmatpush1.msra.mxu0 0.0
      %2106 = vmatprep.subr.mxu0 0.0
      %2107 = vmatpush1.msra.mxu0 0.0
      %2108 = vmatprep.subr.mxu0 0.0
      %2109 = vmatpush1.msra.mxu0 0.0
      %2110 = vmatprep.subr.mxu0 0.0
      %2111 = vmatpush1.msra.mxu0 0.0
      %2112 = vmatprep.subr.mxu0 0.0
      %2113 = vmatpush1.msra.mxu0 0.0
      %2114 = vmatprep.subr.mxu0 0.0
      %2115 = vmatpush1.msra.mxu0 0.0
      %2116 = vmatprep.subr.mxu0 0.0
      %2117 = vmatpush1.msra.mxu0 0.0
      %2118 = vmatprep.subr.mxu0 0.0
      %2119 = vmatpush1.msra.mxu0 0.0
      %2120 = vmatprep.subr.mxu0 0.0
      %2121 = vmatpush1.msra.mxu0 0.0
      %2122 = vmatprep.subr.mxu0 0.0
      %2123 = vmatpush1.msra.mxu0 0.0
      %2124 = vmatprep.subr.mxu0 0.0
      %2125 = vmatpush1.msra.mxu0 0.0
      %2126 = vmatprep.subr.mxu0 0.0
      %2127 = vmatpush1.msra.mxu0 0.0
      %2128 = vmatprep.subr.mxu0 0.0
      %2129 = vmatpush1.msra.mxu0 0.0
      %2130 = vmatprep.subr.mxu0 0.0
      %2131 = vmatpush1.msra.mxu0 0.0
      %2132 = vmatprep.subr.mxu0 0.0
      %2133 = vmatpush1.msra.mxu0 0.0
      %2134 = vmatprep.subr.mxu0 0.0
      %2135 = vmatpush1.msra.mxu0 0.0
      %2136 = vmatprep.subr.mxu0 0.0
      %2137 = vmatpush1.msra.mxu0 0.0
      %2138 = vmatprep.subr.mxu0 0.0
      %2139 = vmatpush1.msra.mxu0 0.0
      %2140 = vmatprep.mubr.f32.mxu0 0.0
      %2141 = vmatmul.mubr.f32.gmra.mrb[0].mxu0 %v1955
      %v2142 = vpop.f32.mrb[0].mxu0
      %v2143 = vadd.f32 0.0, %v2142
      %v2144 = vpop.f32.mrb[0].mxu0
      %v2145 = vadd.f32 0.0, %v2144
      %2146 = vdwg.mxu0
      %2147 = vmatprep.subr.mxu0 %v1927
      %2148 = vmatpush1.msra.mxu0 %v1926
      %2149 = vmatprep.subr.mxu0 %v1973
      %2150 = vmatpush1.msra.mxu0 %v1970
      %2151 = vmatprep.subr.mxu0 0.0
      %2152 = vmatpush1.msra.mxu0 0.0
      %2153 = vmatprep.subr.mxu0 0.0
      %2154 = vmatpush1.msra.mxu0 0.0
      %2155 = vmatprep.subr.mxu0 0.0
      %2156 = vmatpush1.msra.mxu0 0.0
      %2157 = vmatprep.subr.mxu0 0.0
      %2158 = vmatpush1.msra.mxu0 0.0
      %2159 = vmatprep.subr.mxu0 0.0
      %2160 = vmatpush1.msra.mxu0 0.0
      %2161 = vmatprep.subr.mxu0 0.0
      %2162 = vmatpush1.msra.mxu0 0.0
      %2163 = vmatprep.subr.mxu0 0.0
      %2164 = vmatpush1.msra.mxu0 0.0
      %2165 = vmatprep.subr.mxu0 0.0
      %2166 = vmatpush1.msra.mxu0 0.0
      %2167 = vmatprep.subr.mxu0 0.0
      %2168 = vmatpush1.msra.mxu0 0.0
      %2169 = vmatprep.subr.mxu0 0.0
      %2170 = vmatpush1.msra.mxu0 0.0
      %2171 = vmatprep.subr.mxu0 0.0
      %2172 = vmatpush1.msra.mxu0 0.0
      %2173 = vmatprep.subr.mxu0 0.0
      %2174 = vmatpush1.msra.mxu0 0.0
      %2175 = vmatprep.subr.mxu0 0.0
      %2176 = vmatpush1.msra.mxu0 0.0
      %2177 = vmatprep.subr.mxu0 0.0
      %2178 = vmatpush1.msra.mxu0 0.0
      %2179 = vmatprep.subr.mxu0 0.0
      %2180 = vmatpush1.msra.mxu0 0.0
      %2181 = vmatprep.subr.mxu0 0.0
      %2182 = vmatpush1.msra.mxu0 0.0
      %2183 = vmatprep.subr.mxu0 0.0
      %2184 = vmatpush1.msra.mxu0 0.0
      %2185 = vmatprep.subr.mxu0 0.0
      %2186 = vmatpush1.msra.mxu0 0.0
      %2187 = vmatprep.subr.mxu0 0.0
      %2188 = vmatpush1.msra.mxu0 0.0
      %2189 = vmatprep.subr.mxu0 0.0
      %2190 = vmatpush1.msra.mxu0 0.0
      %2191 = vmatprep.subr.mxu0 0.0
      %2192 = vmatpush1.msra.mxu0 0.0
      %2193 = vmatprep.subr.mxu0 0.0
      %2194 = vmatpush1.msra.mxu0 0.0
      %2195 = vmatprep.subr.mxu0 0.0
      %2196 = vmatpush1.msra.mxu0 0.0
      %2197 = vmatprep.subr.mxu0 0.0
      %2198 = vmatpush1.msra.mxu0 0.0
      %2199 = vmatprep.subr.mxu0 0.0
      %2200 = vmatpush1.msra.mxu0 0.0
      %2201 = vmatprep.subr.mxu0 0.0
      %2202 = vmatpush1.msra.mxu0 0.0
      %2203 = vmatprep.subr.mxu0 0.0
      %2204 = vmatpush1.msra.mxu0 0.0
      %2205 = vmatprep.subr.mxu0 0.0
      %2206 = vmatpush1.msra.mxu0 0.0
      %2207 = vmatprep.subr.mxu0 0.0
      %2208 = vmatpush1.msra.mxu0 0.0
      %2209 = vmatprep.subr.mxu0 0.0
      %2210 = vmatpush1.msra.mxu0 0.0
      %2211 = vmatprep.mubr.f32.mxu0 0.0
      %2212 = vmatmul.mubr.f32.gmra.mrb[0].mxu0 %v1955
      %v2213 = vpop.f32.mrb[0].mxu0
      %v2214 = vadd.f32 0.0, %v2213
      %v2215 = vpop.f32.mrb[0].mxu0
      %v2216 = vadd.f32 0.0, %v2215
      %2217 = vdwg.mxu0
      %2218 = vmatprep.subr.mxu0 %v1929
      %2219 = vmatpush1.msra.mxu0 %v1928
      %2220 = vmatprep.subr.mxu0 %v1979
      %2221 = vmatpush1.msra.mxu0 %v1976
      %2222 = vmatprep.subr.mxu0 0.0
      %2223 = vmatpush1.msra.mxu0 0.0
      %2224 = vmatprep.subr.mxu0 0.0
      %2225 = vmatpush1.msra.mxu0 0.0
      %2226 = vmatprep.subr.mxu0 0.0
      %2227 = vmatpush1.msra.mxu0 0.0
      %2228 = vmatprep.subr.mxu0 0.0
      %2229 = vmatpush1.msra.mxu0 0.0
      %2230 = vmatprep.subr.mxu0 0.0
      %2231 = vmatpush1.msra.mxu0 0.0
      %2232 = vmatprep.subr.mxu0 0.0
      %2233 = vmatpush1.msra.mxu0 0.0
      %2234 = vmatprep.subr.mxu0 0.0
      %2235 = vmatpush1.msra.mxu0 0.0
      %2236 = vmatprep.subr.mxu0 0.0
      %2237 = vmatpush1.msra.mxu0 0.0
      %2238 = vmatprep.subr.mxu0 0.0
      %2239 = vmatpush1.msra.mxu0 0.0
      %2240 = vmatprep.subr.mxu0 0.0
      %2241 = vmatpush1.msra.mxu0 0.0
      %2242 = vmatprep.subr.mxu0 0.0
      %2243 = vmatpush1.msra.mxu0 0.0
      %2244 = vmatprep.subr.mxu0 0.0
      %2245 = vmatpush1.msra.mxu0 0.0
      %2246 = vmatprep.subr.mxu0 0.0
      %2247 = vmatpush1.msra.mxu0 0.0
      %2248 = vmatprep.subr.mxu0 0.0
      %2249 = vmatpush1.msra.mxu0 0.0
      %2250 = vmatprep.subr.mxu0 0.0
      %2251 = vmatpush1.msra.mxu0 0.0
      %2252 = vmatprep.subr.mxu0 0.0
      %2253 = vmatpush1.msra.mxu0 0.0
      %2254 = vmatprep.subr.mxu0 0.0
      %2255 = vmatpush1.msra.mxu0 0.0
      %2256 = vmatprep.subr.mxu0 0.0
      %2257 = vmatpush1.msra.mxu0 0.0
      %2258 = vmatprep.subr.mxu0 0.0
      %2259 = vmatpush1.msra.mxu0 0.0
      %2260 = vmatprep.subr.mxu0 0.0
      %2261 = vmatpush1.msra.mxu0 0.0
      %2262 = vmatprep.subr.mxu0 0.0
      %2263 = vmatpush1.msra.mxu0 0.0
      %2264 = vmatprep.subr.mxu0 0.0
      %2265 = vmatpush1.msra.mxu0 0.0
      %2266 = vmatprep.subr.mxu0 0.0
      %2267 = vmatpush1.msra.mxu0 0.0
      %2268 = vmatprep.subr.mxu0 0.0
      %2269 = vmatpush1.msra.mxu0 0.0
      %2270 = vmatprep.subr.mxu0 0.0
      %2271 = vmatpush1.msra.mxu0 0.0
      %2272 = vmatprep.subr.mxu0 0.0
      %2273 = vmatpush1.msra.mxu0 0.0
      %2274 = vmatprep.subr.mxu0 0.0
      %2275 = vmatpush1.msra.mxu0 0.0
      %2276 = vmatprep.subr.mxu0 0.0
      %2277 = vmatpush1.msra.mxu0 0.0
      %2278 = vmatprep.subr.mxu0 0.0
      %2279 = vmatpush1.msra.mxu0 0.0
      %2280 = vmatprep.subr.mxu0 0.0
      %2281 = vmatpush1.msra.mxu0 0.0
      %2282 = vmatprep.mubr.f32.mxu0 0.0
      %2283 = vmatmul.mubr.f32.gmra.mrb[0].mxu0 %v1955
      %v2284 = vpop.f32.mrb[0].mxu0
      %v2285 = vadd.f32 0.0, %v2284
      %v2286 = vpop.f32.mrb[0].mxu0
      %v2287 = vadd.f32 0.0, %v2286
      %2288 = vdwg.mxu0
      %2289 = vmatprep.subr.mxu0 %v1931
      %2290 = vmatpush1.msra.mxu0 %v1930
      %2291 = vmatprep.subr.mxu0 %v1985
      %2292 = vmatpush1.msra.mxu0 %v1982
      %2293 = vmatprep.subr.mxu0 0.0
      %2294 = vmatpush1.msra.mxu0 0.0
      %2295 = vmatprep.subr.mxu0 0.0
      %2296 = vmatpush1.msra.mxu0 0.0
      %2297 = vmatprep.subr.mxu0 0.0
      %2298 = vmatpush1.msra.mxu0 0.0
      %2299 = vmatprep.subr.mxu0 0.0
      %2300 = vmatpush1.msra.mxu0 0.0
      %2301 = vmatprep.subr.mxu0 0.0
      %2302 = vmatpush1.msra.mxu0 0.0
      %2303 = vmatprep.subr.mxu0 0.0
      %2304 = vmatpush1.msra.mxu0 0.0
      %2305 = vmatprep.subr.mxu0 0.0
      %2306 = vmatpush1.msra.mxu0 0.0
      %2307 = vmatprep.subr.mxu0 0.0
      %2308 = vmatpush1.msra.mxu0 0.0
      %2309 = vmatprep.subr.mxu0 0.0
      %2310 = vmatpush1.msra.mxu0 0.0
      %2311 = vmatprep.subr.mxu0 0.0
      %2312 = vmatpush1.msra.mxu0 0.0
      %2313 = vmatprep.subr.mxu0 0.0
      %2314 = vmatpush1.msra.mxu0 0.0
      %2315 = vmatprep.subr.mxu0 0.0
      %2316 = vmatpush1.msra.mxu0 0.0
      %2317 = vmatprep.subr.mxu0 0.0
      %2318 = vmatpush1.msra.mxu0 0.0
      %2319 = vmatprep.subr.mxu0 0.0
      %2320 = vmatpush1.msra.mxu0 0.0
      %2321 = vmatprep.subr.mxu0 0.0
      %2322 = vmatpush1.msra.mxu0 0.0
      %2323 = vmatprep.subr.mxu0 0.0
      %2324 = vmatpush1.msra.mxu0 0.0
      %2325 = vmatprep.subr.mxu0 0.0
      %2326 = vmatpush1.msra.mxu0 0.0
      %2327 = vmatprep.subr.mxu0 0.0
      %2328 = vmatpush1.msra.mxu0 0.0
      %2329 = vmatprep.subr.mxu0 0.0
      %2330 = vmatpush1.msra.mxu0 0.0
      %2331 = vmatprep.subr.mxu0 0.0
      %2332 = vmatpush1.msra.mxu0 0.0
      %2333 = vmatprep.subr.mxu0 0.0
      %2334 = vmatpush1.msra.mxu0 0.0
      %2335 = vmatprep.subr.mxu0 0.0
      %2336 = vmatpush1.msra.mxu0 0.0
      %2337 = vmatprep.subr.mxu0 0.0
      %2338 = vmatpush1.msra.mxu0 0.0
      %2339 = vmatprep.subr.mxu0 0.0
      %2340 = vmatpush1.msra.mxu0 0.0
      %2341 = vmatprep.subr.mxu0 0.0
      %2342 = vmatpush1.msra.mxu0 0.0
      %2343 = vmatprep.subr.mxu0 0.0
      %2344 = vmatpush1.msra.mxu0 0.0
      %2345 = vmatprep.subr.mxu0 0.0
      %2346 = vmatpush1.msra.mxu0 0.0
      %2347 = vmatprep.subr.mxu0 0.0
      %2348 = vmatpush1.msra.mxu0 0.0
      %2349 = vmatprep.subr.mxu0 0.0
      %2350 = vmatpush1.msra.mxu0 0.0
      %2351 = vmatprep.subr.mxu0 0.0
      %2352 = vmatpush1.msra.mxu0 0.0
      %2353 = vmatprep.mubr.f32.mxu0 0.0
      %2354 = vmatmul.mubr.f32.gmra.mrb[0].mxu0 %v1955
      %v2355 = vpop.f32.mrb[0].mxu0
      %v2356 = vadd.f32 0.0, %v2355
      %v2357 = vpop.f32.mrb[0].mxu0
      %v2358 = vadd.f32 0.0, %v2357
      %2359 = vdwg.mxu0
      %2360 = vmatprep.subr.mxu0 %v1933
      %2361 = vmatpush1.msra.mxu0 %v1932
      %2362 = vmatprep.subr.mxu0 %v1991
      %2363 = vmatpush1.msra.mxu0 %v1988
      %2364 = vmatprep.subr.mxu0 0.0
      %2365 = vmatpush1.msra.mxu0 0.0
      %2366 = vmatprep.subr.mxu0 0.0
      %2367 = vmatpush1.msra.mxu0 0.0
      %2368 = vmatprep.subr.mxu0 0.0
      %2369 = vmatpush1.msra.mxu0 0.0
      %2370 = vmatprep.subr.mxu0 0.0
      %2371 = vmatpush1.msra.mxu0 0.0
      %2372 = vmatprep.subr.mxu0 0.0
      %2373 = vmatpush1.msra.mxu0 0.0
      %2374 = vmatprep.subr.mxu0 0.0
      %2375 = vmatpush1.msra.mxu0 0.0
      %2376 = vmatprep.subr.mxu0 0.0
      %2377 = vmatpush1.msra.mxu0 0.0
      %2378 = vmatprep.subr.mxu0 0.0
      %2379 = vmatpush1.msra.mxu0 0.0
      %2380 = vmatprep.subr.mxu0 0.0
      %2381 = vmatpush1.msra.mxu0 0.0
      %2382 = vmatprep.subr.mxu0 0.0
      %2383 = vmatpush1.msra.mxu0 0.0
      %2384 = vmatprep.subr.mxu0 0.0
      %2385 = vmatpush1.msra.mxu0 0.0
      %2386 = vmatprep.subr.mxu0 0.0
      %2387 = vmatpush1.msra.mxu0 0.0
      %2388 = vmatprep.subr.mxu0 0.0
      %2389 = vmatpush1.msra.mxu0 0.0
      %2390 = vmatprep.subr.mxu0 0.0
      %2391 = vmatpush1.msra.mxu0 0.0
      %2392 = vmatprep.subr.mxu0 0.0
      %2393 = vmatpush1.msra.mxu0 0.0
      %2394 = vmatprep.subr.mxu0 0.0
      %2395 = vmatpush1.msra.mxu0 0.0
      %2396 = vmatprep.subr.mxu0 0.0
      %2397 = vmatpush1.msra.mxu0 0.0
      %2398 = vmatprep.subr.mxu0 0.0
      %2399 = vmatpush1.msra.mxu0 0.0
      %2400 = vmatprep.subr.mxu0 0.0
      %2401 = vmatpush1.msra.mxu0 0.0
      %2402 = vmatprep.subr.mxu0 0.0
      %2403 = vmatpush1.msra.mxu0 0.0
      %2404 = vmatprep.subr.mxu0 0.0
      %2405 = vmatpush1.msra.mxu0 0.0
      %2406 = vmatprep.subr.mxu0 0.0
      %2407 = vmatpush1.msra.mxu0 0.0
      %2408 = vmatprep.subr.mxu0 0.0
      %2409 = vmatpush1.msra.mxu0 0.0
      %2410 = vmatprep.subr.mxu0 0.0
      %2411 = vmatpush1.msra.mxu0 0.0
      %2412 = vmatprep.subr.mxu0 0.0
      %2413 = vmatpush1.msra.mxu0 0.0
      %2414 = vmatprep.subr.mxu0 0.0
      %2415 = vmatpush1.msra.mxu0 0.0
      %2416 = vmatprep.subr.mxu0 0.0
      %2417 = vmatpush1.msra.mxu0 0.0
      %2418 = vmatprep.subr.mxu0 0.0
      %2419 = vmatpush1.msra.mxu0 0.0
      %2420 = vmatprep.subr.mxu0 0.0
      %2421 = vmatpush1.msra.mxu0 0.0
      %2422 = vmatprep.subr.mxu0 0.0
      %2423 = vmatpush1.msra.mxu0 0.0
      %2424 = vmatprep.mubr.f32.mxu0 0.0
      %2425 = vmatmul.mubr.f32.gmra.mrb[0].mxu0 %v1955
      %v2426 = vpop.f32.mrb[0].mxu0
      %v2427 = vadd.f32 0.0, %v2426
      %v2428 = vpop.f32.mrb[0].mxu0
      %v2429 = vadd.f32 0.0, %v2428
      %2430 = vdwg.mxu0
      %2431 = vmatprep.subr.mxu0 %v1935
      %2432 = vmatpush1.msra.mxu0 %v1934
      %2433 = vmatprep.subr.mxu0 %v1997
      %2434 = vmatpush1.msra.mxu0 %v1994
      %2435 = vmatprep.subr.mxu0 0.0
      %2436 = vmatpush1.msra.mxu0 0.0
      %2437 = vmatprep.subr.mxu0 0.0
      %2438 = vmatpush1.msra.mxu0 0.0
      %2439 = vmatprep.subr.mxu0 0.0
      %2440 = vmatpush1.msra.mxu0 0.0
      %2441 = vmatprep.subr.mxu0 0.0
      %2442 = vmatpush1.msra.mxu0 0.0
      %2443 = vmatprep.subr.mxu0 0.0
      %2444 = vmatpush1.msra.mxu0 0.0
      %2445 = vmatprep.subr.mxu0 0.0
      %2446 = vmatpush1.msra.mxu0 0.0
      %2447 = vmatprep.subr.mxu0 0.0
      %2448 = vmatpush1.msra.mxu0 0.0
      %2449 = vmatprep.subr.mxu0 0.0
      %2450 = vmatpush1.msra.mxu0 0.0
      %2451 = vmatprep.subr.mxu0 0.0
      %2452 = vmatpush1.msra.mxu0 0.0
      %2453 = vmatprep.subr.mxu0 0.0
      %2454 = vmatpush1.msra.mxu0 0.0
      %2455 = vmatprep.subr.mxu0 0.0
      %2456 = vmatpush1.msra.mxu0 0.0
      %2457 = vmatprep.subr.mxu0 0.0
      %2458 = vmatpush1.msra.mxu0 0.0
      %2459 = vmatprep.subr.mxu0 0.0
      %2460 = vmatpush1.msra.mxu0 0.0
      %2461 = vmatprep.subr.mxu0 0.0
      %2462 = vmatpush1.msra.mxu0 0.0
      %2463 = vmatprep.subr.mxu0 0.0
      %2464 = vmatpush1.msra.mxu0 0.0
      %2465 = vmatprep.subr.mxu0 0.0
      %2466 = vmatpush1.msra.mxu0 0.0
      %2467 = vmatprep.subr.mxu0 0.0
      %2468 = vmatpush1.msra.mxu0 0.0
      %2469 = vmatprep.subr.mxu0 0.0
      %2470 = vmatpush1.msra.mxu0 0.0
      %2471 = vmatprep.subr.mxu0 0.0
      %2472 = vmatpush1.msra.mxu0 0.0
      %2473 = vmatprep.subr.mxu0 0.0
      %2474 = vmatpush1.msra.mxu0 0.0
      %2475 = vmatprep.subr.mxu0 0.0
      %2476 = vmatpush1.msra.mxu0 0.0
      %2477 = vmatprep.subr.mxu0 0.0
      %2478 = vmatpush1.msra.mxu0 0.0
      %2479 = vmatprep.subr.mxu0 0.0
      %2480 = vmatpush1.msra.mxu0 0.0
      %2481 = vmatprep.subr.mxu0 0.0
      %2482 = vmatpush1.msra.mxu0 0.0
      %2483 = vmatprep.subr.mxu0 0.0
      %2484 = vmatpush1.msra.mxu0 0.0
      %2485 = vmatprep.subr.mxu0 0.0
      %2486 = vmatpush1.msra.mxu0 0.0
      %2487 = vmatprep.subr.mxu0 0.0
      %2488 = vmatpush1.msra.mxu0 0.0
      %2489 = vmatprep.subr.mxu0 0.0
      %2490 = vmatpush1.msra.mxu0 0.0
      %2491 = vmatprep.subr.mxu0 0.0
      %2492 = vmatpush1.msra.mxu0 0.0
      %2493 = vmatprep.subr.mxu0 0.0
      %2494 = vmatpush1.msra.mxu0 0.0
      %2495 = vmatprep.mubr.f32.mxu0 0.0
      %2496 = vmatmul.mubr.f32.gmra.mrb[0].mxu0 %v1955
      %v2497 = vpop.f32.mrb[0].mxu0
      %v2498 = vadd.f32 0.0, %v2497
      %v2499 = vpop.f32.mrb[0].mxu0
      %v2500 = vadd.f32 0.0, %v2499
      %2501 = vdwg.mxu0
      %2502 = vmatprep.subr.mxu0 %v1937
      %2503 = vmatpush1.msra.mxu0 %v1936
      %2504 = vmatprep.subr.mxu0 %v2003
      %2505 = vmatpush1.msra.mxu0 %v2000
      %2506 = vmatprep.subr.mxu0 0.0
      %2507 = vmatpush1.msra.mxu0 0.0
      %2508 = vmatprep.subr.mxu0 0.0
      %2509 = vmatpush1.msra.mxu0 0.0
      %2510 = vmatprep.subr.mxu0 0.0
      %2511 = vmatpush1.msra.mxu0 0.0
      %2512 = vmatprep.subr.mxu0 0.0
      %2513 = vmatpush1.msra.mxu0 0.0
      %2514 = vmatprep.subr.mxu0 0.0
      %2515 = vmatpush1.msra.mxu0 0.0
      %2516 = vmatprep.subr.mxu0 0.0
      %2517 = vmatpush1.msra.mxu0 0.0
      %2518 = vmatprep.subr.mxu0 0.0
      %2519 = vmatpush1.msra.mxu0 0.0
      %2520 = vmatprep.subr.mxu0 0.0
      %2521 = vmatpush1.msra.mxu0 0.0
      %2522 = vmatprep.subr.mxu0 0.0
      %2523 = vmatpush1.msra.mxu0 0.0
      %2524 = vmatprep.subr.mxu0 0.0
      %2525 = vmatpush1.msra.mxu0 0.0
      %2526 = vmatprep.subr.mxu0 0.0
      %2527 = vmatpush1.msra.mxu0 0.0
      %2528 = vmatprep.subr.mxu0 0.0
      %2529 = vmatpush1.msra.mxu0 0.0
      %2530 = vmatprep.subr.mxu0 0.0
      %2531 = vmatpush1.msra.mxu0 0.0
      %2532 = vmatprep.subr.mxu0 0.0
      %2533 = vmatpush1.msra.mxu0 0.0
      %2534 = vmatprep.subr.mxu0 0.0
      %2535 = vmatpush1.msra.mxu0 0.0
      %2536 = vmatprep.subr.mxu0 0.0
      %2537 = vmatpush1.msra.mxu0 0.0
      %2538 = vmatprep.subr.mxu0 0.0
      %2539 = vmatpush1.msra.mxu0 0.0
      %2540 = vmatprep.subr.mxu0 0.0
      %2541 = vmatpush1.msra.mxu0 0.0
      %2542 = vmatprep.subr.mxu0 0.0
      %2543 = vmatpush1.msra.mxu0 0.0
      %2544 = vmatprep.subr.mxu0 0.0
      %2545 = vmatpush1.msra.mxu0 0.0
      %2546 = vmatprep.subr.mxu0 0.0
      %2547 = vmatpush1.msra.mxu0 0.0
      %2548 = vmatprep.subr.mxu0 0.0
      %2549 = vmatpush1.msra.mxu0 0.0
      %2550 = vmatprep.subr.mxu0 0.0
      %2551 = vmatpush1.msra.mxu0 0.0
      %2552 = vmatprep.subr.mxu0 0.0
      %2553 = vmatpush1.msra.mxu0 0.0
      %2554 = vmatprep.subr.mxu0 0.0
      %2555 = vmatpush1.msra.mxu0 0.0
      %2556 = vmatprep.subr.mxu0 0.0
      %2557 = vmatpush1.msra.mxu0 0.0
      %2558 = vmatprep.subr.mxu0 0.0
      %2559 = vmatpush1.msra.mxu0 0.0
      %2560 = vmatprep.subr.mxu0 0.0
      %2561 = vmatpush1.msra.mxu0 0.0
      %2562 = vmatprep.subr.mxu0 0.0
      %2563 = vmatpush1.msra.mxu0 0.0
      %2564 = vmatprep.subr.mxu0 0.0
      %2565 = vmatpush1.msra.mxu0 0.0
      %2566 = vmatprep.mubr.f32.mxu0 0.0
      %2567 = vmatmul.mubr.f32.gmra.mrb[0].mxu0 %v1955
      %v2568 = vpop.f32.mrb[0].mxu0
      %v2569 = vadd.f32 0.0, %v2568
      %v2570 = vpop.f32.mrb[0].mxu0
      %v2571 = vadd.f32 0.0, %v2570
      %2572 = vdwg.mxu0
      %2573 = vst [vmem:[%s143 + $0x10] sm:$0xff] %v2072
      %2574 = vst [vmem:[%s143 + $0x30] sm:$0xff] %v2074
      %2575 = vst [vmem:[%s143 + $0x50] sm:$0xff] %v2143
      %2576 = vst [vmem:[%s143 + $0x70] sm:$0xff] %v2145
      %2577 = vst [vmem:[%s143 + $0x90] sm:$0xff] %v2214
      %2578 = vst [vmem:[%s143 + $0xb0] sm:$0xff] %v2216
      %2579 = vst [vmem:[%s143 + $0xd0] sm:$0xff] %v2285
      %2580 = vst [vmem:[%s143 + $0xf0] sm:$0xff] %v2287
      %2581 = vst [vmem:[%s143 + $0x110] sm:$0xff] %v2356
      %2582 = vst [vmem:[%s143 + $0x130] sm:$0xff] %v2358
      %2583 = vst [vmem:[%s143 + $0x150] sm:$0xff] %v2427
      %2584 = vst [vmem:[%s143 + $0x170] sm:$0xff] %v2429
      %2585 = vst [vmem:[%s143 + $0x190] sm:$0xff] %v2498
      %2586 = vst [vmem:[%s143 + $0x1b0] sm:$0xff] %v2500
      %2587 = vst [vmem:[%s143 + $0x1d0] sm:$0xff] %v2569
      %2588 = vst [vmem:[%s143 + $0x1f0] sm:$0xff] %v2571
      %v2589 = vld [vmem:[%s138 + $0x4] sm:$0xff]
      %v2590 = vld [vmem:[%s138 + $0xc] sm:$0xff]
      %v2591 = vld [vmem:[%s138 + $0x14] sm:$0xff]
      %v2592 = vld [vmem:[%s138 + $0x1c] sm:$0xff]
      %v2593 = vld [vmem:[%s138 + $0x24] sm:$0xff]
      %v2594 = vld [vmem:[%s138 + $0x2c] sm:$0xff]
      %v2595 = vld [vmem:[%s138 + $0x34] sm:$0xff]
      %v2596 = vld [vmem:[%s138 + $0x3c] sm:$0xff]
      %v2597 = vld [vmem:[%s138 + $0x44] sm:$0xf]
      %v2607 = vcombine.high %v2589, %v2589
      %v2608 = vcombine.high %v2590, %v2590
      %v2609 = vcombine.high %v2591, %v2591
      %v2610 = vcombine.high %v2592, %v2592
      %v2611 = vcombine.high %v2593, %v2593
      %v2612 = vcombine.high %v2594, %v2594
      %v2613 = vcombine.high %v2595, %v2595
      %v2614 = vcombine.high %v2596, %v2596
      %v2615 = vrot.slane %v2589, 7
      %v2616 = vrot.slane %v2607, 7
      %v2617 = vrot.slane %v2590, 7
      %v2618 = vrot.slane %v2608, 7
      %v2619 = vrot.slane %v2591, 7
      %v2620 = vrot.slane %v2609, 7
      %v2621 = vrot.slane %v2592, 7
      %v2622 = vrot.slane %v2610, 7
      %v2623 = vrot.slane %v2593, 7
      %v2624 = vrot.slane %v2611, 7
      %v2625 = vrot.slane %v2594, 7
      %v2626 = vrot.slane %v2612, 7
      %v2627 = vrot.slane %v2595, 7
      %v2628 = vrot.slane %v2613, 7
      %v2629 = vrot.slane %v2596, 7
      %v2630 = vrot.slane %v2614, 7
      %v2631 = vrot.slane %v2597, 7
      %2632 = vrot.lane.b32.xlu0 %v2615, 127
      %v2633 = vpop.permute.xlu0 %2632
      %2634 = vrot.lane.b32.xlu0 %v2616, 127
      %v2635 = vpop.permute.xlu0 %2634
      %2636 = vrot.lane.b32.xlu0 %v2617, 127
      %v2637 = vpop.permute.xlu0 %2636
      %2638 = vrot.lane.b32.xlu0 %v2618, 127
      %v2639 = vpop.permute.xlu0 %2638
      %2640 = vrot.lane.b32.xlu0 %v2619, 127
      %v2641 = vpop.permute.xlu0 %2640
      %2642 = vrot.lane.b32.xlu0 %v2620, 127
      %v2643 = vpop.permute.xlu0 %2642
      %2644 = vrot.lane.b32.xlu0 %v2621, 127
      %v2645 = vpop.permute.xlu0 %2644
      %2646 = vrot.lane.b32.xlu0 %v2622, 127
      %v2647 = vpop.permute.xlu0 %2646
      %2648 = vrot.lane.b32.xlu0 %v2623, 127
      %v2649 = vpop.permute.xlu0 %2648
      %2650 = vrot.lane.b32.xlu0 %v2624, 127
      %v2651 = vpop.permute.xlu0 %2650
      %2652 = vrot.lane.b32.xlu0 %v2625, 127
      %v2653 = vpop.permute.xlu0 %2652
      %2654 = vrot.lane.b32.xlu0 %v2626, 127
      %v2655 = vpop.permute.xlu0 %2654
      %2656 = vrot.lane.b32.xlu0 %v2627, 127
      %v2657 = vpop.permute.xlu0 %2656
      %2658 = vrot.lane.b32.xlu0 %v2628, 127
      %v2659 = vpop.permute.xlu0 %2658
      %2660 = vrot.lane.b32.xlu0 %v2629, 127
      %v2661 = vpop.permute.xlu0 %2660
      %2662 = vrot.lane.b32.xlu0 %v2630, 127
      %v2663 = vpop.permute.xlu0 %2662
      %2664 = vrot.lane.b32.xlu0 %v2631, 127
      %v2665 = vpop.permute.xlu0 %2664
      %v2666 = vsel %vm952, %v2633, %v2635
      %v2667 = vsel %vm952, %v2635, %v2637
      %v2668 = vsel %vm952, %v2637, %v2639
      %v2669 = vsel %vm952, %v2639, %v2641
      %v2670 = vsel %vm952, %v2641, %v2643
      %v2671 = vsel %vm952, %v2643, %v2645
      %v2672 = vsel %vm952, %v2645, %v2647
      %v2673 = vsel %vm952, %v2647, %v2649
      %v2674 = vsel %vm952, %v2649, %v2651
      %v2675 = vsel %vm952, %v2651, %v2653
      %v2676 = vsel %vm952, %v2653, %v2655
      %v2677 = vsel %vm952, %v2655, %v2657
      %v2678 = vsel %vm952, %v2657, %v2659
      %v2679 = vsel %vm952, %v2659, %v2661
      %v2680 = vsel %vm952, %v2661, %v2663
      %v2681 = vsel %vm952, %v2663, %v2665
      %2698 = vst [vmem:[#allocation2] sm:$0x1e] %v2666
      %2699 = vst [vmem:[#allocation2 + $0x8] sm:$0x1e] %v2667
      %2700 = vst [vmem:[#allocation2 + $0x10] sm:$0x1e] %v2668
      %2701 = vst [vmem:[#allocation2 + $0x18] sm:$0x1e] %v2669
      %2702 = vst [vmem:[#allocation2 + $0x20] sm:$0x1e] %v2670
      %2703 = vst [vmem:[#allocation2 + $0x28] sm:$0x1e] %v2671
      %2704 = vst [vmem:[#allocation2 + $0x30] sm:$0x1e] %v2672
      %2705 = vst [vmem:[#allocation2 + $0x38] sm:$0x1e] %v2673
      %2706 = vst [vmem:[#allocation2 + $0x40] sm:$0x1e] %v2674
      %2707 = vst [vmem:[#allocation2 + $0x48] sm:$0x1e] %v2675
      %2708 = vst [vmem:[#allocation2 + $0x50] sm:$0x1e] %v2676
      %2709 = vst [vmem:[#allocation2 + $0x58] sm:$0x1e] %v2677
      %2710 = vst [vmem:[#allocation2 + $0x60] sm:$0x1e] %v2678
      %2711 = vst [vmem:[#allocation2 + $0x68] sm:$0x1e] %v2679
      %2712 = vst [vmem:[#allocation2 + $0x70] sm:$0x1e] %v2680
      %2713 = vst [vmem:[#allocation2 + $0x78] sm:$0x1e] %v2681
      %v2714 = vld [vmem:[%s138 + $0x4] sm:$0xff]
      %v2715 = vld [vmem:[%s138 + $0xc] sm:$0xff]
      %v2716 = vld [vmem:[%s138 + $0x14] sm:$0xff]
      %v2717 = vld [vmem:[%s138 + $0x1c] sm:$0xff]
      %v2718 = vld [vmem:[%s138 + $0x24] sm:$0xff]
      %v2719 = vld [vmem:[%s138 + $0x2c] sm:$0xff]
      %v2720 = vld [vmem:[%s138 + $0x34] sm:$0xff]
      %v2721 = vld [vmem:[%s138 + $0x3c] sm:$0xff]
      %v2730 = vcombine.high %v2714, %v2714
      %v2731 = vcombine.high %v2715, %v2715
      %v2732 = vcombine.high %v2716, %v2716
      %v2733 = vcombine.high %v2717, %v2717
      %v2734 = vcombine.high %v2718, %v2718
      %v2735 = vcombine.high %v2719, %v2719
      %v2736 = vcombine.high %v2720, %v2720
      %v2737 = vcombine.high %v2721, %v2721
      %v2738 = vrot.slane %v2714, 3
      %v2739 = vrot.slane %v2730, 3
      %v2740 = vrot.slane %v2715, 3
      %v2741 = vrot.slane %v2731, 3
      %v2742 = vrot.slane %v2716, 3
      %v2743 = vrot.slane %v2732, 3
      %v2744 = vrot.slane %v2717, 3
      %v2745 = vrot.slane %v2733, 3
      %v2746 = vrot.slane %v2718, 3
      %v2747 = vrot.slane %v2734, 3
      %v2748 = vrot.slane %v2719, 3
      %v2749 = vrot.slane %v2735, 3
      %v2750 = vrot.slane %v2720, 3
      %v2751 = vrot.slane %v2736, 3
      %v2752 = vrot.slane %v2721, 3
      %v2753 = vrot.slane %v2737, 3
      %2770 = vst [vmem:[#allocation2] sm:$0xe0] %v2738
      %2771 = vst [vmem:[#allocation2 + $0x8] sm:$0xe0] %v2739
      %2772 = vst [vmem:[#allocation2 + $0x10] sm:$0xe0] %v2740
      %2773 = vst [vmem:[#allocation2 + $0x18] sm:$0xe0] %v2741
      %2774 = vst [vmem:[#allocation2 + $0x20] sm:$0xe0] %v2742
      %2775 = vst [vmem:[#allocation2 + $0x28] sm:$0xe0] %v2743
      %2776 = vst [vmem:[#allocation2 + $0x30] sm:$0xe0] %v2744
      %2777 = vst [vmem:[#allocation2 + $0x38] sm:$0xe0] %v2745
      %2778 = vst [vmem:[#allocation2 + $0x40] sm:$0xe0] %v2746
      %2779 = vst [vmem:[#allocation2 + $0x48] sm:$0xe0] %v2747
      %2780 = vst [vmem:[#allocation2 + $0x50] sm:$0xe0] %v2748
      %2781 = vst [vmem:[#allocation2 + $0x58] sm:$0xe0] %v2749
      %2782 = vst [vmem:[#allocation2 + $0x60] sm:$0xe0] %v2750
      %2783 = vst [vmem:[#allocation2 + $0x68] sm:$0xe0] %v2751
      %2784 = vst [vmem:[#allocation2 + $0x70] sm:$0xe0] %v2752
      %2785 = vst [vmem:[#allocation2 + $0x78] sm:$0xe0] %v2753
      %2786 = vst [vmem:[#allocation2 + $0x80] sm:$0x1] %v2738
      %2787 = vst [vmem:[#allocation2 + $0x88] sm:$0x1] %v2739
      %2788 = vst [vmem:[#allocation2 + $0x90] sm:$0x1] %v2740
      %2789 = vst [vmem:[#allocation2 + $0x98] sm:$0x1] %v2741
      %2790 = vst [vmem:[#allocation2 + $0xa0] sm:$0x1] %v2742
      %2791 = vst [vmem:[#allocation2 + $0xa8] sm:$0x1] %v2743
      %2792 = vst [vmem:[#allocation2 + $0xb0] sm:$0x1] %v2744
      %2793 = vst [vmem:[#allocation2 + $0xb8] sm:$0x1] %v2745
      %2794 = vst [vmem:[#allocation2 + $0xc0] sm:$0x1] %v2746
      %2795 = vst [vmem:[#allocation2 + $0xc8] sm:$0x1] %v2747
      %2796 = vst [vmem:[#allocation2 + $0xd0] sm:$0x1] %v2748
      %2797 = vst [vmem:[#allocation2 + $0xd8] sm:$0x1] %v2749
      %2798 = vst [vmem:[#allocation2 + $0xe0] sm:$0x1] %v2750
      %2799 = vst [vmem:[#allocation2 + $0xe8] sm:$0x1] %v2751
      %2800 = vst [vmem:[#allocation2 + $0xf0] sm:$0x1] %v2752
      %2801 = vst [vmem:[#allocation2 + $0xf8] sm:$0x1] %v2753
      %v2802 = vld [vmem:[%s138] sm:$0xff]
      %v2803 = vld [vmem:[%s138 + $0x8] sm:$0xff]
      %v2804 = vld [vmem:[%s138 + $0x10] sm:$0xff]
      %v2805 = vld [vmem:[%s138 + $0x18] sm:$0xff]
      %v2806 = vld [vmem:[%s138 + $0x20] sm:$0xff]
      %v2807 = vld [vmem:[%s138 + $0x28] sm:$0xff]
      %v2808 = vld [vmem:[%s138 + $0x30] sm:$0xff]
      %v2809 = vld [vmem:[%s138 + $0x38] sm:$0xff]
      %v2810 = vld [vmem:[%s138 + $0x40] sm:$0xf]
      %v2820 = vcombine.high %v2802, %v2802
      %v2821 = vcombine.high %v2803, %v2803
      %v2822 = vcombine.high %v2804, %v2804
      %v2823 = vcombine.high %v2805, %v2805
      %v2824 = vcombine.high %v2806, %v2806
      %v2825 = vcombine.high %v2807, %v2807
      %v2826 = vcombine.high %v2808, %v2808
      %v2827 = vcombine.high %v2809, %v2809
      %v2828 = vrot.slane %v2802, 7
      %v2829 = vrot.slane %v2820, 7
      %v2830 = vrot.slane %v2803, 7
      %v2831 = vrot.slane %v2821, 7
      %v2832 = vrot.slane %v2804, 7
      %v2833 = vrot.slane %v2822, 7
      %v2834 = vrot.slane %v2805, 7
      %v2835 = vrot.slane %v2823, 7
      %v2836 = vrot.slane %v2806, 7
      %v2837 = vrot.slane %v2824, 7
      %v2838 = vrot.slane %v2807, 7
      %v2839 = vrot.slane %v2825, 7
      %v2840 = vrot.slane %v2808, 7
      %v2841 = vrot.slane %v2826, 7
      %v2842 = vrot.slane %v2809, 7
      %v2843 = vrot.slane %v2827, 7
      %v2844 = vrot.slane %v2810, 7
      %2845 = vrot.lane.b32.xlu0 %v2828, 127
      %v2846 = vpop.permute.xlu0 %2845
      %2847 = vrot.lane.b32.xlu0 %v2829, 127
      %v2848 = vpop.permute.xlu0 %2847
      %2849 = vrot.lane.b32.xlu0 %v2830, 127
      %v2850 = vpop.permute.xlu0 %2849
      %2851 = vrot.lane.b32.xlu0 %v2831, 127
      %v2852 = vpop.permute.xlu0 %2851
      %2853 = vrot.lane.b32.xlu0 %v2832, 127
      %v2854 = vpop.permute.xlu0 %2853
      %2855 = vrot.lane.b32.xlu0 %v2833, 127
      %v2856 = vpop.permute.xlu0 %2855
      %2857 = vrot.lane.b32.xlu0 %v2834, 127
      %v2858 = vpop.permute.xlu0 %2857
      %2859 = vrot.lane.b32.xlu0 %v2835, 127
      %v2860 = vpop.permute.xlu0 %2859
      %2861 = vrot.lane.b32.xlu0 %v2836, 127
      %v2862 = vpop.permute.xlu0 %2861
      %2863 = vrot.lane.b32.xlu0 %v2837, 127
      %v2864 = vpop.permute.xlu0 %2863
      %2865 = vrot.lane.b32.xlu0 %v2838, 127
      %v2866 = vpop.permute.xlu0 %2865
      %2867 = vrot.lane.b32.xlu0 %v2839, 127
      %v2868 = vpop.permute.xlu0 %2867
      %2869 = vrot.lane.b32.xlu0 %v2840, 127
      %v2870 = vpop.permute.xlu0 %2869
      %2871 = vrot.lane.b32.xlu0 %v2841, 127
      %v2872 = vpop.permute.xlu0 %2871
      %2873 = vrot.lane.b32.xlu0 %v2842, 127
      %v2874 = vpop.permute.xlu0 %2873
      %2875 = vrot.lane.b32.xlu0 %v2843, 127
      %v2876 = vpop.permute.xlu0 %2875
      %2877 = vrot.lane.b32.xlu0 %v2844, 127
      %v2878 = vpop.permute.xlu0 %2877
      %v2879 = vsel %vm952, %v2846, %v2848
      %v2880 = vsel %vm952, %v2848, %v2850
      %v2881 = vsel %vm952, %v2850, %v2852
      %v2882 = vsel %vm952, %v2852, %v2854
      %v2883 = vsel %vm952, %v2854, %v2856
      %v2884 = vsel %vm952, %v2856, %v2858
      %v2885 = vsel %vm952, %v2858, %v2860
      %v2886 = vsel %vm952, %v2860, %v2862
      %v2887 = vsel %vm952, %v2862, %v2864
      %v2888 = vsel %vm952, %v2864, %v2866
      %v2889 = vsel %vm952, %v2866, %v2868
      %v2890 = vsel %vm952, %v2868, %v2870
      %v2891 = vsel %vm952, %v2870, %v2872
      %v2892 = vsel %vm952, %v2872, %v2874
      %v2893 = vsel %vm952, %v2874, %v2876
      %v2894 = vsel %vm952, %v2876, %v2878
      %2911 = vst [vmem:[#allocation2 + $0x80] sm:$0x1e] %v2879
      %2912 = vst [vmem:[#allocation2 + $0x88] sm:$0x1e] %v2880
      %2913 = vst [vmem:[#allocation2 + $0x90] sm:$0x1e] %v2881
      %2914 = vst [vmem:[#allocation2 + $0x98] sm:$0x1e] %v2882
      %2915 = vst [vmem:[#allocation2 + $0xa0] sm:$0x1e] %v2883
      %2916 = vst [vmem:[#allocation2 + $0xa8] sm:$0x1e] %v2884
      %2917 = vst [vmem:[#allocation2 + $0xb0] sm:$0x1e] %v2885
      %2918 = vst [vmem:[#allocation2 + $0xb8] sm:$0x1e] %v2886
      %2919 = vst [vmem:[#allocation2 + $0xc0] sm:$0x1e] %v2887
      %2920 = vst [vmem:[#allocation2 + $0xc8] sm:$0x1e] %v2888
      %2921 = vst [vmem:[#allocation2 + $0xd0] sm:$0x1e] %v2889
      %2922 = vst [vmem:[#allocation2 + $0xd8] sm:$0x1e] %v2890
      %2923 = vst [vmem:[#allocation2 + $0xe0] sm:$0x1e] %v2891
      %2924 = vst [vmem:[#allocation2 + $0xe8] sm:$0x1e] %v2892
      %2925 = vst [vmem:[#allocation2 + $0xf0] sm:$0x1e] %v2893
      %2926 = vst [vmem:[#allocation2 + $0xf8] sm:$0x1e] %v2894
      %v2927 = vld [vmem:[%s138] sm:$0xff]
      %v2928 = vld [vmem:[%s138 + $0x8] sm:$0xff]
      %v2929 = vld [vmem:[%s138 + $0x10] sm:$0xff]
      %v2930 = vld [vmem:[%s138 + $0x18] sm:$0xff]
      %v2931 = vld [vmem:[%s138 + $0x20] sm:$0xff]
      %v2932 = vld [vmem:[%s138 + $0x28] sm:$0xff]
      %v2933 = vld [vmem:[%s138 + $0x30] sm:$0xff]
      %v2934 = vld [vmem:[%s138 + $0x38] sm:$0xff]
      %v2943 = vcombine.high %v2927, %v2927
      %v2944 = vcombine.high %v2928, %v2928
      %v2945 = vcombine.high %v2929, %v2929
      %v2946 = vcombine.high %v2930, %v2930
      %v2947 = vcombine.high %v2931, %v2931
      %v2948 = vcombine.high %v2932, %v2932
      %v2949 = vcombine.high %v2933, %v2933
      %v2950 = vcombine.high %v2934, %v2934
      %v2951 = vrot.slane %v2927, 3
      %v2952 = vrot.slane %v2943, 3
      %v2953 = vrot.slane %v2928, 3
      %v2954 = vrot.slane %v2944, 3
      %v2955 = vrot.slane %v2929, 3
      %v2956 = vrot.slane %v2945, 3
      %v2957 = vrot.slane %v2930, 3
      %v2958 = vrot.slane %v2946, 3
      %v2959 = vrot.slane %v2931, 3
      %v2960 = vrot.slane %v2947, 3
      %v2961 = vrot.slane %v2932, 3
      %v2962 = vrot.slane %v2948, 3
      %v2963 = vrot.slane %v2933, 3
      %v2964 = vrot.slane %v2949, 3
      %v2965 = vrot.slane %v2934, 3
      %v2966 = vrot.slane %v2950, 3
      %2983 = vst [vmem:[#allocation2 + $0x80] sm:$0xe0] %v2951
      %2984 = vst [vmem:[#allocation2 + $0x88] sm:$0xe0] %v2952
      %2985 = vst [vmem:[#allocation2 + $0x90] sm:$0xe0] %v2953
      %2986 = vst [vmem:[#allocation2 + $0x98] sm:$0xe0] %v2954
      %2987 = vst [vmem:[#allocation2 + $0xa0] sm:$0xe0] %v2955
      %2988 = vst [vmem:[#allocation2 + $0xa8] sm:$0xe0] %v2956
      %2989 = vst [vmem:[#allocation2 + $0xb0] sm:$0xe0] %v2957
      %2990 = vst [vmem:[#allocation2 + $0xb8] sm:$0xe0] %v2958
      %2991 = vst [vmem:[#allocation2 + $0xc0] sm:$0xe0] %v2959
      %2992 = vst [vmem:[#allocation2 + $0xc8] sm:$0xe0] %v2960
      %2993 = vst [vmem:[#allocation2 + $0xd0] sm:$0xe0] %v2961
      %2994 = vst [vmem:[#allocation2 + $0xd8] sm:$0xe0] %v2962
      %2995 = vst [vmem:[#allocation2 + $0xe0] sm:$0xe0] %v2963
      %2996 = vst [vmem:[#allocation2 + $0xe8] sm:$0xe0] %v2964
      %2997 = vst [vmem:[#allocation2 + $0xf0] sm:$0xe0] %v2965
      %2998 = vst [vmem:[#allocation2 + $0xf8] sm:$0xe0] %v2966
      %2999 = vst [vmem:[#allocation2 + $0x100] sm:$0x1] %v2951
      %3000 = vst [vmem:[#allocation2 + $0x108] sm:$0x1] %v2952
      %3001 = vst [vmem:[#allocation2 + $0x110] sm:$0x1] %v2953
      %3002 = vst [vmem:[#allocation2 + $0x118] sm:$0x1] %v2954
      %3003 = vst [vmem:[#allocation2 + $0x120] sm:$0x1] %v2955
      %3004 = vst [vmem:[#allocation2 + $0x128] sm:$0x1] %v2956
      %3005 = vst [vmem:[#allocation2 + $0x130] sm:$0x1] %v2957
      %3006 = vst [vmem:[#allocation2 + $0x138] sm:$0x1] %v2958
      %3007 = vst [vmem:[#allocation2 + $0x140] sm:$0x1] %v2959
      %3008 = vst [vmem:[#allocation2 + $0x148] sm:$0x1] %v2960
      %3009 = vst [vmem:[#allocation2 + $0x150] sm:$0x1] %v2961
      %3010 = vst [vmem:[#allocation2 + $0x158] sm:$0x1] %v2962
      %3011 = vst [vmem:[#allocation2 + $0x160] sm:$0x1] %v2963
      %3012 = vst [vmem:[#allocation2 + $0x168] sm:$0x1] %v2964
      %3013 = vst [vmem:[#allocation2 + $0x170] sm:$0x1] %v2965
      %3014 = vst [vmem:[#allocation2 + $0x178] sm:$0x1] %v2966
      %s3015 = scalar_lea.vmem %s1, 24
      %v3016 = vld [vmem:[%s3015] sm:$0xff]
      %v3017 = vld [vmem:[#allocation2] sm:$0xff]
      %v3018 = vld [vmem:[#allocation2 + $0x8] sm:$0xff]
      %v3019 = vld [vmem:[#allocation2 + $0x10] sm:$0xff]
      %v3020 = vld [vmem:[#allocation2 + $0x18] sm:$0xff]
      %v3021 = vld [vmem:[#allocation2 + $0x20] sm:$0xff]
      %v3022 = vld [vmem:[#allocation2 + $0x28] sm:$0xff]
      %v3023 = vld [vmem:[#allocation2 + $0x30] sm:$0xff]
      %v3024 = vld [vmem:[#allocation2 + $0x38] sm:$0xff]
      %v3025 = vld [vmem:[#allocation2 + $0x40] sm:$0xff]
      %v3026 = vld [vmem:[#allocation2 + $0x48] sm:$0xff]
      %v3027 = vld [vmem:[#allocation2 + $0x50] sm:$0xff]
      %v3028 = vld [vmem:[#allocation2 + $0x58] sm:$0xff]
      %v3029 = vld [vmem:[#allocation2 + $0x60] sm:$0xff]
      %v3030 = vld [vmem:[#allocation2 + $0x68] sm:$0xff]
      %v3031 = vld [vmem:[#allocation2 + $0x70] sm:$0xff]
      %v3032 = vld [vmem:[#allocation2 + $0x78] sm:$0xff]
      %v3033 = vld [vmem:[#allocation2 + $0x80] sm:$0xff]
      %v3034 = vld [vmem:[#allocation2 + $0x88] sm:$0xff]
      %v3035 = vld [vmem:[#allocation2 + $0x90] sm:$0xff]
      %v3036 = vld [vmem:[#allocation2 + $0x98] sm:$0xff]
      %v3037 = vld [vmem:[#allocation2 + $0xa0] sm:$0xff]
      %v3038 = vld [vmem:[#allocation2 + $0xa8] sm:$0xff]
      %v3039 = vld [vmem:[#allocation2 + $0xb0] sm:$0xff]
      %v3040 = vld [vmem:[#allocation2 + $0xb8] sm:$0xff]
      %v3041 = vld [vmem:[#allocation2 + $0xc0] sm:$0xff]
      %v3042 = vld [vmem:[#allocation2 + $0xc8] sm:$0xff]
      %v3043 = vld [vmem:[#allocation2 + $0xd0] sm:$0xff]
      %v3044 = vld [vmem:[#allocation2 + $0xd8] sm:$0xff]
      %v3045 = vld [vmem:[#allocation2 + $0xe0] sm:$0xff]
      %v3046 = vld [vmem:[#allocation2 + $0xe8] sm:$0xff]
      %v3047 = vld [vmem:[#allocation2 + $0xf0] sm:$0xff]
      %v3048 = vld [vmem:[#allocation2 + $0xf8] sm:$0xff]
      %v3049 = vld [vmem:[#allocation2 + $0x100] sm:$0x1]
      %v3050 = vld [vmem:[#allocation2 + $0x108] sm:$0x1]
      %v3051 = vld [vmem:[#allocation2 + $0x110] sm:$0x1]
      %v3052 = vld [vmem:[#allocation2 + $0x118] sm:$0x1]
      %v3053 = vld [vmem:[#allocation2 + $0x120] sm:$0x1]
      %v3054 = vld [vmem:[#allocation2 + $0x128] sm:$0x1]
      %v3055 = vld [vmem:[#allocation2 + $0x130] sm:$0x1]
      %v3056 = vld [vmem:[#allocation2 + $0x138] sm:$0x1]
      %v3057 = vld [vmem:[#allocation2 + $0x140] sm:$0x1]
      %v3058 = vld [vmem:[#allocation2 + $0x148] sm:$0x1]
      %v3059 = vld [vmem:[#allocation2 + $0x150] sm:$0x1]
      %v3060 = vld [vmem:[#allocation2 + $0x158] sm:$0x1]
      %v3061 = vld [vmem:[#allocation2 + $0x160] sm:$0x1]
      %v3062 = vld [vmem:[#allocation2 + $0x168] sm:$0x1]
      %v3063 = vld [vmem:[#allocation2 + $0x170] sm:$0x1]
      %v3064 = vld [vmem:[#allocation2 + $0x178] sm:$0x1]
      %vm3065 = vcmask 138240
      %v3067 = vsel %vm3065, %v3016, 0
      %v3070 = vsel %vm1127, %v3049, 0
      %v3073 = vsel %vm1127, %v3050, 0
      %v3076 = vsel %vm1127, %v3051, 0
      %v3079 = vsel %vm1127, %v3052, 0
      %v3082 = vsel %vm1127, %v3053, 0
      %v3085 = vsel %vm1127, %v3054, 0
      %v3088 = vsel %vm1127, %v3055, 0
      %v3091 = vsel %vm1127, %v3056, 0
      %v3094 = vsel %vm1127, %v3057, 0
      %v3097 = vsel %vm1127, %v3058, 0
      %v3100 = vsel %vm1127, %v3059, 0
      %v3103 = vsel %vm1127, %v3060, 0
      %v3106 = vsel %vm1127, %v3061, 0
      %v3109 = vsel %vm1127, %v3062, 0
      %v3112 = vsel %vm1127, %v3063, 0
      %v3115 = vsel %vm1127, %v3064, 0
      %3117 = vmatprep.subr.mxu0 %v3018
      %3118 = vmatpush1.msra.mxu0 %v3017
      %3119 = vmatprep.subr.mxu0 %v3034
      %3120 = vmatpush1.msra.mxu0 %v3033
      %3121 = vmatprep.subr.mxu0 %v3073
      %3122 = vmatpush1.msra.mxu0 %v3070
      %3123 = vmatprep.subr.mxu0 0.0
      %3124 = vmatpush1.msra.mxu0 0.0
      %3125 = vmatprep.subr.mxu0 0.0
      %3126 = vmatpush1.msra.mxu0 0.0
      %3127 = vmatprep.subr.mxu0 0.0
      %3128 = vmatpush1.msra.mxu0 0.0
      %3129 = vmatprep.subr.mxu0 0.0
      %3130 = vmatpush1.msra.mxu0 0.0
      %3131 = vmatprep.subr.mxu0 0.0
      %3132 = vmatpush1.msra.mxu0 0.0
      %3133 = vmatprep.subr.mxu0 0.0
      %3134 = vmatpush1.msra.mxu0 0.0
      %3135 = vmatprep.subr.mxu0 0.0
      %3136 = vmatpush1.msra.mxu0 0.0
      %3137 = vmatprep.subr.mxu0 0.0
      %3138 = vmatpush1.msra.mxu0 0.0
      %3139 = vmatprep.subr.mxu0 0.0
      %3140 = vmatpush1.msra.mxu0 0.0
      %3141 = vmatprep.subr.mxu0 0.0
      %3142 = vmatpush1.msra.mxu0 0.0
      %3143 = vmatprep.subr.mxu0 0.0
      %3144 = vmatpush1.msra.mxu0 0.0
      %3145 = vmatprep.subr.mxu0 0.0
      %3146 = vmatpush1.msra.mxu0 0.0
      %3147 = vmatprep.subr.mxu0 0.0
      %3148 = vmatpush1.msra.mxu0 0.0
      %3149 = vmatprep.subr.mxu0 0.0
      %3150 = vmatpush1.msra.mxu0 0.0
      %3151 = vmatprep.subr.mxu0 0.0
      %3152 = vmatpush1.msra.mxu0 0.0
      %3153 = vmatprep.subr.mxu0 0.0
      %3154 = vmatpush1.msra.mxu0 0.0
      %3155 = vmatprep.subr.mxu0 0.0
      %3156 = vmatpush1.msra.mxu0 0.0
      %3157 = vmatprep.subr.mxu0 0.0
      %3158 = vmatpush1.msra.mxu0 0.0
      %3159 = vmatprep.subr.mxu0 0.0
      %3160 = vmatpush1.msra.mxu0 0.0
      %3161 = vmatprep.subr.mxu0 0.0
      %3162 = vmatpush1.msra.mxu0 0.0
      %3163 = vmatprep.subr.mxu0 0.0
      %3164 = vmatpush1.msra.mxu0 0.0
      %3165 = vmatprep.subr.mxu0 0.0
      %3166 = vmatpush1.msra.mxu0 0.0
      %3167 = vmatprep.subr.mxu0 0.0
      %3168 = vmatpush1.msra.mxu0 0.0
      %3169 = vmatprep.subr.mxu0 0.0
      %3170 = vmatpush1.msra.mxu0 0.0
      %3171 = vmatprep.subr.mxu0 0.0
      %3172 = vmatpush1.msra.mxu0 0.0
      %3173 = vmatprep.subr.mxu0 0.0
      %3174 = vmatpush1.msra.mxu0 0.0
      %3175 = vmatprep.subr.mxu0 0.0
      %3176 = vmatpush1.msra.mxu0 0.0
      %3177 = vmatprep.subr.mxu0 0.0
      %3178 = vmatpush1.msra.mxu0 0.0
      %3179 = vmatprep.subr.mxu0 0.0
      %3180 = vmatpush1.msra.mxu0 0.0
      %3181 = vmatprep.mubr.f32.mxu0 0.0
      %3182 = vmatmul.mubr.f32.gmra.mrb[0].mxu0 %v3067
      %v3183 = vpop.f32.mrb[0].mxu0
      %v3184 = vadd.f32 0.0, %v3183
      %v3185 = vpop.f32.mrb[0].mxu0
      %v3186 = vadd.f32 0.0, %v3185
      %3187 = vdwg.mxu0
      %3188 = vmatprep.subr.mxu0 %v3020
      %3189 = vmatpush1.msra.mxu0 %v3019
      %3190 = vmatprep.subr.mxu0 %v3036
      %3191 = vmatpush1.msra.mxu0 %v3035
      %3192 = vmatprep.subr.mxu0 %v3079
      %3193 = vmatpush1.msra.mxu0 %v3076
      %3194 = vmatprep.subr.mxu0 0.0
      %3195 = vmatpush1.msra.mxu0 0.0
      %3196 = vmatprep.subr.mxu0 0.0
      %3197 = vmatpush1.msra.mxu0 0.0
      %3198 = vmatprep.subr.mxu0 0.0
      %3199 = vmatpush1.msra.mxu0 0.0
      %3200 = vmatprep.subr.mxu0 0.0
      %3201 = vmatpush1.msra.mxu0 0.0
      %3202 = vmatprep.subr.mxu0 0.0
      %3203 = vmatpush1.msra.mxu0 0.0
      %3204 = vmatprep.subr.mxu0 0.0
      %3205 = vmatpush1.msra.mxu0 0.0
      %3206 = vmatprep.subr.mxu0 0.0
      %3207 = vmatpush1.msra.mxu0 0.0
      %3208 = vmatprep.subr.mxu0 0.0
      %3209 = vmatpush1.msra.mxu0 0.0
      %3210 = vmatprep.subr.mxu0 0.0
      %3211 = vmatpush1.msra.mxu0 0.0
      %3212 = vmatprep.subr.mxu0 0.0
      %3213 = vmatpush1.msra.mxu0 0.0
      %3214 = vmatprep.subr.mxu0 0.0
      %3215 = vmatpush1.msra.mxu0 0.0
      %3216 = vmatprep.subr.mxu0 0.0
      %3217 = vmatpush1.msra.mxu0 0.0
      %3218 = vmatprep.subr.mxu0 0.0
      %3219 = vmatpush1.msra.mxu0 0.0
      %3220 = vmatprep.subr.mxu0 0.0
      %3221 = vmatpush1.msra.mxu0 0.0
      %3222 = vmatprep.subr.mxu0 0.0
      %3223 = vmatpush1.msra.mxu0 0.0
      %3224 = vmatprep.subr.mxu0 0.0
      %3225 = vmatpush1.msra.mxu0 0.0
      %3226 = vmatprep.subr.mxu0 0.0
      %3227 = vmatpush1.msra.mxu0 0.0
      %3228 = vmatprep.subr.mxu0 0.0
      %3229 = vmatpush1.msra.mxu0 0.0
      %3230 = vmatprep.subr.mxu0 0.0
      %3231 = vmatpush1.msra.mxu0 0.0
      %3232 = vmatprep.subr.mxu0 0.0
      %3233 = vmatpush1.msra.mxu0 0.0
      %3234 = vmatprep.subr.mxu0 0.0
      %3235 = vmatpush1.msra.mxu0 0.0
      %3236 = vmatprep.subr.mxu0 0.0
      %3237 = vmatpush1.msra.mxu0 0.0
      %3238 = vmatprep.subr.mxu0 0.0
      %3239 = vmatpush1.msra.mxu0 0.0
      %3240 = vmatprep.subr.mxu0 0.0
      %3241 = vmatpush1.msra.mxu0 0.0
      %3242 = vmatprep.subr.mxu0 0.0
      %3243 = vmatpush1.msra.mxu0 0.0
      %3244 = vmatprep.subr.mxu0 0.0
      %3245 = vmatpush1.msra.mxu0 0.0
      %3246 = vmatprep.subr.mxu0 0.0
      %3247 = vmatpush1.msra.mxu0 0.0
      %3248 = vmatprep.subr.mxu0 0.0
      %3249 = vmatpush1.msra.mxu0 0.0
      %3250 = vmatprep.subr.mxu0 0.0
      %3251 = vmatpush1.msra.mxu0 0.0
      %3252 = vmatprep.mubr.f32.mxu0 0.0
      %3253 = vmatmul.mubr.f32.gmra.mrb[0].mxu0 %v3067
      %v3254 = vpop.f32.mrb[0].mxu0
      %v3255 = vadd.f32 0.0, %v3254
      %v3256 = vpop.f32.mrb[0].mxu0
      %v3257 = vadd.f32 0.0, %v3256
      %3258 = vdwg.mxu0
      %3259 = vmatprep.subr.mxu0 %v3022
      %3260 = vmatpush1.msra.mxu0 %v3021
      %3261 = vmatprep.subr.mxu0 %v3038
      %3262 = vmatpush1.msra.mxu0 %v3037
      %3263 = vmatprep.subr.mxu0 %v3085
      %3264 = vmatpush1.msra.mxu0 %v3082
      %3265 = vmatprep.subr.mxu0 0.0
      %3266 = vmatpush1.msra.mxu0 0.0
      %3267 = vmatprep.subr.mxu0 0.0
      %3268 = vmatpush1.msra.mxu0 0.0
      %3269 = vmatprep.subr.mxu0 0.0
      %3270 = vmatpush1.msra.mxu0 0.0
      %3271 = vmatprep.subr.mxu0 0.0
      %3272 = vmatpush1.msra.mxu0 0.0
      %3273 = vmatprep.subr.mxu0 0.0
      %3274 = vmatpush1.msra.mxu0 0.0
      %3275 = vmatprep.subr.mxu0 0.0
      %3276 = vmatpush1.msra.mxu0 0.0
      %3277 = vmatprep.subr.mxu0 0.0
      %3278 = vmatpush1.msra.mxu0 0.0
      %3279 = vmatprep.subr.mxu0 0.0
      %3280 = vmatpush1.msra.mxu0 0.0
      %3281 = vmatprep.subr.mxu0 0.0
      %3282 = vmatpush1.msra.mxu0 0.0
      %3283 = vmatprep.subr.mxu0 0.0
      %3284 = vmatpush1.msra.mxu0 0.0
      %3285 = vmatprep.subr.mxu0 0.0
      %3286 = vmatpush1.msra.mxu0 0.0
      %3287 = vmatprep.subr.mxu0 0.0
      %3288 = vmatpush1.msra.mxu0 0.0
      %3289 = vmatprep.subr.mxu0 0.0
      %3290 = vmatpush1.msra.mxu0 0.0
      %3291 = vmatprep.subr.mxu0 0.0
      %3292 = vmatpush1.msra.mxu0 0.0
      %3293 = vmatprep.subr.mxu0 0.0
      %3294 = vmatpush1.msra.mxu0 0.0
      %3295 = vmatprep.subr.mxu0 0.0
      %3296 = vmatpush1.msra.mxu0 0.0
      %3297 = vmatprep.subr.mxu0 0.0
      %3298 = vmatpush1.msra.mxu0 0.0
      %3299 = vmatprep.subr.mxu0 0.0
      %3300 = vmatpush1.msra.mxu0 0.0
      %3301 = vmatprep.subr.mxu0 0.0
      %3302 = vmatpush1.msra.mxu0 0.0
      %3303 = vmatprep.subr.mxu0 0.0
      %3304 = vmatpush1.msra.mxu0 0.0
      %3305 = vmatprep.subr.mxu0 0.0
      %3306 = vmatpush1.msra.mxu0 0.0
      %3307 = vmatprep.subr.mxu0 0.0
      %3308 = vmatpush1.msra.mxu0 0.0
      %3309 = vmatprep.subr.mxu0 0.0
      %3310 = vmatpush1.msra.mxu0 0.0
      %3311 = vmatprep.subr.mxu0 0.0
      %3312 = vmatpush1.msra.mxu0 0.0
      %3313 = vmatprep.subr.mxu0 0.0
      %3314 = vmatpush1.msra.mxu0 0.0
      %3315 = vmatprep.subr.mxu0 0.0
      %3316 = vmatpush1.msra.mxu0 0.0
      %3317 = vmatprep.subr.mxu0 0.0
      %3318 = vmatpush1.msra.mxu0 0.0
      %3319 = vmatprep.subr.mxu0 0.0
      %3320 = vmatpush1.msra.mxu0 0.0
      %3321 = vmatprep.subr.mxu0 0.0
      %3322 = vmatpush1.msra.mxu0 0.0
      %3323 = vmatprep.mubr.f32.mxu0 0.0
      %3324 = vmatmul.mubr.f32.gmra.mrb[0].mxu0 %v3067
      %v3325 = vpop.f32.mrb[0].mxu0
      %v3326 = vadd.f32 0.0, %v3325
      %v3327 = vpop.f32.mrb[0].mxu0
      %v3328 = vadd.f32 0.0, %v3327
      %3329 = vdwg.mxu0
      %3330 = vmatprep.subr.mxu0 %v3024
      %3331 = vmatpush1.msra.mxu0 %v3023
      %3332 = vmatprep.subr.mxu0 %v3040
      %3333 = vmatpush1.msra.mxu0 %v3039
      %3334 = vmatprep.subr.mxu0 %v3091
      %3335 = vmatpush1.msra.mxu0 %v3088
      %3336 = vmatprep.subr.mxu0 0.0
      %3337 = vmatpush1.msra.mxu0 0.0
      %3338 = vmatprep.subr.mxu0 0.0
      %3339 = vmatpush1.msra.mxu0 0.0
      %3340 = vmatprep.subr.mxu0 0.0
      %3341 = vmatpush1.msra.mxu0 0.0
      %3342 = vmatprep.subr.mxu0 0.0
      %3343 = vmatpush1.msra.mxu0 0.0
      %3344 = vmatprep.subr.mxu0 0.0
      %3345 = vmatpush1.msra.mxu0 0.0
      %3346 = vmatprep.subr.mxu0 0.0
      %3347 = vmatpush1.msra.mxu0 0.0
      %3348 = vmatprep.subr.mxu0 0.0
      %3349 = vmatpush1.msra.mxu0 0.0
      %3350 = vmatprep.subr.mxu0 0.0
      %3351 = vmatpush1.msra.mxu0 0.0
      %3352 = vmatprep.subr.mxu0 0.0
      %3353 = vmatpush1.msra.mxu0 0.0
      %3354 = vmatprep.subr.mxu0 0.0
      %3355 = vmatpush1.msra.mxu0 0.0
      %3356 = vmatprep.subr.mxu0 0.0
      %3357 = vmatpush1.msra.mxu0 0.0
      %3358 = vmatprep.subr.mxu0 0.0
      %3359 = vmatpush1.msra.mxu0 0.0
      %3360 = vmatprep.subr.mxu0 0.0
      %3361 = vmatpush1.msra.mxu0 0.0
      %3362 = vmatprep.subr.mxu0 0.0
      %3363 = vmatpush1.msra.mxu0 0.0
      %3364 = vmatprep.subr.mxu0 0.0
      %3365 = vmatpush1.msra.mxu0 0.0
      %3366 = vmatprep.subr.mxu0 0.0
      %3367 = vmatpush1.msra.mxu0 0.0
      %3368 = vmatprep.subr.mxu0 0.0
      %3369 = vmatpush1.msra.mxu0 0.0
      %3370 = vmatprep.subr.mxu0 0.0
      %3371 = vmatpush1.msra.mxu0 0.0
      %3372 = vmatprep.subr.mxu0 0.0
      %3373 = vmatpush1.msra.mxu0 0.0
      %3374 = vmatprep.subr.mxu0 0.0
      %3375 = vmatpush1.msra.mxu0 0.0
      %3376 = vmatprep.subr.mxu0 0.0
      %3377 = vmatpush1.msra.mxu0 0.0
      %3378 = vmatprep.subr.mxu0 0.0
      %3379 = vmatpush1.msra.mxu0 0.0
      %3380 = vmatprep.subr.mxu0 0.0
      %3381 = vmatpush1.msra.mxu0 0.0
      %3382 = vmatprep.subr.mxu0 0.0
      %3383 = vmatpush1.msra.mxu0 0.0
      %3384 = vmatprep.subr.mxu0 0.0
      %3385 = vmatpush1.msra.mxu0 0.0
      %3386 = vmatprep.subr.mxu0 0.0
      %3387 = vmatpush1.msra.mxu0 0.0
      %3388 = vmatprep.subr.mxu0 0.0
      %3389 = vmatpush1.msra.mxu0 0.0
      %3390 = vmatprep.subr.mxu0 0.0
      %3391 = vmatpush1.msra.mxu0 0.0
      %3392 = vmatprep.subr.mxu0 0.0
      %3393 = vmatpush1.msra.mxu0 0.0
      %3394 = vmatprep.mubr.f32.mxu0 0.0
      %3395 = vmatmul.mubr.f32.gmra.mrb[0].mxu0 %v3067
      %v3396 = vpop.f32.mrb[0].mxu0
      %v3397 = vadd.f32 0.0, %v3396
      %v3398 = vpop.f32.mrb[0].mxu0
      %v3399 = vadd.f32 0.0, %v3398
      %3400 = vdwg.mxu0
      %3401 = vmatprep.subr.mxu0 %v3026
      %3402 = vmatpush1.msra.mxu0 %v3025
      %3403 = vmatprep.subr.mxu0 %v3042
      %3404 = vmatpush1.msra.mxu0 %v3041
      %3405 = vmatprep.subr.mxu0 %v3097
      %3406 = vmatpush1.msra.mxu0 %v3094
      %3407 = vmatprep.subr.mxu0 0.0
      %3408 = vmatpush1.msra.mxu0 0.0
      %3409 = vmatprep.subr.mxu0 0.0
      %3410 = vmatpush1.msra.mxu0 0.0
      %3411 = vmatprep.subr.mxu0 0.0
      %3412 = vmatpush1.msra.mxu0 0.0
      %3413 = vmatprep.subr.mxu0 0.0
      %3414 = vmatpush1.msra.mxu0 0.0
      %3415 = vmatprep.subr.mxu0 0.0
      %3416 = vmatpush1.msra.mxu0 0.0
      %3417 = vmatprep.subr.mxu0 0.0
      %3418 = vmatpush1.msra.mxu0 0.0
      %3419 = vmatprep.subr.mxu0 0.0
      %3420 = vmatpush1.msra.mxu0 0.0
      %3421 = vmatprep.subr.mxu0 0.0
      %3422 = vmatpush1.msra.mxu0 0.0
      %3423 = vmatprep.subr.mxu0 0.0
      %3424 = vmatpush1.msra.mxu0 0.0
      %3425 = vmatprep.subr.mxu0 0.0
      %3426 = vmatpush1.msra.mxu0 0.0
      %3427 = vmatprep.subr.mxu0 0.0
      %3428 = vmatpush1.msra.mxu0 0.0
      %3429 = vmatprep.subr.mxu0 0.0
      %3430 = vmatpush1.msra.mxu0 0.0
      %3431 = vmatprep.subr.mxu0 0.0
      %3432 = vmatpush1.msra.mxu0 0.0
      %3433 = vmatprep.subr.mxu0 0.0
      %3434 = vmatpush1.msra.mxu0 0.0
      %3435 = vmatprep.subr.mxu0 0.0
      %3436 = vmatpush1.msra.mxu0 0.0
      %3437 = vmatprep.subr.mxu0 0.0
      %3438 = vmatpush1.msra.mxu0 0.0
      %3439 = vmatprep.subr.mxu0 0.0
      %3440 = vmatpush1.msra.mxu0 0.0
      %3441 = vmatprep.subr.mxu0 0.0
      %3442 = vmatpush1.msra.mxu0 0.0
      %3443 = vmatprep.subr.mxu0 0.0
      %3444 = vmatpush1.msra.mxu0 0.0
      %3445 = vmatprep.subr.mxu0 0.0
      %3446 = vmatpush1.msra.mxu0 0.0
      %3447 = vmatprep.subr.mxu0 0.0
      %3448 = vmatpush1.msra.mxu0 0.0
      %3449 = vmatprep.subr.mxu0 0.0
      %3450 = vmatpush1.msra.mxu0 0.0
      %3451 = vmatprep.subr.mxu0 0.0
      %3452 = vmatpush1.msra.mxu0 0.0
      %3453 = vmatprep.subr.mxu0 0.0
      %3454 = vmatpush1.msra.mxu0 0.0
      %3455 = vmatprep.subr.mxu0 0.0
      %3456 = vmatpush1.msra.mxu0 0.0
      %3457 = vmatprep.subr.mxu0 0.0
      %3458 = vmatpush1.msra.mxu0 0.0
      %3459 = vmatprep.subr.mxu0 0.0
      %3460 = vmatpush1.msra.mxu0 0.0
      %3461 = vmatprep.subr.mxu0 0.0
      %3462 = vmatpush1.msra.mxu0 0.0
      %3463 = vmatprep.subr.mxu0 0.0
      %3464 = vmatpush1.msra.mxu0 0.0
      %3465 = vmatprep.mubr.f32.mxu0 0.0
      %3466 = vmatmul.mubr.f32.gmra.mrb[0].mxu0 %v3067
      %v3467 = vpop.f32.mrb[0].mxu0
      %v3468 = vadd.f32 0.0, %v3467
      %v3469 = vpop.f32.mrb[0].mxu0
      %v3470 = vadd.f32 0.0, %v3469
      %3471 = vdwg.mxu0
      %3472 = vmatprep.subr.mxu0 %v3028
      %3473 = vmatpush1.msra.mxu0 %v3027
      %3474 = vmatprep.subr.mxu0 %v3044
      %3475 = vmatpush1.msra.mxu0 %v3043
      %3476 = vmatprep.subr.mxu0 %v3103
      %3477 = vmatpush1.msra.mxu0 %v3100
      %3478 = vmatprep.subr.mxu0 0.0
      %3479 = vmatpush1.msra.mxu0 0.0
      %3480 = vmatprep.subr.mxu0 0.0
      %3481 = vmatpush1.msra.mxu0 0.0
      %3482 = vmatprep.subr.mxu0 0.0
      %3483 = vmatpush1.msra.mxu0 0.0
      %3484 = vmatprep.subr.mxu0 0.0
      %3485 = vmatpush1.msra.mxu0 0.0
      %3486 = vmatprep.subr.mxu0 0.0
      %3487 = vmatpush1.msra.mxu0 0.0
      %3488 = vmatprep.subr.mxu0 0.0
      %3489 = vmatpush1.msra.mxu0 0.0
      %3490 = vmatprep.subr.mxu0 0.0
      %3491 = vmatpush1.msra.mxu0 0.0
      %3492 = vmatprep.subr.mxu0 0.0
      %3493 = vmatpush1.msra.mxu0 0.0
      %3494 = vmatprep.subr.mxu0 0.0
      %3495 = vmatpush1.msra.mxu0 0.0
      %3496 = vmatprep.subr.mxu0 0.0
      %3497 = vmatpush1.msra.mxu0 0.0
      %3498 = vmatprep.subr.mxu0 0.0
      %3499 = vmatpush1.msra.mxu0 0.0
      %3500 = vmatprep.subr.mxu0 0.0
      %3501 = vmatpush1.msra.mxu0 0.0
      %3502 = vmatprep.subr.mxu0 0.0
      %3503 = vmatpush1.msra.mxu0 0.0
      %3504 = vmatprep.subr.mxu0 0.0
      %3505 = vmatpush1.msra.mxu0 0.0
      %3506 = vmatprep.subr.mxu0 0.0
      %3507 = vmatpush1.msra.mxu0 0.0
      %3508 = vmatprep.subr.mxu0 0.0
      %3509 = vmatpush1.msra.mxu0 0.0
      %3510 = vmatprep.subr.mxu0 0.0
      %3511 = vmatpush1.msra.mxu0 0.0
      %3512 = vmatprep.subr.mxu0 0.0
      %3513 = vmatpush1.msra.mxu0 0.0
      %3514 = vmatprep.subr.mxu0 0.0
      %3515 = vmatpush1.msra.mxu0 0.0
      %3516 = vmatprep.subr.mxu0 0.0
      %3517 = vmatpush1.msra.mxu0 0.0
      %3518 = vmatprep.subr.mxu0 0.0
      %3519 = vmatpush1.msra.mxu0 0.0
      %3520 = vmatprep.subr.mxu0 0.0
      %3521 = vmatpush1.msra.mxu0 0.0
      %3522 = vmatprep.subr.mxu0 0.0
      %3523 = vmatpush1.msra.mxu0 0.0
      %3524 = vmatprep.subr.mxu0 0.0
      %3525 = vmatpush1.msra.mxu0 0.0
      %3526 = vmatprep.subr.mxu0 0.0
      %3527 = vmatpush1.msra.mxu0 0.0
      %3528 = vmatprep.subr.mxu0 0.0
      %3529 = vmatpush1.msra.mxu0 0.0
      %3530 = vmatprep.subr.mxu0 0.0
      %3531 = vmatpush1.msra.mxu0 0.0
      %3532 = vmatprep.subr.mxu0 0.0
      %3533 = vmatpush1.msra.mxu0 0.0
      %3534 = vmatprep.subr.mxu0 0.0
      %3535 = vmatpush1.msra.mxu0 0.0
      %3536 = vmatprep.mubr.f32.mxu0 0.0
      %3537 = vmatmul.mubr.f32.gmra.mrb[0].mxu0 %v3067
      %v3538 = vpop.f32.mrb[0].mxu0
      %v3539 = vadd.f32 0.0, %v3538
      %v3540 = vpop.f32.mrb[0].mxu0
      %v3541 = vadd.f32 0.0, %v3540
      %3542 = vdwg.mxu0
      %3543 = vmatprep.subr.mxu0 %v3030
      %3544 = vmatpush1.msra.mxu0 %v3029
      %3545 = vmatprep.subr.mxu0 %v3046
      %3546 = vmatpush1.msra.mxu0 %v3045
      %3547 = vmatprep.subr.mxu0 %v3109
      %3548 = vmatpush1.msra.mxu0 %v3106
      %3549 = vmatprep.subr.mxu0 0.0
      %3550 = vmatpush1.msra.mxu0 0.0
      %3551 = vmatprep.subr.mxu0 0.0
      %3552 = vmatpush1.msra.mxu0 0.0
      %3553 = vmatprep.subr.mxu0 0.0
      %3554 = vmatpush1.msra.mxu0 0.0
      %3555 = vmatprep.subr.mxu0 0.0
      %3556 = vmatpush1.msra.mxu0 0.0
      %3557 = vmatprep.subr.mxu0 0.0
      %3558 = vmatpush1.msra.mxu0 0.0
      %3559 = vmatprep.subr.mxu0 0.0
      %3560 = vmatpush1.msra.mxu0 0.0
      %3561 = vmatprep.subr.mxu0 0.0
      %3562 = vmatpush1.msra.mxu0 0.0
      %3563 = vmatprep.subr.mxu0 0.0
      %3564 = vmatpush1.msra.mxu0 0.0
      %3565 = vmatprep.subr.mxu0 0.0
      %3566 = vmatpush1.msra.mxu0 0.0
      %3567 = vmatprep.subr.mxu0 0.0
      %3568 = vmatpush1.msra.mxu0 0.0
      %3569 = vmatprep.subr.mxu0 0.0
      %3570 = vmatpush1.msra.mxu0 0.0
      %3571 = vmatprep.subr.mxu0 0.0
      %3572 = vmatpush1.msra.mxu0 0.0
      %3573 = vmatprep.subr.mxu0 0.0
      %3574 = vmatpush1.msra.mxu0 0.0
      %3575 = vmatprep.subr.mxu0 0.0
      %3576 = vmatpush1.msra.mxu0 0.0
      %3577 = vmatprep.subr.mxu0 0.0
      %3578 = vmatpush1.msra.mxu0 0.0
      %3579 = vmatprep.subr.mxu0 0.0
      %3580 = vmatpush1.msra.mxu0 0.0
      %3581 = vmatprep.subr.mxu0 0.0
      %3582 = vmatpush1.msra.mxu0 0.0
      %3583 = vmatprep.subr.mxu0 0.0
      %3584 = vmatpush1.msra.mxu0 0.0
      %3585 = vmatprep.subr.mxu0 0.0
      %3586 = vmatpush1.msra.mxu0 0.0
      %3587 = vmatprep.subr.mxu0 0.0
      %3588 = vmatpush1.msra.mxu0 0.0
      %3589 = vmatprep.subr.mxu0 0.0
      %3590 = vmatpush1.msra.mxu0 0.0
      %3591 = vmatprep.subr.mxu0 0.0
      %3592 = vmatpush1.msra.mxu0 0.0
      %3593 = vmatprep.subr.mxu0 0.0
      %3594 = vmatpush1.msra.mxu0 0.0
      %3595 = vmatprep.subr.mxu0 0.0
      %3596 = vmatpush1.msra.mxu0 0.0
      %3597 = vmatprep.subr.mxu0 0.0
      %3598 = vmatpush1.msra.mxu0 0.0
      %3599 = vmatprep.subr.mxu0 0.0
      %3600 = vmatpush1.msra.mxu0 0.0
      %3601 = vmatprep.subr.mxu0 0.0
      %3602 = vmatpush1.msra.mxu0 0.0
      %3603 = vmatprep.subr.mxu0 0.0
      %3604 = vmatpush1.msra.mxu0 0.0
      %3605 = vmatprep.subr.mxu0 0.0
      %3606 = vmatpush1.msra.mxu0 0.0
      %3607 = vmatprep.mubr.f32.mxu0 0.0
      %3608 = vmatmul.mubr.f32.gmra.mrb[0].mxu0 %v3067
      %v3609 = vpop.f32.mrb[0].mxu0
      %v3610 = vadd.f32 0.0, %v3609
      %v3611 = vpop.f32.mrb[0].mxu0
      %v3612 = vadd.f32 0.0, %v3611
      %3613 = vdwg.mxu0
      %3614 = vmatprep.subr.mxu0 %v3032
      %3615 = vmatpush1.msra.mxu0 %v3031
      %3616 = vmatprep.subr.mxu0 %v3048
      %3617 = vmatpush1.msra.mxu0 %v3047
      %3618 = vmatprep.subr.mxu0 %v3115
      %3619 = vmatpush1.msra.mxu0 %v3112
      %3620 = vmatprep.subr.mxu0 0.0
      %3621 = vmatpush1.msra.mxu0 0.0
      %3622 = vmatprep.subr.mxu0 0.0
      %3623 = vmatpush1.msra.mxu0 0.0
      %3624 = vmatprep.subr.mxu0 0.0
      %3625 = vmatpush1.msra.mxu0 0.0
      %3626 = vmatprep.subr.mxu0 0.0
      %3627 = vmatpush1.msra.mxu0 0.0
      %3628 = vmatprep.subr.mxu0 0.0
      %3629 = vmatpush1.msra.mxu0 0.0
      %3630 = vmatprep.subr.mxu0 0.0
      %3631 = vmatpush1.msra.mxu0 0.0
      %3632 = vmatprep.subr.mxu0 0.0
      %3633 = vmatpush1.msra.mxu0 0.0
      %3634 = vmatprep.subr.mxu0 0.0
      %3635 = vmatpush1.msra.mxu0 0.0
      %3636 = vmatprep.subr.mxu0 0.0
      %3637 = vmatpush1.msra.mxu0 0.0
      %3638 = vmatprep.subr.mxu0 0.0
      %3639 = vmatpush1.msra.mxu0 0.0
      %3640 = vmatprep.subr.mxu0 0.0
      %3641 = vmatpush1.msra.mxu0 0.0
      %3642 = vmatprep.subr.mxu0 0.0
      %3643 = vmatpush1.msra.mxu0 0.0
      %3644 = vmatprep.subr.mxu0 0.0
      %3645 = vmatpush1.msra.mxu0 0.0
      %3646 = vmatprep.subr.mxu0 0.0
      %3647 = vmatpush1.msra.mxu0 0.0
      %3648 = vmatprep.subr.mxu0 0.0
      %3649 = vmatpush1.msra.mxu0 0.0
      %3650 = vmatprep.subr.mxu0 0.0
      %3651 = vmatpush1.msra.mxu0 0.0
      %3652 = vmatprep.subr.mxu0 0.0
      %3653 = vmatpush1.msra.mxu0 0.0
      %3654 = vmatprep.subr.mxu0 0.0
      %3655 = vmatpush1.msra.mxu0 0.0
      %3656 = vmatprep.subr.mxu0 0.0
      %3657 = vmatpush1.msra.mxu0 0.0
      %3658 = vmatprep.subr.mxu0 0.0
      %3659 = vmatpush1.msra.mxu0 0.0
      %3660 = vmatprep.subr.mxu0 0.0
      %3661 = vmatpush1.msra.mxu0 0.0
      %3662 = vmatprep.subr.mxu0 0.0
      %3663 = vmatpush1.msra.mxu0 0.0
      %3664 = vmatprep.subr.mxu0 0.0
      %3665 = vmatpush1.msra.mxu0 0.0
      %3666 = vmatprep.subr.mxu0 0.0
      %3667 = vmatpush1.msra.mxu0 0.0
      %3668 = vmatprep.subr.mxu0 0.0
      %3669 = vmatpush1.msra.mxu0 0.0
      %3670 = vmatprep.subr.mxu0 0.0
      %3671 = vmatpush1.msra.mxu0 0.0
      %3672 = vmatprep.subr.mxu0 0.0
      %3673 = vmatpush1.msra.mxu0 0.0
      %3674 = vmatprep.subr.mxu0 0.0
      %3675 = vmatpush1.msra.mxu0 0.0
      %3676 = vmatprep.subr.mxu0 0.0
      %3677 = vmatpush1.msra.mxu0 0.0
      %3678 = vmatprep.mubr.f32.mxu0 0.0
      %3679 = vmatmul.mubr.f32.gmra.mrb[0].mxu0 %v3067
      %v3680 = vpop.f32.mrb[0].mxu0
      %v3681 = vadd.f32 0.0, %v3680
      %v3682 = vpop.f32.mrb[0].mxu0
      %v3683 = vadd.f32 0.0, %v3682
      %3684 = vdwg.mxu0
      %3685 = vst [vmem:[%s143 + $0x18] sm:$0xff] %v3184
      %3686 = vst [vmem:[%s143 + $0x38] sm:$0xff] %v3186
      %3687 = vst [vmem:[%s143 + $0x58] sm:$0xff] %v3255
      %3688 = vst [vmem:[%s143 + $0x78] sm:$0xff] %v3257
      %3689 = vst [vmem:[%s143 + $0x98] sm:$0xff] %v3326
      %3690 = vst [vmem:[%s143 + $0xb8] sm:$0xff] %v3328
      %3691 = vst [vmem:[%s143 + $0xd8] sm:$0xff] %v3397
      %3692 = vst [vmem:[%s143 + $0xf8] sm:$0xff] %v3399
      %3693 = vst [vmem:[%s143 + $0x118] sm:$0xff] %v3468
      %3694 = vst [vmem:[%s143 + $0x138] sm:$0xff] %v3470
      %3695 = vst [vmem:[%s143 + $0x158] sm:$0xff] %v3539
      %3696 = vst [vmem:[%s143 + $0x178] sm:$0xff] %v3541
      %3697 = vst [vmem:[%s143 + $0x198] sm:$0xff] %v3610
      %3698 = vst [vmem:[%s143 + $0x1b8] sm:$0xff] %v3612
      %3699 = vst [vmem:[%s143 + $0x1d8] sm:$0xff] %v3681
      %3700 = vst [vmem:[%s143 + $0x1f8] sm:$0xff] %v3683
      %p3701 = scmp.lt.s32.totalorder %s13, 1
      %s3702 = scalar_select %p3701, %s13, 1
      %s3703 = smul.addr %s3702, 64
      %s3704 = smul.addr %s3703, 8
      %s3705 = scalar_lea.vmem %s2, %s3704
      // Predicated region
      $region29: #{conv_transpose2d.1} parent=27 // pred_check
        %p3706 = pneg %p78
      $region30: #{conv_transpose2d.1} parent=27 // pred_check_branch
        %3708 = sbr.rel (%p3706) target = $region32
      $region31: #{conv_transpose2d.1} parent=27 // pred_region
        _
      $region32: #{conv_transpose2d.1} parent=27 // pred_fallthru
        _
    $region28: #{conv_transpose2d.1} parent=5 // pred_fallthru
      _
    %p3709 = scmp.le.s32.totalorder 2, %s8
    // Predicated region
    $region33: #{conv_transpose2d.1} parent=5 // pred_check
      %p3710 = pneg %p3709
    $region34: #{conv_transpose2d.1} parent=5 // pred_check_branch
      %3712 = sbr.rel (%p3710) target = $region36
    $region35: #{conv_transpose2d.1} parent=5 // pred_region
      %s3713 = ssub.s32 %s8, 2
      // Predicated region
      $region37: #{conv_transpose2d.1} parent=35 // pred_check
        %p3714 = pneg %p84
      $region38: #{conv_transpose2d.1} parent=35 // pred_check_branch
        %3716 = sbr.rel (%p3714) target = $region40
      $region39: #{conv_transpose2d.1} parent=35 // pred_region
        %p3717 = scmp.lt.s32.totalorder %s14, 1
        %s3718 = scalar_select %p3717, %s14, 1
        %s3719 = smul.addr %s3718, 64
        %s3720 = smul.addr %s3719, 8
        %s3721 = scalar_lea.vmem %s2, %s3720
      $region40: #{conv_transpose2d.1} parent=35 // pred_fallthru
        _
    $region36: #{conv_transpose2d.1} parent=5 // pred_fallthru
      _
  $region6: #{conv_transpose2d.1} parent=0 // loop_footer
    %s12 = sadd.s32 1, %s8
  $region7: #{conv_transpose2d.1} parent=0 // loop_footer_branch
    %7 = sbr.rel target = $region3
  $region8: #{conv_transpose2d.1} parent=0 // loop_exit
    _

</llo_original>
